<compile_context>
chip_gen: v7x
topology: tpu7x:2x2x1
jax: 0.10.0
libtpu: 0.0.40
codegen_flags: <defaults>
</compile_context>

<pallas_src>
import math

import jax
import jax.numpy as jnp
from jax import lax
from jax.experimental import pallas as pl
from jax.experimental.pallas import tpu as pltpu

# ----------------------------- configuration --------------------------------
DIM = 32
H = 8
W = 8
NUM_HEADS = 4
HEAD_DIM = DIM // NUM_HEADS                  # 8
WINDOW = 4
N = WINDOW * WINDOW                          # tokens per window (16)
NUM_WIN = (H // WINDOW) * (W // WINDOW)      # windows per image (4)
MLP_RATIO = 4.0
HIDDEN = int(DIM * MLP_RATIO)                # 128
SCALE = HEAD_DIM ** (-0.5)
EPS = 1e-5
B = 2
L = H * W                                    # tokens per image (64)
INV_SQRT2 = 1.0 / math.sqrt(2.0)
MASK_NEG = -1e9

# -------------------- packed-parameter buffer layouts ------------------------
# pk64: (PK64_ROWS, 64) f32
R_KVW = 0                    # rows [0,32)    : kv weight              (32, 64)
R_PROJW = 32                 # rows [32,64)   : proj weight            (32, :32)
R_QFULL = 64                 # rows [64,128)  : q gathered+scaled      (64, :32)
R_FC2W = 128                 # rows [128,256) : fc2 weight             (128, :32)
R_BIAS = 256                 # rows [256,512) : bias+mask, 4 heads     (4*64, 64)
R_VEC = 512                  # rows [512,520) : vectors:
#   +0 norm1_g  +1 norm1_b  +2 kv_b(64)  +3 proj_b  +4 norm2_g  +5 norm2_b  +6 fc2_b
PK64_ROWS = R_VEC + 8
# pk128: (PK128_ROWS, 128) f32 : rows [0,32) fc1 weight, row 32 fc1 bias
PK128_ROWS = DIM + 1


# ------------------------------- fused kernel --------------------------------
def _wsam_fused_kernel(x_ref, pk64_ref, pk128_ref, o_ref, attn_ref):
    x = x_ref[...]                                               # (128, 32) f32

    # ---- static views into the packed parameter buffers ----
    kv_w = pk64_ref[R_KVW:R_KVW + DIM, :]                        # (32, 64)
    proj_w = pk64_ref[R_PROJW:R_PROJW + DIM, 0:DIM]              # (32, 32)
    qf = pk64_ref[R_QFULL:R_QFULL + L, 0:DIM]                    # (64, 32)
    fc2_w = pk64_ref[R_FC2W:R_FC2W + HIDDEN, 0:DIM]              # (128, 32)
    vecs = pk64_ref[R_VEC:R_VEC + 8, :]                          # (8, 64)
    g1, b1 = vecs[0:1, 0:DIM], vecs[1:2, 0:DIM]
    kv_b = vecs[2:3, :]
    proj_b = vecs[3:4, 0:DIM]
    g2, b2 = vecs[4:5, 0:DIM], vecs[5:6, 0:DIM]
    fc2_b = vecs[6:7, 0:DIM]
    fc1_w = pk128_ref[0:DIM, :]                                  # (32, 128)
    fc1_b = pk128_ref[DIM:DIM + 1, :]                            # (1, 128)

    # ---- norm1 (per-token) ----
    mean1 = jnp.mean(x, axis=-1, keepdims=True)
    var1 = jnp.mean((x - mean1) ** 2, axis=-1, keepdims=True)
    xn = (x - mean1) * lax.rsqrt(var1 + EPS) * g1 + b1

    # ---- kv projection for all B*L tokens at once (M=128) ----
    kv = jnp.dot(xn, kv_w, preferred_element_type=jnp.float32) + kv_b  # (128,64)

    # ---- window attention in row-major token order ----
    # q is shared over windows/batch; the precomputed bias+mask constant
    # (-1e9 on cross-window pairs) makes a plain row softmax over whole-image
    # scores exactly equal to the per-window attention.
    for h in range(NUM_HEADS):
        q_h = qf[:, h * HEAD_DIM:(h + 1) * HEAD_DIM]             # (64, 8)
        bm_h = pk64_ref[R_BIAS + h * L:R_BIAS + (h + 1) * L, :]  # (64, 64)
        for b in range(B):
            k_h = kv[b * L:(b + 1) * L, h * HEAD_DIM:(h + 1) * HEAD_DIM]
            v_h = kv[b * L:(b + 1) * L,
                     DIM + h * HEAD_DIM:DIM + (h + 1) * HEAD_DIM]
            s = lax.dot_general(q_h, k_h, (((1,), (1,)), ((), ())),
                                preferred_element_type=jnp.float32)   # (64, 64)
            s = s + bm_h
            s = s - jnp.max(s, axis=-1, keepdims=True)
            e = jnp.exp(s)
            p = e * pl.reciprocal(jnp.sum(e, axis=-1, keepdims=True),
                                  approx=True)
            o_bh = jnp.dot(p, v_h, preferred_element_type=jnp.float32)  # (64, 8)
            # lane-offset slice of the (128, 32) attention-output scratch
            attn_ref[b * L:(b + 1) * L,
                     h * HEAD_DIM:(h + 1) * HEAD_DIM] = o_bh
    attn = attn_ref[...]                                         # (128, 32)

    # ---- one K=32 output projection + residual 1 ----
    y = x + jnp.dot(attn, proj_w, preferred_element_type=jnp.float32) + proj_b

    # ---- norm2 + MLP (exact-erf GELU) + residual 2 ----
    mean2 = jnp.mean(y, axis=-1, keepdims=True)
    var2 = jnp.mean((y - mean2) ** 2, axis=-1, keepdims=True)
    hn = (y - mean2) * lax.rsqrt(var2 + EPS) * g2 + b2
    h1 = jnp.dot(hn, fc1_w, preferred_element_type=jnp.float32) + fc1_b  # (128,128)
    h1 = 0.5 * h1 * (1.0 + lax.erf(h1 * INV_SQRT2))
    h2 = jnp.dot(h1, fc2_w, preferred_element_type=jnp.float32) + fc2_b  # (128,32)
    o_ref[...] = (y + h2).astype(o_ref.dtype)


# ------------------------------ pallas wrapper --------------------------------
@jax.jit
def wsam_forward(x, pk64, pk128):
    b, l, c = x.shape
    xf = x.reshape(b * l, c)                 # free reshape, no transpose
    out = pl.pallas_call(
        _wsam_fused_kernel,
        out_shape=jax.ShapeDtypeStruct((b * l, c), x.dtype),
        grid_spec=pltpu.PrefetchScalarGridSpec(
            num_scalar_prefetch=0,
            grid=(1,),
            in_specs=[
                pl.BlockSpec((b * l, c), lambda i: (0, 0)),          # activations
                pl.BlockSpec((PK64_ROWS, 64), lambda i: (0, 0)),     # packed params
                pl.BlockSpec((PK128_ROWS, 128), lambda i: (0, 0)),   # packed params
            ],
            out_specs=pl.BlockSpec((b * l, c), lambda i: (0, 0)),
            scratch_shapes=[pltpu.VMEM((b * l, c), jnp.float32)],
        ),
        compiler_params=pltpu.CompilerParams(
            dimension_semantics=("arbitrary",)),
    )(xf, pk64, pk128)
    return out.reshape(b, l, c)


# ------------------------------- init / packing -------------------------------
def make_relative_position_index(ws):
    coords = jnp.stack(jnp.meshgrid(jnp.arange(ws), jnp.arange(ws), indexing="ij"))
    cf = coords.reshape(2, -1)                               # (2, n)
    rel = cf[:, :, None] - cf[:, None, :]                    # (2, n, n)
    rel = rel.transpose(1, 2, 0)                             # (n, n, 2)
    rel = rel.at[:, :, 0].add(ws - 1)
    rel = rel.at[:, :, 1].add(ws - 1)
    rel = rel.at[:, :, 0].multiply(2 * ws - 1)
    return rel.sum(-1)                                       # (n, n)


def init_params(key):
    ks = jax.random.split(key, 14)
    rel_table = 0.02 * jax.random.normal(
        ks[0], ((2 * WINDOW - 1) * (2 * WINDOW - 1), NUM_HEADS), jnp.float32)
    idx = make_relative_position_index(WINDOW)
    rel_bias = rel_table[idx.reshape(-1)].reshape(N, N, NUM_HEADS).transpose(2, 0, 1)
    return {
        "norm1_g": 1.0 + 0.1 * jax.random.normal(ks[1], (DIM,), jnp.float32),
        "norm1_b": 0.1 * jax.random.normal(ks[2], (DIM,), jnp.float32),
        # weights stored as (in, out) so the kernel does x @ W directly
        "kv_w": 0.05 * jax.random.normal(ks[3], (DIM, 2 * DIM), jnp.float32),
        "kv_b": 0.02 * jax.random.normal(ks[4], (2 * DIM,), jnp.float32),
        # TODO(synk): torch re-draws q ~ N(0,1) every forward; fixed parameter here.
        "q": jax.random.normal(ks[5], (NUM_HEADS, N, HEAD_DIM), jnp.float32),
        "rel_bias": rel_bias,                                  # (heads, N, N)
        "proj_w": 0.05 * jax.random.normal(ks[6], (DIM, DIM), jnp.float32),
        "proj_b": 0.02 * jax.random.normal(ks[7], (DIM,), jnp.float32),
        "norm2_g": 1.0 + 0.1 * jax.random.normal(ks[8], (DIM,), jnp.float32),
        "norm2_b": 0.1 * jax.random.normal(ks[9], (DIM,), jnp.float32),
        "fc1_w": 0.05 * jax.random.normal(ks[10], (DIM, HIDDEN), jnp.float32),
        "fc1_b": 0.02 * jax.random.normal(ks[11], (HIDDEN,), jnp.float32),
        "fc2_w": 0.05 * jax.random.normal(ks[12], (HIDDEN, DIM), jnp.float32),
        "fc2_b": 0.02 * jax.random.normal(ks[13], (DIM,), jnp.float32),
    }


def pack_params(p):
    """Fold init-time precomputes (q gather+scale, rel-pos bias gather, window
    mask) and pack all parameters into two contiguous f32 buffers."""
    tok = jnp.arange(L)
    row, col = tok // W, tok % W
    nwin = (row % WINDOW) * WINDOW + (col % WINDOW)             # within-window idx
    wid = (row // WINDOW) * (W // WINDOW) + (col // WINDOW)     # window id
    # q gathered to row-major token order, qk scale folded in: (64, 32)
    q_full = (p["q"] * SCALE)[:, nwin, :]                       # (heads, 64, hd)
    q_full = jnp.transpose(q_full, (1, 0, 2)).reshape(L, DIM)
    # rel-pos bias gathered to token pairs + same-window mask (per image)
    bias_full = p["rel_bias"][:, nwin[:, None], nwin[None, :]]  # (heads, 64, 64)
    same_win = wid[:, None] == wid[None, :]
    bm = jnp.where(same_win[None], bias_full, MASK_NEG).reshape(NUM_HEADS * L, L)

    pk64 = jnp.zeros((PK64_ROWS, 64), jnp.float32)
    pk64 = pk64.at[R_KVW:R_KVW + DIM, :].set(p["kv_w"])
    pk64 = pk64.at[R_PROJW:R_PROJW + DIM, 0:DIM].set(p["proj_w"])
    pk64 = pk64.at[R_QFULL:R_QFULL + L, 0:DIM].set(q_full)
    pk64 = pk64.at[R_FC2W:R_FC2W + HIDDEN, 0:DIM].set(p["fc2_w"])
    pk64 = pk64.at[R_BIAS:R_BIAS + NUM_HEADS * L, :].set(bm)
    pk64 = pk64.at[R_VEC + 0, 0:DIM].set(p["norm1_g"])
    pk64 = pk64.at[R_VEC + 1, 0:DIM].set(p["norm1_b"])
    pk64 = pk64.at[R_VEC + 2, 0:2 * DIM].set(p["kv_b"])
    pk64 = pk64.at[R_VEC + 3, 0:DIM].set(p["proj_b"])
    pk64 = pk64.at[R_VEC + 4, 0:DIM].set(p["norm2_g"])
    pk64 = pk64.at[R_VEC + 5, 0:DIM].set(p["norm2_b"])
    pk64 = pk64.at[R_VEC + 6, 0:DIM].set(p["fc2_b"])

    pk128 = jnp.zeros((PK128_ROWS, 128), jnp.float32)
    pk128 = pk128.at[0:DIM, :].set(p["fc1_w"])
    pk128 = pk128.at[DIM, :].set(p["fc1_b"])
    return pk64, pk128


# ------------------------- pure-JAX reference forward -------------------------
def reference_forward(x, p):
    """Faithful (fixed-q) JAX port of the PyTorch WSAM forward."""
    b, l, c = x.shape

    def layernorm(t, g, beta):
        m = jnp.mean(t, axis=-1, keepdims=True)
        v = jnp.mean((t - m) ** 2, axis=-1, keepdims=True)
        return (t - m) * lax.rsqrt(v + EPS) * g + beta

    shortcut = x
    xn = layernorm(x, p["norm1_g"], p["norm1_b"])
    # window partition
    xw = xn.reshape(b, H // WINDOW, WINDOW, W // WINDOW, WINDOW, c)
    xw = xw.transpose(0, 1, 3, 2, 4, 5).reshape(b * NUM_WIN, N, c)
    kv = xw @ p["kv_w"] + p["kv_b"]
    kv = kv.reshape(b * NUM_WIN, N, 2, NUM_HEADS, HEAD_DIM).transpose(2, 0, 3, 1, 4)
    k, v = kv[0], kv[1]                                         # (bw, h, N, d)
    attn = jnp.einsum("hnd,bhmd->bhnm", p["q"] * SCALE, k)
    attn = attn + p["rel_bias"][None]
    attn = jax.nn.softmax(attn, axis=-1)
    out = jnp.einsum("bhnm,bhmd->bhnd", attn, v)
    out = out.transpose(0, 2, 1, 3).reshape(b * NUM_WIN, N, c)
    out = out @ p["proj_w"] + p["proj_b"]
    # window reverse
    out = out.reshape(b, H // WINDOW, W // WINDOW, WINDOW, WINDOW, c)
    out = out.transpose(0, 1, 3, 2, 4, 5).reshape(b, l, c)
    y = shortcut + out
    hn = layernorm(y, p["norm2_g"], p["norm2_b"])
    h1 = hn @ p["fc1_w"] + p["fc1_b"]
    h1 = 0.5 * h1 * (1.0 + lax.erf(h1 * INV_SQRT2))
    h2 = h1 @ p["fc2_w"] + p["fc2_b"]
    return y + h2


# ----------------------------------- main -------------------------------------
if __name__ == "__main__":
    key = jax.random.PRNGKey(0)
    k_x, k_p = jax.random.split(key)
    x = jax.random.normal(k_x, (B, L, DIM), jnp.float32)        # (2, 64, 32)
    params = init_params(k_p)
    pk64, pk128 = pack_params(params)

    y = wsam_forward(x, pk64, pk128)
    jax.block_until_ready(y)
    assert y.shape == (B, L, DIM) and y.dtype == jnp.float32

    y_ref = reference_forward(x, params)
    max_err = float(jnp.max(jnp.abs(y - y_ref)))
    assert jnp.allclose(y, y_ref, rtol=5e-3, atol=5e-3), f"max abs err {max_err}"
    print("KERNEL_OK")
</pallas_src>

<mosaic_0001>
module attributes {stable_mosaic.version = 11 : i64} {
  func.func @_wsam_fused_kernel(%arg0: i32, %arg1: memref<128x32xf32, #tpu.memory_space<vmem>>, %arg2: memref<520x64xf32, #tpu.memory_space<vmem>>, %arg3: memref<33x128xf32, #tpu.memory_space<vmem>>, %arg4: memref<128x32xf32, #tpu.memory_space<vmem>>, %arg5: memref<128x32xf32, #tpu.memory_space<vmem>>) attributes {dimension_semantics = [#tpu.dimension_semantics<arbitrary>], iteration_bounds = array<i64: 1>, scalar_prefetch = 0 : i64, scratch_operands = 1 : i64, tpu.core_type = #tpu.core_type<tc>, window_params = [{pipeline_mode = #tpu.pipeline_mode<synchronous>, transform_indices = @transform_0, window_bounds = array<i64: 128, 32>}, {pipeline_mode = #tpu.pipeline_mode<synchronous>, transform_indices = @transform_1, window_bounds = array<i64: 520, 64>}, {pipeline_mode = #tpu.pipeline_mode<synchronous>, transform_indices = @transform_2, window_bounds = array<i64: 33, 128>}, {pipeline_mode = #tpu.pipeline_mode<synchronous>, transform_indices = @transform_3, window_bounds = array<i64: 128, 32>}]} {
    %c0 = arith.constant 0 : index
    %c0_0 = arith.constant 0 : index
    %0 = vector.load %arg1[%c0, %c0_0] : memref<128x32xf32, #tpu.memory_space<vmem>>, vector<128x32xf32>
    %c0_1 = arith.constant 0 : index
    %c0_2 = arith.constant 0 : index
    %1 = vector.load %arg2[%c0_1, %c0_2] : memref<520x64xf32, #tpu.memory_space<vmem>>, vector<32x64xf32>
    %c32 = arith.constant 32 : index
    %c0_3 = arith.constant 0 : index
    %2 = vector.load %arg2[%c32, %c0_3] : memref<520x64xf32, #tpu.memory_space<vmem>>, vector<32x32xf32>
    %c64 = arith.constant 64 : index
    %c0_4 = arith.constant 0 : index
    %3 = vector.load %arg2[%c64, %c0_4] : memref<520x64xf32, #tpu.memory_space<vmem>>, vector<64x32xf32>
    %c128 = arith.constant 128 : index
    %c0_5 = arith.constant 0 : index
    %4 = vector.load %arg2[%c128, %c0_5] : memref<520x64xf32, #tpu.memory_space<vmem>>, vector<128x32xf32>
    %c512 = arith.constant 512 : index
    %c0_6 = arith.constant 0 : index
    %5 = vector.load %arg2[%c512, %c0_6] : memref<520x64xf32, #tpu.memory_space<vmem>>, vector<8x64xf32>
    %6 = vector.extract_strided_slice %5 {offsets = [0, 0], sizes = [1, 32], strides = [1, 1]} : vector<8x64xf32> to vector<1x32xf32>
    %7 = vector.extract_strided_slice %5 {offsets = [1, 0], sizes = [1, 32], strides = [1, 1]} : vector<8x64xf32> to vector<1x32xf32>
    %8 = vector.extract_strided_slice %5 {offsets = [2, 0], sizes = [1, 64], strides = [1, 1]} : vector<8x64xf32> to vector<1x64xf32>
    %9 = vector.extract_strided_slice %5 {offsets = [3, 0], sizes = [1, 32], strides = [1, 1]} : vector<8x64xf32> to vector<1x32xf32>
    %10 = vector.extract_strided_slice %5 {offsets = [4, 0], sizes = [1, 32], strides = [1, 1]} : vector<8x64xf32> to vector<1x32xf32>
    %11 = vector.extract_strided_slice %5 {offsets = [5, 0], sizes = [1, 32], strides = [1, 1]} : vector<8x64xf32> to vector<1x32xf32>
    %12 = vector.extract_strided_slice %5 {offsets = [6, 0], sizes = [1, 32], strides = [1, 1]} : vector<8x64xf32> to vector<1x32xf32>
    %c0_7 = arith.constant 0 : index
    %c0_8 = arith.constant 0 : index
    %13 = vector.load %arg3[%c0_7, %c0_8] : memref<33x128xf32, #tpu.memory_space<vmem>>, vector<32x128xf32>
    %c32_9 = arith.constant 32 : index
    %c0_10 = arith.constant 0 : index
    %14 = vector.load %arg3[%c32_9, %c0_10] : memref<33x128xf32, #tpu.memory_space<vmem>>, vector<1x128xf32>
    %cst = arith.constant dense<0.000000e+00> : vector<128xf32>
    %15 = vector.multi_reduction <add>, %0, %cst [1] : vector<128x32xf32> to vector<128xf32>
    %16 = vector.shape_cast %15 : vector<128xf32> to vector<128x1xf32>
    %cst_11 = arith.constant 3.200000e+01 : f32
    %17 = vector.broadcast %cst_11 : f32 to vector<128x1xf32>
    %18 = arith.divf %16, %17 : vector<128x1xf32>
    %19 = vector.broadcast %18 : vector<128x1xf32> to vector<128x32xf32>
    %20 = arith.subf %0, %19 : vector<128x32xf32>
    %21 = arith.mulf %20, %20 : vector<128x32xf32>
    %cst_12 = arith.constant dense<0.000000e+00> : vector<128xf32>
    %22 = vector.multi_reduction <add>, %21, %cst_12 [1] : vector<128x32xf32> to vector<128xf32>
    %23 = vector.shape_cast %22 : vector<128xf32> to vector<128x1xf32>
    %cst_13 = arith.constant 3.200000e+01 : f32
    %24 = vector.broadcast %cst_13 : f32 to vector<128x1xf32>
    %25 = arith.divf %23, %24 : vector<128x1xf32>
    %26 = vector.broadcast %18 : vector<128x1xf32> to vector<128x32xf32>
    %27 = arith.subf %0, %26 : vector<128x32xf32>
    %cst_14 = arith.constant 9.99999974E-6 : f32
    %28 = vector.broadcast %cst_14 : f32 to vector<128x1xf32>
    %29 = arith.addf %25, %28 : vector<128x1xf32>
    %30 = math.rsqrt %29 : vector<128x1xf32>
    %31 = vector.broadcast %30 : vector<128x1xf32> to vector<128x32xf32>
    %32 = arith.mulf %27, %31 : vector<128x32xf32>
    %33 = vector.broadcast %6 : vector<1x32xf32> to vector<128x32xf32>
    %34 = arith.mulf %32, %33 : vector<128x32xf32>
    %35 = vector.broadcast %7 : vector<1x32xf32> to vector<128x32xf32>
    %36 = arith.addf %34, %35 : vector<128x32xf32>
    %cst_15 = arith.constant dense<0.000000e+00> : vector<128x64xf32>
    %37 = tpu.matmul %36, %1, %cst_15 {dimension_numbers = #tpu.dot_dimension_numbers<[1], [0], [0], [1], [0, 0, 1, 1], [], []>} : vector<128x32xf32>, vector<32x64xf32>, vector<128x64xf32> -> vector<128x64xf32>
    %38 = vector.broadcast %8 : vector<1x64xf32> to vector<128x64xf32>
    %39 = arith.addf %37, %38 : vector<128x64xf32>
    %40 = vector.extract_strided_slice %3 {offsets = [0, 0], sizes = [64, 8], strides = [1, 1]} : vector<64x32xf32> to vector<64x8xf32>
    %c256 = arith.constant 256 : index
    %c0_16 = arith.constant 0 : index
    %41 = vector.load %arg2[%c256, %c0_16] : memref<520x64xf32, #tpu.memory_space<vmem>>, vector<64x64xf32>
    %42 = vector.extract_strided_slice %39 {offsets = [0, 0], sizes = [64, 8], strides = [1, 1]} : vector<128x64xf32> to vector<64x8xf32>
    %43 = vector.extract_strided_slice %39 {offsets = [0, 32], sizes = [64, 8], strides = [1, 1]} : vector<128x64xf32> to vector<64x8xf32>
    %cst_17 = arith.constant dense<0.000000e+00> : vector<64x64xf32>
    %44 = tpu.matmul %40, %42, %cst_17 {dimension_numbers = #tpu.dot_dimension_numbers<[1], [1], [0], [0], [0, 0, 1, 0], [], []>} : vector<64x8xf32>, vector<64x8xf32>, vector<64x64xf32> -> vector<64x64xf32>
    %45 = arith.addf %44, %41 : vector<64x64xf32>
    %cst_18 = arith.constant dense<0xFF800000> : vector<64xf32>
    %46 = vector.multi_reduction <maximumf>, %45, %cst_18 [1] : vector<64x64xf32> to vector<64xf32>
    %47 = vector.shape_cast %46 : vector<64xf32> to vector<64x1xf32>
    %48 = vector.broadcast %47 : vector<64x1xf32> to vector<64x64xf32>
    %49 = arith.subf %45, %48 : vector<64x64xf32>
    %50 = math.exp %49 : vector<64x64xf32>
    %cst_19 = arith.constant dense<0.000000e+00> : vector<64xf32>
    %51 = vector.multi_reduction <add>, %50, %cst_19 [1] : vector<64x64xf32> to vector<64xf32>
    %52 = vector.shape_cast %51 : vector<64xf32> to vector<64x1xf32>
    %53 = tpu.reciprocal %52 {approx = true} : vector<64x1xf32> -> vector<64x1xf32>
    %54 = vector.broadcast %53 : vector<64x1xf32> to vector<64x64xf32>
    %55 = arith.mulf %50, %54 : vector<64x64xf32>
    %cst_20 = arith.constant dense<0.000000e+00> : vector<64x8xf32>
    %56 = tpu.matmul %55, %43, %cst_20 {dimension_numbers = #tpu.dot_dimension_numbers<[1], [0], [0], [1], [0, 0, 1, 1], [], []>} : vector<64x64xf32>, vector<64x8xf32>, vector<64x8xf32> -> vector<64x8xf32>
    %c0_21 = arith.constant 0 : index
    %c0_22 = arith.constant 0 : index
    %57 = vector.load %arg5[%c0_21, %c0_22] : memref<128x32xf32, #tpu.memory_space<vmem>>, vector<64x8xf32>
    tpu.vector_store %arg5[%c0_21, %c0_22], %56 {strides = array<i32>} : memref<128x32xf32, #tpu.memory_space<vmem>>, vector<64x8xf32>,
    %58 = vector.extract_strided_slice %39 {offsets = [64, 0], sizes = [64, 8], strides = [1, 1]} : vector<128x64xf32> to vector<64x8xf32>
    %59 = vector.extract_strided_slice %39 {offsets = [64, 32], sizes = [64, 8], strides = [1, 1]} : vector<128x64xf32> to vector<64x8xf32>
    %cst_23 = arith.constant dense<0.000000e+00> : vector<64x64xf32>
    %60 = tpu.matmul %40, %58, %cst_23 {dimension_numbers = #tpu.dot_dimension_numbers<[1], [1], [0], [0], [0, 0, 1, 0], [], []>} : vector<64x8xf32>, vector<64x8xf32>, vector<64x64xf32> -> vector<64x64xf32>
    %61 = arith.addf %60, %41 : vector<64x64xf32>
    %cst_24 = arith.constant dense<0xFF800000> : vector<64xf32>
    %62 = vector.multi_reduction <maximumf>, %61, %cst_24 [1] : vector<64x64xf32> to vector<64xf32>
    %63 = vector.shape_cast %62 : vector<64xf32> to vector<64x1xf32>
    %64 = vector.broadcast %63 : vector<64x1xf32> to vector<64x64xf32>
    %65 = arith.subf %61, %64 : vector<64x64xf32>
    %66 = math.exp %65 : vector<64x64xf32>
    %cst_25 = arith.constant dense<0.000000e+00> : vector<64xf32>
    %67 = vector.multi_reduction <add>, %66, %cst_25 [1] : vector<64x64xf32> to vector<64xf32>
    %68 = vector.shape_cast %67 : vector<64xf32> to vector<64x1xf32>
    %69 = tpu.reciprocal %68 {approx = true} : vector<64x1xf32> -> vector<64x1xf32>
    %70 = vector.broadcast %69 : vector<64x1xf32> to vector<64x64xf32>
    %71 = arith.mulf %66, %70 : vector<64x64xf32>
    %cst_26 = arith.constant dense<0.000000e+00> : vector<64x8xf32>
    %72 = tpu.matmul %71, %59, %cst_26 {dimension_numbers = #tpu.dot_dimension_numbers<[1], [0], [0], [1], [0, 0, 1, 1], [], []>} : vector<64x64xf32>, vector<64x8xf32>, vector<64x8xf32> -> vector<64x8xf32>
    %c64_27 = arith.constant 64 : index
    %c0_28 = arith.constant 0 : index
    %73 = vector.load %arg5[%c64_27, %c0_28] : memref<128x32xf32, #tpu.memory_space<vmem>>, vector<64x8xf32>
    tpu.vector_store %arg5[%c64_27, %c0_28], %72 {strides = array<i32>} : memref<128x32xf32, #tpu.memory_space<vmem>>, vector<64x8xf32>,
    %74 = vector.extract_strided_slice %3 {offsets = [0, 8], sizes = [64, 8], strides = [1, 1]} : vector<64x32xf32> to vector<64x8xf32>
    %c320 = arith.constant 320 : index
    %c0_29 = arith.constant 0 : index
    %75 = vector.load %arg2[%c320, %c0_29] : memref<520x64xf32, #tpu.memory_space<vmem>>, vector<64x64xf32>
    %76 = vector.extract_strided_slice %39 {offsets = [0, 8], sizes = [64, 8], strides = [1, 1]} : vector<128x64xf32> to vector<64x8xf32>
    %77 = vector.extract_strided_slice %39 {offsets = [0, 40], sizes = [64, 8], strides = [1, 1]} : vector<128x64xf32> to vector<64x8xf32>
    %cst_30 = arith.constant dense<0.000000e+00> : vector<64x64xf32>
    %78 = tpu.matmul %74, %76, %cst_30 {dimension_numbers = #tpu.dot_dimension_numbers<[1], [1], [0], [0], [0, 0, 1, 0], [], []>} : vector<64x8xf32>, vector<64x8xf32>, vector<64x64xf32> -> vector<64x64xf32>
    %79 = arith.addf %78, %75 : vector<64x64xf32>
    %cst_31 = arith.constant dense<0xFF800000> : vector<64xf32>
    %80 = vector.multi_reduction <maximumf>, %79, %cst_31 [1] : vector<64x64xf32> to vector<64xf32>
    %81 = vector.shape_cast %80 : vector<64xf32> to vector<64x1xf32>
    %82 = vector.broadcast %81 : vector<64x1xf32> to vector<64x64xf32>
    %83 = arith.subf %79, %82 : vector<64x64xf32>
    %84 = math.exp %83 : vector<64x64xf32>
    %cst_32 = arith.constant dense<0.000000e+00> : vector<64xf32>
    %85 = vector.multi_reduction <add>, %84, %cst_32 [1] : vector<64x64xf32> to vector<64xf32>
    %86 = vector.shape_cast %85 : vector<64xf32> to vector<64x1xf32>
    %87 = tpu.reciprocal %86 {approx = true} : vector<64x1xf32> -> vector<64x1xf32>
    %88 = vector.broadcast %87 : vector<64x1xf32> to vector<64x64xf32>
    %89 = arith.mulf %84, %88 : vector<64x64xf32>
    %cst_33 = arith.constant dense<0.000000e+00> : vector<64x8xf32>
    %90 = tpu.matmul %89, %77, %cst_33 {dimension_numbers = #tpu.dot_dimension_numbers<[1], [0], [0], [1], [0, 0, 1, 1], [], []>} : vector<64x64xf32>, vector<64x8xf32>, vector<64x8xf32> -> vector<64x8xf32>
    %c0_34 = arith.constant 0 : index
    %c8 = arith.constant 8 : index
    %91 = vector.load %arg5[%c0_34, %c8] : memref<128x32xf32, #tpu.memory_space<vmem>>, vector<64x8xf32>
    tpu.vector_store %arg5[%c0_34, %c8], %90 {strides = array<i32>} : memref<128x32xf32, #tpu.memory_space<vmem>>, vector<64x8xf32>,
    %92 = vector.extract_strided_slice %39 {offsets = [64, 8], sizes = [64, 8], strides = [1, 1]} : vector<128x64xf32> to vector<64x8xf32>
    %93 = vector.extract_strided_slice %39 {offsets = [64, 40], sizes = [64, 8], strides = [1, 1]} : vector<128x64xf32> to vector<64x8xf32>
    %cst_35 = arith.constant dense<0.000000e+00> : vector<64x64xf32>
    %94 = tpu.matmul %74, %92, %cst_35 {dimension_numbers = #tpu.dot_dimension_numbers<[1], [1], [0], [0], [0, 0, 1, 0], [], []>} : vector<64x8xf32>, vector<64x8xf32>, vector<64x64xf32> -> vector<64x64xf32>
    %95 = arith.addf %94, %75 : vector<64x64xf32>
    %cst_36 = arith.constant dense<0xFF800000> : vector<64xf32>
    %96 = vector.multi_reduction <maximumf>, %95, %cst_36 [1] : vector<64x64xf32> to vector<64xf32>
    %97 = vector.shape_cast %96 : vector<64xf32> to vector<64x1xf32>
    %98 = vector.broadcast %97 : vector<64x1xf32> to vector<64x64xf32>
    %99 = arith.subf %95, %98 : vector<64x64xf32>
    %100 = math.exp %99 : vector<64x64xf32>
    %cst_37 = arith.constant dense<0.000000e+00> : vector<64xf32>
    %101 = vector.multi_reduction <add>, %100, %cst_37 [1] : vector<64x64xf32> to vector<64xf32>
    %102 = vector.shape_cast %101 : vector<64xf32> to vector<64x1xf32>
    %103 = tpu.reciprocal %102 {approx = true} : vector<64x1xf32> -> vector<64x1xf32>
    %104 = vector.broadcast %103 : vector<64x1xf32> to vector<64x64xf32>
    %105 = arith.mulf %100, %104 : vector<64x64xf32>
    %cst_38 = arith.constant dense<0.000000e+00> : vector<64x8xf32>
    %106 = tpu.matmul %105, %93, %cst_38 {dimension_numbers = #tpu.dot_dimension_numbers<[1], [0], [0], [1], [0, 0, 1, 1], [], []>} : vector<64x64xf32>, vector<64x8xf32>, vector<64x8xf32> -> vector<64x8xf32>
    %c64_39 = arith.constant 64 : index
    %c8_40 = arith.constant 8 : index
    %107 = vector.load %arg5[%c64_39, %c8_40] : memref<128x32xf32, #tpu.memory_space<vmem>>, vector<64x8xf32>
    tpu.vector_store %arg5[%c64_39, %c8_40], %106 {strides = array<i32>} : memref<128x32xf32, #tpu.memory_space<vmem>>, vector<64x8xf32>,
    %108 = vector.extract_strided_slice %3 {offsets = [0, 16], sizes = [64, 8], strides = [1, 1]} : vector<64x32xf32> to vector<64x8xf32>
    %c384 = arith.constant 384 : index
    %c0_41 = arith.constant 0 : index
    %109 = vector.load %arg2[%c384, %c0_41] : memref<520x64xf32, #tpu.memory_space<vmem>>, vector<64x64xf32>
    %110 = vector.extract_strided_slice %39 {offsets = [0, 16], sizes = [64, 8], strides = [1, 1]} : vector<128x64xf32> to vector<64x8xf32>
    %111 = vector.extract_strided_slice %39 {offsets = [0, 48], sizes = [64, 8], strides = [1, 1]} : vector<128x64xf32> to vector<64x8xf32>
    %cst_42 = arith.constant dense<0.000000e+00> : vector<64x64xf32>
    %112 = tpu.matmul %108, %110, %cst_42 {dimension_numbers = #tpu.dot_dimension_numbers<[1], [1], [0], [0], [0, 0, 1, 0], [], []>} : vector<64x8xf32>, vector<64x8xf32>, vector<64x64xf32> -> vector<64x64xf32>
    %113 = arith.addf %112, %109 : vector<64x64xf32>
    %cst_43 = arith.constant dense<0xFF800000> : vector<64xf32>
    %114 = vector.multi_reduction <maximumf>, %113, %cst_43 [1] : vector<64x64xf32> to vector<64xf32>
    %115 = vector.shape_cast %114 : vector<64xf32> to vector<64x1xf32>
    %116 = vector.broadcast %115 : vector<64x1xf32> to vector<64x64xf32>
    %117 = arith.subf %113, %116 : vector<64x64xf32>
    %118 = math.exp %117 : vector<64x64xf32>
    %cst_44 = arith.constant dense<0.000000e+00> : vector<64xf32>
    %119 = vector.multi_reduction <add>, %118, %cst_44 [1] : vector<64x64xf32> to vector<64xf32>
    %120 = vector.shape_cast %119 : vector<64xf32> to vector<64x1xf32>
    %121 = tpu.reciprocal %120 {approx = true} : vector<64x1xf32> -> vector<64x1xf32>
    %122 = vector.broadcast %121 : vector<64x1xf32> to vector<64x64xf32>
    %123 = arith.mulf %118, %122 : vector<64x64xf32>
    %cst_45 = arith.constant dense<0.000000e+00> : vector<64x8xf32>
    %124 = tpu.matmul %123, %111, %cst_45 {dimension_numbers = #tpu.dot_dimension_numbers<[1], [0], [0], [1], [0, 0, 1, 1], [], []>} : vector<64x64xf32>, vector<64x8xf32>, vector<64x8xf32> -> vector<64x8xf32>
    %c0_46 = arith.constant 0 : index
    %c16 = arith.constant 16 : index
    %125 = vector.load %arg5[%c0_46, %c16] : memref<128x32xf32, #tpu.memory_space<vmem>>, vector<64x8xf32>
    tpu.vector_store %arg5[%c0_46, %c16], %124 {strides = array<i32>} : memref<128x32xf32, #tpu.memory_space<vmem>>, vector<64x8xf32>,
    %126 = vector.extract_strided_slice %39 {offsets = [64, 16], sizes = [64, 8], strides = [1, 1]} : vector<128x64xf32> to vector<64x8xf32>
    %127 = vector.extract_strided_slice %39 {offsets = [64, 48], sizes = [64, 8], strides = [1, 1]} : vector<128x64xf32> to vector<64x8xf32>
    %cst_47 = arith.constant dense<0.000000e+00> : vector<64x64xf32>
    %128 = tpu.matmul %108, %126, %cst_47 {dimension_numbers = #tpu.dot_dimension_numbers<[1], [1], [0], [0], [0, 0, 1, 0], [], []>} : vector<64x8xf32>, vector<64x8xf32>, vector<64x64xf32> -> vector<64x64xf32>
    %129 = arith.addf %128, %109 : vector<64x64xf32>
    %cst_48 = arith.constant dense<0xFF800000> : vector<64xf32>
    %130 = vector.multi_reduction <maximumf>, %129, %cst_48 [1] : vector<64x64xf32> to vector<64xf32>
    %131 = vector.shape_cast %130 : vector<64xf32> to vector<64x1xf32>
    %132 = vector.broadcast %131 : vector<64x1xf32> to vector<64x64xf32>
    %133 = arith.subf %129, %132 : vector<64x64xf32>
    %134 = math.exp %133 : vector<64x64xf32>
    %cst_49 = arith.constant dense<0.000000e+00> : vector<64xf32>
    %135 = vector.multi_reduction <add>, %134, %cst_49 [1] : vector<64x64xf32> to vector<64xf32>
    %136 = vector.shape_cast %135 : vector<64xf32> to vector<64x1xf32>
    %137 = tpu.reciprocal %136 {approx = true} : vector<64x1xf32> -> vector<64x1xf32>
    %138 = vector.broadcast %137 : vector<64x1xf32> to vector<64x64xf32>
    %139 = arith.mulf %134, %138 : vector<64x64xf32>
    %cst_50 = arith.constant dense<0.000000e+00> : vector<64x8xf32>
    %140 = tpu.matmul %139, %127, %cst_50 {dimension_numbers = #tpu.dot_dimension_numbers<[1], [0], [0], [1], [0, 0, 1, 1], [], []>} : vector<64x64xf32>, vector<64x8xf32>, vector<64x8xf32> -> vector<64x8xf32>
    %c64_51 = arith.constant 64 : index
    %c16_52 = arith.constant 16 : index
    %141 = vector.load %arg5[%c64_51, %c16_52] : memref<128x32xf32, #tpu.memory_space<vmem>>, vector<64x8xf32>
    tpu.vector_store %arg5[%c64_51, %c16_52], %140 {strides = array<i32>} : memref<128x32xf32, #tpu.memory_space<vmem>>, vector<64x8xf32>,
    %142 = vector.extract_strided_slice %3 {offsets = [0, 24], sizes = [64, 8], strides = [1, 1]} : vector<64x32xf32> to vector<64x8xf32>
    %c448 = arith.constant 448 : index
    %c0_53 = arith.constant 0 : index
    %143 = vector.load %arg2[%c448, %c0_53] : memref<520x64xf32, #tpu.memory_space<vmem>>, vector<64x64xf32>
    %144 = vector.extract_strided_slice %39 {offsets = [0, 24], sizes = [64, 8], strides = [1, 1]} : vector<128x64xf32> to vector<64x8xf32>
    %145 = vector.extract_strided_slice %39 {offsets = [0, 56], sizes = [64, 8], strides = [1, 1]} : vector<128x64xf32> to vector<64x8xf32>
    %cst_54 = arith.constant dense<0.000000e+00> : vector<64x64xf32>
    %146 = tpu.matmul %142, %144, %cst_54 {dimension_numbers = #tpu.dot_dimension_numbers<[1], [1], [0], [0], [0, 0, 1, 0], [], []>} : vector<64x8xf32>, vector<64x8xf32>, vector<64x64xf32> -> vector<64x64xf32>
    %147 = arith.addf %146, %143 : vector<64x64xf32>
    %cst_55 = arith.constant dense<0xFF800000> : vector<64xf32>
    %148 = vector.multi_reduction <maximumf>, %147, %cst_55 [1] : vector<64x64xf32> to vector<64xf32>
    %149 = vector.shape_cast %148 : vector<64xf32> to vector<64x1xf32>
    %150 = vector.broadcast %149 : vector<64x1xf32> to vector<64x64xf32>
    %151 = arith.subf %147, %150 : vector<64x64xf32>
    %152 = math.exp %151 : vector<64x64xf32>
    %cst_56 = arith.constant dense<0.000000e+00> : vector<64xf32>
    %153 = vector.multi_reduction <add>, %152, %cst_56 [1] : vector<64x64xf32> to vector<64xf32>
    %154 = vector.shape_cast %153 : vector<64xf32> to vector<64x1xf32>
    %155 = tpu.reciprocal %154 {approx = true} : vector<64x1xf32> -> vector<64x1xf32>
    %156 = vector.broadcast %155 : vector<64x1xf32> to vector<64x64xf32>
    %157 = arith.mulf %152, %156 : vector<64x64xf32>
    %cst_57 = arith.constant dense<0.000000e+00> : vector<64x8xf32>
    %158 = tpu.matmul %157, %145, %cst_57 {dimension_numbers = #tpu.dot_dimension_numbers<[1], [0], [0], [1], [0, 0, 1, 1], [], []>} : vector<64x64xf32>, vector<64x8xf32>, vector<64x8xf32> -> vector<64x8xf32>
    %c0_58 = arith.constant 0 : index
    %c24 = arith.constant 24 : index
    %159 = vector.load %arg5[%c0_58, %c24] : memref<128x32xf32, #tpu.memory_space<vmem>>, vector<64x8xf32>
    tpu.vector_store %arg5[%c0_58, %c24], %158 {strides = array<i32>} : memref<128x32xf32, #tpu.memory_space<vmem>>, vector<64x8xf32>,
    %160 = vector.extract_strided_slice %39 {offsets = [64, 24], sizes = [64, 8], strides = [1, 1]} : vector<128x64xf32> to vector<64x8xf32>
    %161 = vector.extract_strided_slice %39 {offsets = [64, 56], sizes = [64, 8], strides = [1, 1]} : vector<128x64xf32> to vector<64x8xf32>
    %cst_59 = arith.constant dense<0.000000e+00> : vector<64x64xf32>
    %162 = tpu.matmul %142, %160, %cst_59 {dimension_numbers = #tpu.dot_dimension_numbers<[1], [1], [0], [0], [0, 0, 1, 0], [], []>} : vector<64x8xf32>, vector<64x8xf32>, vector<64x64xf32> -> vector<64x64xf32>
    %163 = arith.addf %162, %143 : vector<64x64xf32>
    %cst_60 = arith.constant dense<0xFF800000> : vector<64xf32>
    %164 = vector.multi_reduction <maximumf>, %163, %cst_60 [1] : vector<64x64xf32> to vector<64xf32>
    %165 = vector.shape_cast %164 : vector<64xf32> to vector<64x1xf32>
    %166 = vector.broadcast %165 : vector<64x1xf32> to vector<64x64xf32>
    %167 = arith.subf %163, %166 : vector<64x64xf32>
    %168 = math.exp %167 : vector<64x64xf32>
    %cst_61 = arith.constant dense<0.000000e+00> : vector<64xf32>
    %169 = vector.multi_reduction <add>, %168, %cst_61 [1] : vector<64x64xf32> to vector<64xf32>
    %170 = vector.shape_cast %169 : vector<64xf32> to vector<64x1xf32>
    %171 = tpu.reciprocal %170 {approx = true} : vector<64x1xf32> -> vector<64x1xf32>
    %172 = vector.broadcast %171 : vector<64x1xf32> to vector<64x64xf32>
    %173 = arith.mulf %168, %172 : vector<64x64xf32>
    %cst_62 = arith.constant dense<0.000000e+00> : vector<64x8xf32>
    %174 = tpu.matmul %173, %161, %cst_62 {dimension_numbers = #tpu.dot_dimension_numbers<[1], [0], [0], [1], [0, 0, 1, 1], [], []>} : vector<64x64xf32>, vector<64x8xf32>, vector<64x8xf32> -> vector<64x8xf32>
    %c64_63 = arith.constant 64 : index
    %c24_64 = arith.constant 24 : index
    %175 = vector.load %arg5[%c64_63, %c24_64] : memref<128x32xf32, #tpu.memory_space<vmem>>, vector<64x8xf32>
    tpu.vector_store %arg5[%c64_63, %c24_64], %174 {strides = array<i32>} : memref<128x32xf32, #tpu.memory_space<vmem>>, vector<64x8xf32>,
    %c0_65 = arith.constant 0 : index
    %c0_66 = arith.constant 0 : index
    %176 = vector.load %arg5[%c0_65, %c0_66] : memref<128x32xf32, #tpu.memory_space<vmem>>, vector<128x32xf32>
    %cst_67 = arith.constant dense<0.000000e+00> : vector<128x32xf32>
    %177 = tpu.matmul %176, %2, %cst_67 {dimension_numbers = #tpu.dot_dimension_numbers<[1], [0], [0], [1], [0, 0, 1, 1], [], []>} : vector<128x32xf32>, vector<32x32xf32>, vector<128x32xf32> -> vector<128x32xf32>
    %178 = arith.addf %0, %177 : vector<128x32xf32>
    %179 = vector.broadcast %9 : vector<1x32xf32> to vector<128x32xf32>
    %180 = arith.addf %178, %179 : vector<128x32xf32>
    %cst_68 = arith.constant dense<0.000000e+00> : vector<128xf32>
    %181 = vector.multi_reduction <add>, %180, %cst_68 [1] : vector<128x32xf32> to vector<128xf32>
    %182 = vector.shape_cast %181 : vector<128xf32> to vector<128x1xf32>
    %cst_69 = arith.constant 3.200000e+01 : f32
    %183 = vector.broadcast %cst_69 : f32 to vector<128x1xf32>
    %184 = arith.divf %182, %183 : vector<128x1xf32>
    %185 = vector.broadcast %184 : vector<128x1xf32> to vector<128x32xf32>
    %186 = arith.subf %180, %185 : vector<128x32xf32>
    %187 = arith.mulf %186, %186 : vector<128x32xf32>
    %cst_70 = arith.constant dense<0.000000e+00> : vector<128xf32>
    %188 = vector.multi_reduction <add>, %187, %cst_70 [1] : vector<128x32xf32> to vector<128xf32>
    %189 = vector.shape_cast %188 : vector<128xf32> to vector<128x1xf32>
    %cst_71 = arith.constant 3.200000e+01 : f32
    %190 = vector.broadcast %cst_71 : f32 to vector<128x1xf32>
    %191 = arith.divf %189, %190 : vector<128x1xf32>
    %192 = vector.broadcast %184 : vector<128x1xf32> to vector<128x32xf32>
    %193 = arith.subf %180, %192 : vector<128x32xf32>
    %cst_72 = arith.constant 9.99999974E-6 : f32
    %194 = vector.broadcast %cst_72 : f32 to vector<128x1xf32>
    %195 = arith.addf %191, %194 : vector<128x1xf32>
    %196 = math.rsqrt %195 : vector<128x1xf32>
    %197 = vector.broadcast %196 : vector<128x1xf32> to vector<128x32xf32>
    %198 = arith.mulf %193, %197 : vector<128x32xf32>
    %199 = vector.broadcast %10 : vector<1x32xf32> to vector<128x32xf32>
    %200 = arith.mulf %198, %199 : vector<128x32xf32>
    %201 = vector.broadcast %11 : vector<1x32xf32> to vector<128x32xf32>
    %202 = arith.addf %200, %201 : vector<128x32xf32>
    %cst_73 = arith.constant dense<0.000000e+00> : vector<128x128xf32>
    %203 = tpu.matmul %202, %13, %cst_73 {dimension_numbers = #tpu.dot_dimension_numbers<[1], [0], [0], [1], [0, 0, 1, 1], [], []>} : vector<128x32xf32>, vector<32x128xf32>, vector<128x128xf32> -> vector<128x128xf32>
    %204 = vector.broadcast %14 : vector<1x128xf32> to vector<128x128xf32>
    %205 = arith.addf %203, %204 : vector<128x128xf32>
    %cst_74 = arith.constant 5.000000e-01 : f32
    %206 = vector.broadcast %cst_74 : f32 to vector<128x128xf32>
    %207 = arith.mulf %206, %205 : vector<128x128xf32>
    %cst_75 = arith.constant 0.707106769 : f32
    %208 = vector.broadcast %cst_75 : f32 to vector<128x128xf32>
    %209 = arith.mulf %205, %208 : vector<128x128xf32>
    %210 = math.erf %209 : vector<128x128xf32>
    %cst_76 = arith.constant 1.000000e+00 : f32
    %211 = vector.broadcast %cst_76 : f32 to vector<128x128xf32>
    %212 = arith.addf %211, %210 : vector<128x128xf32>
    %213 = arith.mulf %207, %212 : vector<128x128xf32>
    %cst_77 = arith.constant dense<0.000000e+00> : vector<128x32xf32>
    %214 = tpu.matmul %213, %4, %cst_77 {dimension_numbers = #tpu.dot_dimension_numbers<[1], [0], [0], [1], [0, 0, 1, 1], [], []>} : vector<128x128xf32>, vector<128x32xf32>, vector<128x32xf32> -> vector<128x32xf32>
    %215 = vector.broadcast %12 : vector<1x32xf32> to vector<128x32xf32>
    %216 = arith.addf %214, %215 : vector<128x32xf32>
    %217 = arith.addf %180, %216 : vector<128x32xf32>
    %c0_78 = arith.constant 0 : index
    %c0_79 = arith.constant 0 : index
    %218 = vector.load %arg4[%c0_78, %c0_79] : memref<128x32xf32, #tpu.memory_space<vmem>>, vector<128x32xf32>
    tpu.vector_store %arg4[%c0_78, %c0_79], %217 {strides = array<i32>} : memref<128x32xf32, #tpu.memory_space<vmem>>, vector<128x32xf32>,
    return
  }
  func.func @transform_0(%arg0: i32) -> (i32, i32) {
    %c0_i32 = arith.constant 0 : i32
    %c0_i32_0 = arith.constant 0 : i32
    %c0_i32_1 = arith.constant 0 : i32
    return %c0_i32, %c0_i32_0 : i32, i32
  }
  func.func @transform_1(%arg0: i32) -> (i32, i32) {
    %c0_i32 = arith.constant 0 : i32
    %c0_i32_0 = arith.constant 0 : i32
    %c0_i32_1 = arith.constant 0 : i32
    return %c0_i32, %c0_i32_0 : i32, i32
  }
  func.func @transform_2(%arg0: i32) -> (i32, i32) {
    %c0_i32 = arith.constant 0 : i32
    %c0_i32_0 = arith.constant 0 : i32
    %c0_i32_1 = arith.constant 0 : i32
    return %c0_i32, %c0_i32_0 : i32, i32
  }
  func.func @transform_3(%arg0: i32) -> (i32, i32) {
    %c0_i32 = arith.constant 0 : i32
    %c0_i32_0 = arith.constant 0 : i32
    %c0_i32_1 = arith.constant 0 : i32
    return %c0_i32, %c0_i32_0 : i32, i32
  }
}

</mosaic_0001>

<llo_original>
// kernel: wsam_forward.1
$region0: #{wsam_forward.1}
  #allocation0 [shape = 'u32[]', space=smem, size = 0x4, offset = 0x4, fixed_abs, tag = 'smem constant byte address 0x4 - core index']
  #allocation1 [shape = 'u32[144,128]{1,0:T(1,128)}', space=vmem, size = 0x12000, scoped, tag = 'internal scratch']
  #allocation2 [shape = 'f32[128,32]{1,0:T(8,128)}', space=vmem, size = 0x10000, scoped, tag = 'scratch operand']
  %s0 = inlined_call_operand.vmem [shape: f32[128,32], index: 0, kind: input, shape index: {}]
  %s1 = inlined_call_operand.vmem [shape: f32[520,64], index: 1, kind: input, shape index: {}]
  %s2 = inlined_call_operand.vmem [shape: f32[33,128], index: 2, kind: input, shape index: {}]
  %s3 = inlined_call_operand.vmem [shape: f32[128,32], index: 3, kind: output, shape index: {}]
  %s4 = sld [smem:[#allocation0]]
  $region22: #{wsam_forward.1} parent=0
    _
  %s6 = ssub.s32 1, %s4
  %s7 = scalar_select 0, %s6, %s4
  // Predicated region
  $region2: #{wsam_forward.1} parent=0 // pred_check
    _
  $region3: #{wsam_forward.1} parent=0 // pred_check_branch
    %9 = sbr.rel (0) target = $region5
  $region4: #{wsam_forward.1} parent=0 // pred_region
    _
  $region5: #{wsam_forward.1} parent=0 // pred_fallthru
    _
  // Predicated region
  $region6: #{wsam_forward.1} parent=0 // pred_check
    _
  $region7: #{wsam_forward.1} parent=0 // pred_check_branch
    %11 = sbr.rel (0) target = $region9
  $region8: #{wsam_forward.1} parent=0 // pred_region
    _
  $region9: #{wsam_forward.1} parent=0 // pred_fallthru
    _
  // Predicated region
  $region10: #{wsam_forward.1} parent=0 // pred_check
    _
  $region11: #{wsam_forward.1} parent=0 // pred_check_branch
    %13 = sbr.rel (0) target = $region13
  $region12: #{wsam_forward.1} parent=0 // pred_region
    _
  $region13: #{wsam_forward.1} parent=0 // pred_fallthru
    _
  %v14 = vld [vmem:[%s0] sm:$0xff]
  %v15 = vld [vmem:[%s0 + $0x8] sm:$0xff]
  %v16 = vld [vmem:[%s0 + $0x10] sm:$0xff]
  %v17 = vld [vmem:[%s0 + $0x18] sm:$0xff]
  %v18 = vld [vmem:[%s0 + $0x20] sm:$0xff]
  %v19 = vld [vmem:[%s0 + $0x28] sm:$0xff]
  %v20 = vld [vmem:[%s0 + $0x30] sm:$0xff]
  %v21 = vld [vmem:[%s0 + $0x38] sm:$0xff]
  %v22 = vld [vmem:[%s0 + $0x40] sm:$0xff]
  %v23 = vld [vmem:[%s0 + $0x48] sm:$0xff]
  %v24 = vld [vmem:[%s0 + $0x50] sm:$0xff]
  %v25 = vld [vmem:[%s0 + $0x58] sm:$0xff]
  %v26 = vld [vmem:[%s0 + $0x60] sm:$0xff]
  %v27 = vld [vmem:[%s0 + $0x68] sm:$0xff]
  %v28 = vld [vmem:[%s0 + $0x70] sm:$0xff]
  %v29 = vld [vmem:[%s0 + $0x78] sm:$0xff]
  %v30 = vld [vmem:[%s1] sm:$0xff]
  %v31 = vld [vmem:[%s1 + $0x8] sm:$0xff]
  %v32 = vld [vmem:[%s1 + $0x10] sm:$0xff]
  %v33 = vld [vmem:[%s1 + $0x18] sm:$0xff]
  %v34 = vld [vmem:[%s1 + $0x20] sm:$0xff]
  %v35 = vld [vmem:[%s1 + $0x28] sm:$0xff]
  %v36 = vld [vmem:[%s1 + $0x30] sm:$0xff]
  %v37 = vld [vmem:[%s1 + $0x38] sm:$0xff]
  %v38 = vld [vmem:[%s1 + $0x40] sm:$0xff]
  %v39 = vld [vmem:[%s1 + $0x48] sm:$0xff]
  %v40 = vld [vmem:[%s1 + $0x50] sm:$0xff]
  %v41 = vld [vmem:[%s1 + $0x58] sm:$0xff]
  %v42 = vld [vmem:[%s1 + $0x60] sm:$0xff]
  %v43 = vld [vmem:[%s1 + $0x68] sm:$0xff]
  %v44 = vld [vmem:[%s1 + $0x70] sm:$0xff]
  %v45 = vld [vmem:[%s1 + $0x78] sm:$0xff]
  %v46 = vld [vmem:[%s1 + $0x80] sm:$0xff]
  %v47 = vld [vmem:[%s1 + $0x88] sm:$0xff]
  %v48 = vld [vmem:[%s1 + $0x90] sm:$0xff]
  %v49 = vld [vmem:[%s1 + $0x98] sm:$0xff]
  %v50 = vld [vmem:[%s1 + $0xa0] sm:$0xff]
  %v51 = vld [vmem:[%s1 + $0xa8] sm:$0xff]
  %v52 = vld [vmem:[%s1 + $0xb0] sm:$0xff]
  %v53 = vld [vmem:[%s1 + $0xb8] sm:$0xff]
  %v54 = vld [vmem:[%s1 + $0xc0] sm:$0xff]
  %v55 = vld [vmem:[%s1 + $0xc8] sm:$0xff]
  %v56 = vld [vmem:[%s1 + $0xd0] sm:$0xff]
  %v57 = vld [vmem:[%s1 + $0xd8] sm:$0xff]
  %v58 = vld [vmem:[%s1 + $0xe0] sm:$0xff]
  %v59 = vld [vmem:[%s1 + $0xe8] sm:$0xff]
  %v60 = vld [vmem:[%s1 + $0xf0] sm:$0xff]
  %v61 = vld [vmem:[%s1 + $0xf8] sm:$0xff]
  %v62 = vld [vmem:[%s1 + $0x200] sm:$0xff]
  %v63 = vld [vmem:[%s2] sm:$0xff]
  %v64 = vld [vmem:[%s2 + $0x8] sm:$0xff]
  %v65 = vld [vmem:[%s2 + $0x10] sm:$0xff]
  %v66 = vld [vmem:[%s2 + $0x18] sm:$0xff]
  %v67 = vld [vmem:[%s2 + $0x20] sm:$0x1]
  %vm68 = vcmask 261120
  %v69 = vsel %vm68, %v14, 0.0
  %70 = vadd.xlane.f32.xlu0 %v69
  %v71 = vpop.xlane.xlu0 %70
  %v72 = vsel %vm68, %v15, 0.0
  %73 = vadd.xlane.f32.xlu0 %v72
  %v74 = vpop.xlane.xlu0 %73
  %v75 = vsel %vm68, %v16, 0.0
  %76 = vadd.xlane.f32.xlu0 %v75
  %v77 = vpop.xlane.xlu0 %76
  %v78 = vsel %vm68, %v17, 0.0
  %79 = vadd.xlane.f32.xlu0 %v78
  %v80 = vpop.xlane.xlu0 %79
  %v81 = vsel %vm68, %v18, 0.0
  %82 = vadd.xlane.f32.xlu0 %v81
  %v83 = vpop.xlane.xlu0 %82
  %v84 = vsel %vm68, %v19, 0.0
  %85 = vadd.xlane.f32.xlu0 %v84
  %v86 = vpop.xlane.xlu0 %85
  %v87 = vsel %vm68, %v20, 0.0
  %88 = vadd.xlane.f32.xlu0 %v87
  %v89 = vpop.xlane.xlu0 %88
  %v90 = vsel %vm68, %v21, 0.0
  %91 = vadd.xlane.f32.xlu0 %v90
  %v92 = vpop.xlane.xlu0 %91
  %v93 = vsel %vm68, %v22, 0.0
  %94 = vadd.xlane.f32.xlu0 %v93
  %v95 = vpop.xlane.xlu0 %94
  %v96 = vsel %vm68, %v23, 0.0
  %97 = vadd.xlane.f32.xlu0 %v96
  %v98 = vpop.xlane.xlu0 %97
  %v99 = vsel %vm68, %v24, 0.0
  %100 = vadd.xlane.f32.xlu0 %v99
  %v101 = vpop.xlane.xlu0 %100
  %v102 = vsel %vm68, %v25, 0.0
  %103 = vadd.xlane.f32.xlu0 %v102
  %v104 = vpop.xlane.xlu0 %103
  %v105 = vsel %vm68, %v26, 0.0
  %106 = vadd.xlane.f32.xlu0 %v105
  %v107 = vpop.xlane.xlu0 %106
  %v108 = vsel %vm68, %v27, 0.0
  %109 = vadd.xlane.f32.xlu0 %v108
  %v110 = vpop.xlane.xlu0 %109
  %v111 = vsel %vm68, %v28, 0.0
  %112 = vadd.xlane.f32.xlu0 %v111
  %v113 = vpop.xlane.xlu0 %112
  %v114 = vsel %vm68, %v29, 0.0
  %115 = vadd.xlane.f32.xlu0 %v114
  %v116 = vpop.xlane.xlu0 %115
  %v117 = vrcp.pop 32.0
  %v118 = vmul.f32 %v71, %v117
  %v119 = vmul.f32 %v74, %v117
  %v120 = vmul.f32 %v77, %v117
  %v121 = vmul.f32 %v80, %v117
  %v122 = vmul.f32 %v83, %v117
  %v123 = vmul.f32 %v86, %v117
  %v124 = vmul.f32 %v89, %v117
  %v125 = vmul.f32 %v92, %v117
  %v126 = vmul.f32 %v95, %v117
  %v127 = vmul.f32 %v98, %v117
  %v128 = vmul.f32 %v101, %v117
  %v129 = vmul.f32 %v104, %v117
  %v130 = vmul.f32 %v107, %v117
  %v131 = vmul.f32 %v110, %v117
  %v132 = vmul.f32 %v113, %v117
  %v133 = vmul.f32 %v116, %v117
  %v134 = vsub.f32 %v14, %v118
  %v135 = vsub.f32 %v15, %v119
  %v136 = vsub.f32 %v16, %v120
  %v137 = vsub.f32 %v17, %v121
  %v138 = vsub.f32 %v18, %v122
  %v139 = vsub.f32 %v19, %v123
  %v140 = vsub.f32 %v20, %v124
  %v141 = vsub.f32 %v21, %v125
  %v142 = vsub.f32 %v22, %v126
  %v143 = vsub.f32 %v23, %v127
  %v144 = vsub.f32 %v24, %v128
  %v145 = vsub.f32 %v25, %v129
  %v146 = vsub.f32 %v26, %v130
  %v147 = vsub.f32 %v27, %v131
  %v148 = vsub.f32 %v28, %v132
  %v149 = vsub.f32 %v29, %v133
  %v150 = vmul.f32 %v134, %v134
  %v151 = vmul.f32 %v135, %v135
  %v152 = vmul.f32 %v136, %v136
  %v153 = vmul.f32 %v137, %v137
  %v154 = vmul.f32 %v138, %v138
  %v155 = vmul.f32 %v139, %v139
  %v156 = vmul.f32 %v140, %v140
  %v157 = vmul.f32 %v141, %v141
  %v158 = vmul.f32 %v142, %v142
  %v159 = vmul.f32 %v143, %v143
  %v160 = vmul.f32 %v144, %v144
  %v161 = vmul.f32 %v145, %v145
  %v162 = vmul.f32 %v146, %v146
  %v163 = vmul.f32 %v147, %v147
  %v164 = vmul.f32 %v148, %v148
  %v165 = vmul.f32 %v149, %v149
  %v166 = vsel %vm68, %v150, 0.0
  %167 = vadd.xlane.f32.xlu0 %v166
  %v168 = vpop.xlane.xlu0 %167
  %v169 = vsel %vm68, %v151, 0.0
  %170 = vadd.xlane.f32.xlu0 %v169
  %v171 = vpop.xlane.xlu0 %170
  %v172 = vsel %vm68, %v152, 0.0
  %173 = vadd.xlane.f32.xlu0 %v172
  %v174 = vpop.xlane.xlu0 %173
  %v175 = vsel %vm68, %v153, 0.0
  %176 = vadd.xlane.f32.xlu0 %v175
  %v177 = vpop.xlane.xlu0 %176
  %v178 = vsel %vm68, %v154, 0.0
  %179 = vadd.xlane.f32.xlu0 %v178
  %v180 = vpop.xlane.xlu0 %179
  %v181 = vsel %vm68, %v155, 0.0
  %182 = vadd.xlane.f32.xlu0 %v181
  %v183 = vpop.xlane.xlu0 %182
  %v184 = vsel %vm68, %v156, 0.0
  %185 = vadd.xlane.f32.xlu0 %v184
  %v186 = vpop.xlane.xlu0 %185
  %v187 = vsel %vm68, %v157, 0.0
  %188 = vadd.xlane.f32.xlu0 %v187
  %v189 = vpop.xlane.xlu0 %188
  %v190 = vsel %vm68, %v158, 0.0
  %191 = vadd.xlane.f32.xlu0 %v190
  %v192 = vpop.xlane.xlu0 %191
  %v193 = vsel %vm68, %v159, 0.0
  %194 = vadd.xlane.f32.xlu0 %v193
  %v195 = vpop.xlane.xlu0 %194
  %v196 = vsel %vm68, %v160, 0.0
  %197 = vadd.xlane.f32.xlu0 %v196
  %v198 = vpop.xlane.xlu0 %197
  %v199 = vsel %vm68, %v161, 0.0
  %200 = vadd.xlane.f32.xlu0 %v199
  %v201 = vpop.xlane.xlu0 %200
  %v202 = vsel %vm68, %v162, 0.0
  %203 = vadd.xlane.f32.xlu0 %v202
  %v204 = vpop.xlane.xlu0 %203
  %v205 = vsel %vm68, %v163, 0.0
  %206 = vadd.xlane.f32.xlu0 %v205
  %v207 = vpop.xlane.xlu0 %206
  %v208 = vsel %vm68, %v164, 0.0
  %209 = vadd.xlane.f32.xlu0 %v208
  %v210 = vpop.xlane.xlu0 %209
  %v211 = vsel %vm68, %v165, 0.0
  %212 = vadd.xlane.f32.xlu0 %v211
  %v213 = vpop.xlane.xlu0 %212
  %v214 = vmul.f32 %v168, %v117
  %v215 = vmul.f32 %v171, %v117
  %v216 = vmul.f32 %v174, %v117
  %v217 = vmul.f32 %v177, %v117
  %v218 = vmul.f32 %v180, %v117
  %v219 = vmul.f32 %v183, %v117
  %v220 = vmul.f32 %v186, %v117
  %v221 = vmul.f32 %v189, %v117
  %v222 = vmul.f32 %v192, %v117
  %v223 = vmul.f32 %v195, %v117
  %v224 = vmul.f32 %v198, %v117
  %v225 = vmul.f32 %v201, %v117
  %v226 = vmul.f32 %v204, %v117
  %v227 = vmul.f32 %v207, %v117
  %v228 = vmul.f32 %v210, %v117
  %v229 = vmul.f32 %v213, %v117
  %v230 = vadd.f32 %v214, 1e-05
  %v231 = vadd.f32 %v215, 1e-05
  %v232 = vadd.f32 %v216, 1e-05
  %v233 = vadd.f32 %v217, 1e-05
  %v234 = vadd.f32 %v218, 1e-05
  %v235 = vadd.f32 %v219, 1e-05
  %v236 = vadd.f32 %v220, 1e-05
  %v237 = vadd.f32 %v221, 1e-05
  %v238 = vadd.f32 %v222, 1e-05
  %v239 = vadd.f32 %v223, 1e-05
  %v240 = vadd.f32 %v224, 1e-05
  %v241 = vadd.f32 %v225, 1e-05
  %v242 = vadd.f32 %v226, 1e-05
  %v243 = vadd.f32 %v227, 1e-05
  %v244 = vadd.f32 %v228, 1e-05
  %v245 = vadd.f32 %v229, 1e-05
  %v246 = vrsqrt.pop %v230
  %v247 = vrsqrt.pop %v231
  %v248 = vrsqrt.pop %v232
  %v249 = vrsqrt.pop %v233
  %v250 = vrsqrt.pop %v234
  %v251 = vrsqrt.pop %v235
  %v252 = vrsqrt.pop %v236
  %v253 = vrsqrt.pop %v237
  %v254 = vrsqrt.pop %v238
  %v255 = vrsqrt.pop %v239
  %v256 = vrsqrt.pop %v240
  %v257 = vrsqrt.pop %v241
  %v258 = vrsqrt.pop %v242
  %v259 = vrsqrt.pop %v243
  %v260 = vrsqrt.pop %v244
  %v261 = vrsqrt.pop %v245
  %v262 = vmul.f32 %v134, %v246
  %v263 = vmul.f32 %v135, %v247
  %v264 = vmul.f32 %v136, %v248
  %v265 = vmul.f32 %v137, %v249
  %v266 = vmul.f32 %v138, %v250
  %v267 = vmul.f32 %v139, %v251
  %v268 = vmul.f32 %v140, %v252
  %v269 = vmul.f32 %v141, %v253
  %v270 = vmul.f32 %v142, %v254
  %v271 = vmul.f32 %v143, %v255
  %v272 = vmul.f32 %v144, %v256
  %v273 = vmul.f32 %v145, %v257
  %v274 = vmul.f32 %v146, %v258
  %v275 = vmul.f32 %v147, %v259
  %v276 = vmul.f32 %v148, %v260
  %v277 = vmul.f32 %v149, %v261
  %v278 = vlaneseq
  %v279 = vshrl.u32 %v278, 7
  %v280 = vsub.s32 0, %v279
  %v281 = vrot.slane %v62, %v280
  %v282 = vmul.f32 %v262, %v281
  %v283 = vmul.f32 %v263, %v281
  %v284 = vmul.f32 %v264, %v281
  %v285 = vmul.f32 %v265, %v281
  %v286 = vmul.f32 %v266, %v281
  %v287 = vmul.f32 %v267, %v281
  %v288 = vmul.f32 %v268, %v281
  %v289 = vmul.f32 %v269, %v281
  %v290 = vmul.f32 %v270, %v281
  %v291 = vmul.f32 %v271, %v281
  %v292 = vmul.f32 %v272, %v281
  %v293 = vmul.f32 %v273, %v281
  %v294 = vmul.f32 %v274, %v281
  %v295 = vmul.f32 %v275, %v281
  %v296 = vmul.f32 %v276, %v281
  %v297 = vmul.f32 %v277, %v281
  %v298 = vlaneseq
  %v299 = vshrl.u32 %v298, 7
  %v300 = vsub.s32 1, %v299
  %v301 = vrot.slane %v62, %v300
  %v302 = vadd.f32 %v282, %v301
  %v303 = vadd.f32 %v283, %v301
  %v304 = vadd.f32 %v284, %v301
  %v305 = vadd.f32 %v285, %v301
  %v306 = vadd.f32 %v286, %v301
  %v307 = vadd.f32 %v287, %v301
  %v308 = vadd.f32 %v288, %v301
  %v309 = vadd.f32 %v289, %v301
  %v310 = vadd.f32 %v290, %v301
  %v311 = vadd.f32 %v291, %v301
  %v312 = vadd.f32 %v292, %v301
  %v313 = vadd.f32 %v293, %v301
  %v314 = vadd.f32 %v294, %v301
  %v315 = vadd.f32 %v295, %v301
  %v316 = vadd.f32 %v296, %v301
  %v317 = vadd.f32 %v297, %v301
  %v318 = vlaneseq
  %v319 = vshrl.u32 %v318, 7
  %v320 = vsub.s32 2, %v319
  %v321 = vrot.slane %v62, %v320
  %v323 = vsel %vm68, %v302, 0
  %v326 = vsel %vm68, %v303, 0
  %v329 = vsel %vm68, %v304, 0
  %v332 = vsel %vm68, %v305, 0
  %v335 = vsel %vm68, %v306, 0
  %v338 = vsel %vm68, %v307, 0
  %v341 = vsel %vm68, %v308, 0
  %v344 = vsel %vm68, %v309, 0
  %v347 = vsel %vm68, %v310, 0
  %v350 = vsel %vm68, %v311, 0
  %v353 = vsel %vm68, %v312, 0
  %v356 = vsel %vm68, %v313, 0
  %v359 = vsel %vm68, %v314, 0
  %v362 = vsel %vm68, %v315, 0
  %v365 = vsel %vm68, %v316, 0
  %v368 = vsel %vm68, %v317, 0
  %370 = vmatprep.subr.mxu0 0.0
  %371 = vmatpush1.msra.mxu0 %v30
  %372 = vmatprep.subr.mxu0 0.0
  %373 = vmatpush1.msra.mxu0 %v31
  %374 = vmatprep.subr.mxu0 0.0
  %375 = vmatpush1.msra.mxu0 %v32
  %376 = vmatprep.subr.mxu0 0.0
  %377 = vmatpush1.msra.mxu0 %v33
  %378 = vmatprep.subr.mxu0 0.0
  %379 = vmatpush1.msra.mxu0 0.0
  %380 = vmatprep.subr.mxu0 0.0
  %381 = vmatpush1.msra.mxu0 0.0
  %382 = vmatprep.subr.mxu0 0.0
  %383 = vmatpush1.msra.mxu0 0.0
  %384 = vmatprep.subr.mxu0 0.0
  %385 = vmatpush1.msra.mxu0 0.0
  %386 = vmatprep.subr.mxu0 0.0
  %387 = vmatpush1.msra.mxu0 0.0
  %388 = vmatprep.subr.mxu0 0.0
  %389 = vmatpush1.msra.mxu0 0.0
  %390 = vmatprep.subr.mxu0 0.0
  %391 = vmatpush1.msra.mxu0 0.0
  %392 = vmatprep.subr.mxu0 0.0
  %393 = vmatpush1.msra.mxu0 0.0
  %394 = vmatprep.subr.mxu0 0.0
  %395 = vmatpush1.msra.mxu0 0.0
  %396 = vmatprep.subr.mxu0 0.0
  %397 = vmatpush1.msra.mxu0 0.0
  %398 = vmatprep.subr.mxu0 0.0
  %399 = vmatpush1.msra.mxu0 0.0
  %400 = vmatprep.subr.mxu0 0.0
  %401 = vmatpush1.msra.mxu0 0.0
  %402 = vmatprep.subr.mxu0 0.0
  %403 = vmatpush1.msra.mxu0 0.0
  %404 = vmatprep.subr.mxu0 0.0
  %405 = vmatpush1.msra.mxu0 0.0
  %406 = vmatprep.subr.mxu0 0.0
  %407 = vmatpush1.msra.mxu0 0.0
  %408 = vmatprep.subr.mxu0 0.0
  %409 = vmatpush1.msra.mxu0 0.0
  %410 = vmatprep.subr.mxu0 0.0
  %411 = vmatpush1.msra.mxu0 0.0
  %412 = vmatprep.subr.mxu0 0.0
  %413 = vmatpush1.msra.mxu0 0.0
  %414 = vmatprep.subr.mxu0 0.0
  %415 = vmatpush1.msra.mxu0 0.0
  %416 = vmatprep.subr.mxu0 0.0
  %417 = vmatpush1.msra.mxu0 0.0
  %418 = vmatprep.subr.mxu0 0.0
  %419 = vmatpush1.msra.mxu0 0.0
  %420 = vmatprep.subr.mxu0 0.0
  %421 = vmatpush1.msra.mxu0 0.0
  %422 = vmatprep.subr.mxu0 0.0
  %423 = vmatpush1.msra.mxu0 0.0
  %424 = vmatprep.subr.mxu0 0.0
  %425 = vmatpush1.msra.mxu0 0.0
  %426 = vmatprep.subr.mxu0 0.0
  %427 = vmatpush1.msra.mxu0 0.0
  %428 = vmatprep.subr.mxu0 0.0
  %429 = vmatpush1.msra.mxu0 0.0
  %430 = vmatprep.subr.mxu0 0.0
  %431 = vmatpush1.msra.mxu0 0.0
  %432 = vmatprep.subr.mxu0 0.0
  %433 = vmatpush1.msra.mxu0 0.0
  %434 = vmatprep.mubr.f32.mxu0 0.0
  %435 = vmatmul.mubr.f32.gmra.mrb[0].mxu0 %v323
  %v436 = vpop.f32.mrb[0].mxu0
  %v437 = vadd.f32 %v321, %v436
  %v438 = vpop.f32.mrb[0].mxu0
  %439 = vmatprep.mubr.f32.mxu0 0.0
  %440 = vmatmul.mubr.f32.gmra.mrb[0].mxu0 %v326
  %v441 = vpop.f32.mrb[0].mxu0
  %v442 = vadd.f32 %v321, %v441
  %v443 = vpop.f32.mrb[0].mxu0
  %444 = vmatprep.mubr.f32.mxu0 0.0
  %445 = vmatmul.mubr.f32.gmra.mrb[0].mxu0 %v329
  %v446 = vpop.f32.mrb[0].mxu0
  %v447 = vadd.f32 %v321, %v446
  %v448 = vpop.f32.mrb[0].mxu0
  %449 = vmatprep.mubr.f32.mxu0 0.0
  %450 = vmatmul.mubr.f32.gmra.mrb[0].mxu0 %v332
  %v451 = vpop.f32.mrb[0].mxu0
  %v452 = vadd.f32 %v321, %v451
  %v453 = vpop.f32.mrb[0].mxu0
  %454 = vmatprep.mubr.f32.mxu0 0.0
  %455 = vmatmul.mubr.f32.gmra.mrb[0].mxu0 %v335
  %v456 = vpop.f32.mrb[0].mxu0
  %v457 = vadd.f32 %v321, %v456
  %v458 = vpop.f32.mrb[0].mxu0
  %459 = vmatprep.mubr.f32.mxu0 0.0
  %460 = vmatmul.mubr.f32.gmra.mrb[0].mxu0 %v338
  %v461 = vpop.f32.mrb[0].mxu0
  %v462 = vadd.f32 %v321, %v461
  %v463 = vpop.f32.mrb[0].mxu0
  %464 = vmatprep.mubr.f32.mxu0 0.0
  %465 = vmatmul.mubr.f32.gmra.mrb[0].mxu0 %v341
  %v466 = vpop.f32.mrb[0].mxu0
  %v467 = vadd.f32 %v321, %v466
  %v468 = vpop.f32.mrb[0].mxu0
  %469 = vmatprep.mubr.f32.mxu0 0.0
  %470 = vmatmul.mubr.f32.gmra.mrb[0].mxu0 %v344
  %v471 = vpop.f32.mrb[0].mxu0
  %v472 = vadd.f32 %v321, %v471
  %v473 = vpop.f32.mrb[0].mxu0
  %474 = vmatprep.mubr.f32.mxu0 0.0
  %475 = vmatmul.mubr.f32.gmra.mrb[0].mxu0 %v347
  %v476 = vpop.f32.mrb[0].mxu0
  %v477 = vadd.f32 %v321, %v476
  %v478 = vpop.f32.mrb[0].mxu0
  %479 = vmatprep.mubr.f32.mxu0 0.0
  %480 = vmatmul.mubr.f32.gmra.mrb[0].mxu0 %v350
  %v481 = vpop.f32.mrb[0].mxu0
  %v482 = vadd.f32 %v321, %v481
  %v483 = vpop.f32.mrb[0].mxu0
  %484 = vmatprep.mubr.f32.mxu0 0.0
  %485 = vmatmul.mubr.f32.gmra.mrb[0].mxu0 %v353
  %v486 = vpop.f32.mrb[0].mxu0
  %v487 = vadd.f32 %v321, %v486
  %v488 = vpop.f32.mrb[0].mxu0
  %489 = vmatprep.mubr.f32.mxu0 0.0
  %490 = vmatmul.mubr.f32.gmra.mrb[0].mxu0 %v356
  %v491 = vpop.f32.mrb[0].mxu0
  %v492 = vadd.f32 %v321, %v491
  %v493 = vpop.f32.mrb[0].mxu0
  %494 = vmatprep.mubr.f32.mxu0 0.0
  %495 = vmatmul.mubr.f32.gmra.mrb[0].mxu0 %v359
  %v496 = vpop.f32.mrb[0].mxu0
  %v497 = vadd.f32 %v321, %v496
  %v498 = vpop.f32.mrb[0].mxu0
  %499 = vmatprep.mubr.f32.mxu0 0.0
  %500 = vmatmul.mubr.f32.gmra.mrb[0].mxu0 %v362
  %v501 = vpop.f32.mrb[0].mxu0
  %v502 = vadd.f32 %v321, %v501
  %v503 = vpop.f32.mrb[0].mxu0
  %504 = vmatprep.mubr.f32.mxu0 0.0
  %505 = vmatmul.mubr.f32.gmra.mrb[0].mxu0 %v365
  %v506 = vpop.f32.mrb[0].mxu0
  %v507 = vadd.f32 %v321, %v506
  %v508 = vpop.f32.mrb[0].mxu0
  %509 = vmatprep.mubr.f32.mxu0 0.0
  %510 = vmatmul.mubr.f32.gmra.mrb[0].mxu0 %v368
  %v511 = vpop.f32.mrb[0].mxu0
  %v512 = vadd.f32 %v321, %v511
  %v513 = vpop.f32.mrb[0].mxu0
  %514 = vdwg.mxu0
  %v515 = vld [vmem:[%s1 + $0x100] sm:$0xff]
  %v516 = vld [vmem:[%s1 + $0x108] sm:$0xff]
  %v517 = vld [vmem:[%s1 + $0x110] sm:$0xff]
  %v518 = vld [vmem:[%s1 + $0x118] sm:$0xff]
  %v519 = vld [vmem:[%s1 + $0x120] sm:$0xff]
  %v520 = vld [vmem:[%s1 + $0x128] sm:$0xff]
  %v521 = vld [vmem:[%s1 + $0x130] sm:$0xff]
  %v522 = vld [vmem:[%s1 + $0x138] sm:$0xff]
  %vm523 = vcmask 64512
  %v525 = vsel %vm523, %v38, 0
  %v528 = vsel %vm523, %v39, 0
  %v531 = vsel %vm523, %v40, 0
  %v534 = vsel %vm523, %v41, 0
  %v537 = vsel %vm523, %v42, 0
  %v540 = vsel %vm523, %v43, 0
  %v543 = vsel %vm523, %v44, 0
  %v546 = vsel %vm523, %v45, 0
  %v549 = vsel %vm523, %v437, 0
  %v552 = vsel %vm523, %v442, 0
  %v555 = vsel %vm523, %v447, 0
  %v558 = vsel %vm523, %v452, 0
  %v561 = vsel %vm523, %v457, 0
  %v564 = vsel %vm523, %v462, 0
  %v567 = vsel %vm523, %v467, 0
  %v570 = vsel %vm523, %v472, 0
  %572 = vmatprep.subr.mxu0 0.0
  %573 = vmatpush1.xpose.msra.mxu0 %v549
  %574 = vmatprep.subr.mxu0 0.0
  %575 = vmatpush1.xpose.msra.mxu0 %v552
  %576 = vmatprep.subr.mxu0 0.0
  %577 = vmatpush1.xpose.msra.mxu0 %v555
  %578 = vmatprep.subr.mxu0 0.0
  %579 = vmatpush1.xpose.msra.mxu0 %v558
  %580 = vmatprep.subr.mxu0 0.0
  %581 = vmatpush1.xpose.msra.mxu0 %v561
  %582 = vmatprep.subr.mxu0 0.0
  %583 = vmatpush1.xpose.msra.mxu0 %v564
  %584 = vmatprep.subr.mxu0 0.0
  %585 = vmatpush1.xpose.msra.mxu0 %v567
  %586 = vmatprep.subr.mxu0 0.0
  %587 = vmatpush1.xpose.msra.mxu0 %v570
  %588 = vmatprep.subr.mxu0 0.0
  %589 = vmatpush1.xpose.msra.mxu0 0.0
  %590 = vmatprep.subr.mxu0 0.0
  %591 = vmatpush1.xpose.msra.mxu0 0.0
  %592 = vmatprep.subr.mxu0 0.0
  %593 = vmatpush1.xpose.msra.mxu0 0.0
  %594 = vmatprep.subr.mxu0 0.0
  %595 = vmatpush1.xpose.msra.mxu0 0.0
  %596 = vmatprep.subr.mxu0 0.0
  %597 = vmatpush1.xpose.msra.mxu0 0.0
  %598 = vmatprep.subr.mxu0 0.0
  %599 = vmatpush1.xpose.msra.mxu0 0.0
  %600 = vmatprep.subr.mxu0 0.0
  %601 = vmatpush1.xpose.msra.mxu0 0.0
  %602 = vmatprep.subr.mxu0 0.0
  %603 = vmatpush1.xpose.msra.mxu0 0.0
  %604 = vmatprep.subr.mxu0 0.0
  %605 = vmatpush1.xpose.msra.mxu0 0.0
  %606 = vmatprep.subr.mxu0 0.0
  %607 = vmatpush1.xpose.msra.mxu0 0.0
  %608 = vmatprep.subr.mxu0 0.0
  %609 = vmatpush1.xpose.msra.mxu0 0.0
  %610 = vmatprep.subr.mxu0 0.0
  %611 = vmatpush1.xpose.msra.mxu0 0.0
  %612 = vmatprep.subr.mxu0 0.0
  %613 = vmatpush1.xpose.msra.mxu0 0.0
  %614 = vmatprep.subr.mxu0 0.0
  %615 = vmatpush1.xpose.msra.mxu0 0.0
  %616 = vmatprep.subr.mxu0 0.0
  %617 = vmatpush1.xpose.msra.mxu0 0.0
  %618 = vmatprep.subr.mxu0 0.0
  %619 = vmatpush1.xpose.msra.mxu0 0.0
  %620 = vmatprep.subr.mxu0 0.0
  %621 = vmatpush1.xpose.msra.mxu0 0.0
  %622 = vmatprep.subr.mxu0 0.0
  %623 = vmatpush1.xpose.msra.mxu0 0.0
  %624 = vmatprep.subr.mxu0 0.0
  %625 = vmatpush1.xpose.msra.mxu0 0.0
  %626 = vmatprep.subr.mxu0 0.0
  %627 = vmatpush1.xpose.msra.mxu0 0.0
  %628 = vmatprep.subr.mxu0 0.0
  %629 = vmatpush1.xpose.msra.mxu0 0.0
  %630 = vmatprep.subr.mxu0 0.0
  %631 = vmatpush1.xpose.msra.mxu0 0.0
  %632 = vmatprep.subr.mxu0 0.0
  %633 = vmatpush1.xpose.msra.mxu0 0.0
  %634 = vmatprep.subr.mxu0 0.0
  %635 = vmatpush1.xpose.msra.mxu0 0.0
  %636 = vmatprep.mubr.f32.mxu0 0.0
  %637 = vmatmul.mubr.f32.gmra.mrb[0].mxu0 %v525
  %v638 = vpop.f32.mrb[0].mxu0
  %v639 = vadd.f32 %v515, %v638
  %v640 = vpop.f32.mrb[0].mxu0
  %641 = vmatprep.mubr.f32.mxu0 0.0
  %642 = vmatmul.mubr.f32.gmra.mrb[0].mxu0 %v528
  %v643 = vpop.f32.mrb[0].mxu0
  %v644 = vadd.f32 %v516, %v643
  %v645 = vpop.f32.mrb[0].mxu0
  %646 = vmatprep.mubr.f32.mxu0 0.0
  %647 = vmatmul.mubr.f32.gmra.mrb[0].mxu0 %v531
  %v648 = vpop.f32.mrb[0].mxu0
  %v649 = vadd.f32 %v517, %v648
  %v650 = vpop.f32.mrb[0].mxu0
  %651 = vmatprep.mubr.f32.mxu0 0.0
  %652 = vmatmul.mubr.f32.gmra.mrb[0].mxu0 %v534
  %v653 = vpop.f32.mrb[0].mxu0
  %v654 = vadd.f32 %v518, %v653
  %v655 = vpop.f32.mrb[0].mxu0
  %656 = vmatprep.mubr.f32.mxu0 0.0
  %657 = vmatmul.mubr.f32.gmra.mrb[0].mxu0 %v537
  %v658 = vpop.f32.mrb[0].mxu0
  %v659 = vadd.f32 %v519, %v658
  %v660 = vpop.f32.mrb[0].mxu0
  %661 = vmatprep.mubr.f32.mxu0 0.0
  %662 = vmatmul.mubr.f32.gmra.mrb[0].mxu0 %v540
  %v663 = vpop.f32.mrb[0].mxu0
  %v664 = vadd.f32 %v520, %v663
  %v665 = vpop.f32.mrb[0].mxu0
  %666 = vmatprep.mubr.f32.mxu0 0.0
  %667 = vmatmul.mubr.f32.gmra.mrb[0].mxu0 %v543
  %v668 = vpop.f32.mrb[0].mxu0
  %v669 = vadd.f32 %v521, %v668
  %v670 = vpop.f32.mrb[0].mxu0
  %671 = vmatprep.mubr.f32.mxu0 0.0
  %672 = vmatmul.mubr.f32.gmra.mrb[0].mxu0 %v546
  %v673 = vpop.f32.mrb[0].mxu0
  %v674 = vadd.f32 %v522, %v673
  %v675 = vpop.f32.mrb[0].mxu0
  %676 = vdwg.mxu0
  %vm677 = vcmask 523264
  %v678 = vsel %vm677, %v639, -inf
  %679 = vmax.xlane.f32.xlu0 %v678
  %v680 = vpop.xlane.xlu0 %679
  %v681 = vsel %vm677, %v644, -inf
  %682 = vmax.xlane.f32.xlu0 %v681
  %v683 = vpop.xlane.xlu0 %682
  %v684 = vsel %vm677, %v649, -inf
  %685 = vmax.xlane.f32.xlu0 %v684
  %v686 = vpop.xlane.xlu0 %685
  %v687 = vsel %vm677, %v654, -inf
  %688 = vmax.xlane.f32.xlu0 %v687
  %v689 = vpop.xlane.xlu0 %688
  %v690 = vsel %vm677, %v659, -inf
  %691 = vmax.xlane.f32.xlu0 %v690
  %v692 = vpop.xlane.xlu0 %691
  %v693 = vsel %vm677, %v664, -inf
  %694 = vmax.xlane.f32.xlu0 %v693
  %v695 = vpop.xlane.xlu0 %694
  %v696 = vsel %vm677, %v669, -inf
  %697 = vmax.xlane.f32.xlu0 %v696
  %v698 = vpop.xlane.xlu0 %697
  %v699 = vsel %vm677, %v674, -inf
  %700 = vmax.xlane.f32.xlu0 %v699
  %v701 = vpop.xlane.xlu0 %700
  %v702 = vsub.f32 %v639, %v680
  %v703 = vsub.f32 %v644, %v683
  %v704 = vsub.f32 %v649, %v686
  %v705 = vsub.f32 %v654, %v689
  %v706 = vsub.f32 %v659, %v692
  %v707 = vsub.f32 %v664, %v695
  %v708 = vsub.f32 %v669, %v698
  %v709 = vsub.f32 %v674, %v701
  %v710 = vmul.f32 %v702, 1.442695
  %v711 = vpow.pop %v710
  %v712 = vmul.f32 %v703, 1.442695
  %v713 = vpow.pop %v712
  %v714 = vmul.f32 %v704, 1.442695
  %v715 = vpow.pop %v714
  %v716 = vmul.f32 %v705, 1.442695
  %v717 = vpow.pop %v716
  %v718 = vmul.f32 %v706, 1.442695
  %v719 = vpow.pop %v718
  %v720 = vmul.f32 %v707, 1.442695
  %v721 = vpow.pop %v720
  %v722 = vmul.f32 %v708, 1.442695
  %v723 = vpow.pop %v722
  %v724 = vmul.f32 %v709, 1.442695
  %v725 = vpow.pop %v724
  %v726 = vsel %vm677, %v711, 0.0
  %727 = vadd.xlane.f32.xlu0 %v726
  %v728 = vpop.xlane.xlu0 %727
  %v729 = vsel %vm677, %v713, 0.0
  %730 = vadd.xlane.f32.xlu0 %v729
  %v731 = vpop.xlane.xlu0 %730
  %v732 = vsel %vm677, %v715, 0.0
  %733 = vadd.xlane.f32.xlu0 %v732
  %v734 = vpop.xlane.xlu0 %733
  %v735 = vsel %vm677, %v717, 0.0
  %736 = vadd.xlane.f32.xlu0 %v735
  %v737 = vpop.xlane.xlu0 %736
  %v738 = vsel %vm677, %v719, 0.0
  %739 = vadd.xlane.f32.xlu0 %v738
  %v740 = vpop.xlane.xlu0 %739
  %v741 = vsel %vm677, %v721, 0.0
  %742 = vadd.xlane.f32.xlu0 %v741
  %v743 = vpop.xlane.xlu0 %742
  %v744 = vsel %vm677, %v723, 0.0
  %745 = vadd.xlane.f32.xlu0 %v744
  %v746 = vpop.xlane.xlu0 %745
  %v747 = vsel %vm677, %v725, 0.0
  %748 = vadd.xlane.f32.xlu0 %v747
  %v749 = vpop.xlane.xlu0 %748
  %v750 = vrcp.pop %v728
  %v751 = vrcp.pop %v731
  %v752 = vrcp.pop %v734
  %v753 = vrcp.pop %v737
  %v754 = vrcp.pop %v740
  %v755 = vrcp.pop %v743
  %v756 = vrcp.pop %v746
  %v757 = vrcp.pop %v749
  %v758 = vmul.f32 %v711, %v750
  %v759 = vmul.f32 %v713, %v751
  %v760 = vmul.f32 %v715, %v752
  %v761 = vmul.f32 %v717, %v753
  %v762 = vmul.f32 %v719, %v754
  %v763 = vmul.f32 %v721, %v755
  %v764 = vmul.f32 %v723, %v756
  %v765 = vmul.f32 %v725, %v757
  %766 = vrot.lane.b32.xlu0 %v437, 96
  %v767 = vpop.permute.xlu0 %766
  %768 = vrot.lane.b32.xlu0 %v442, 96
  %v769 = vpop.permute.xlu0 %768
  %770 = vrot.lane.b32.xlu0 %v447, 96
  %v771 = vpop.permute.xlu0 %770
  %772 = vrot.lane.b32.xlu0 %v452, 96
  %v773 = vpop.permute.xlu0 %772
  %774 = vrot.lane.b32.xlu0 %v457, 96
  %v775 = vpop.permute.xlu0 %774
  %776 = vrot.lane.b32.xlu0 %v462, 96
  %v777 = vpop.permute.xlu0 %776
  %778 = vrot.lane.b32.xlu0 %v467, 96
  %v779 = vpop.permute.xlu0 %778
  %780 = vrot.lane.b32.xlu0 %v472, 96
  %v781 = vpop.permute.xlu0 %780
  %v791 = vsel %vm677, %v758, 0
  %v794 = vsel %vm677, %v759, 0
  %v797 = vsel %vm677, %v760, 0
  %v800 = vsel %vm677, %v761, 0
  %v803 = vsel %vm677, %v762, 0
  %v806 = vsel %vm677, %v763, 0
  %v809 = vsel %vm677, %v764, 0
  %v812 = vsel %vm677, %v765, 0
  %814 = vmatprep.subr.mxu0 0.0
  %815 = vmatpush1.msra.mxu0 %v767
  %816 = vmatprep.subr.mxu0 0.0
  %817 = vmatpush1.msra.mxu0 %v769
  %818 = vmatprep.subr.mxu0 0.0
  %819 = vmatpush1.msra.mxu0 %v771
  %820 = vmatprep.subr.mxu0 0.0
  %821 = vmatpush1.msra.mxu0 %v773
  %822 = vmatprep.subr.mxu0 0.0
  %823 = vmatpush1.msra.mxu0 %v775
  %824 = vmatprep.subr.mxu0 0.0
  %825 = vmatpush1.msra.mxu0 %v777
  %826 = vmatprep.subr.mxu0 0.0
  %827 = vmatpush1.msra.mxu0 %v779
  %828 = vmatprep.subr.mxu0 0.0
  %829 = vmatpush1.msra.mxu0 %v781
  %830 = vmatprep.subr.mxu0 0.0
  %831 = vmatpush1.msra.mxu0 0.0
  %832 = vmatprep.subr.mxu0 0.0
  %833 = vmatpush1.msra.mxu0 0.0
  %834 = vmatprep.subr.mxu0 0.0
  %835 = vmatpush1.msra.mxu0 0.0
  %836 = vmatprep.subr.mxu0 0.0
  %837 = vmatpush1.msra.mxu0 0.0
  %838 = vmatprep.subr.mxu0 0.0
  %839 = vmatpush1.msra.mxu0 0.0
  %840 = vmatprep.subr.mxu0 0.0
  %841 = vmatpush1.msra.mxu0 0.0
  %842 = vmatprep.subr.mxu0 0.0
  %843 = vmatpush1.msra.mxu0 0.0
  %844 = vmatprep.subr.mxu0 0.0
  %845 = vmatpush1.msra.mxu0 0.0
  %846 = vmatprep.subr.mxu0 0.0
  %847 = vmatpush1.msra.mxu0 0.0
  %848 = vmatprep.subr.mxu0 0.0
  %849 = vmatpush1.msra.mxu0 0.0
  %850 = vmatprep.subr.mxu0 0.0
  %851 = vmatpush1.msra.mxu0 0.0
  %852 = vmatprep.subr.mxu0 0.0
  %853 = vmatpush1.msra.mxu0 0.0
  %854 = vmatprep.subr.mxu0 0.0
  %855 = vmatpush1.msra.mxu0 0.0
  %856 = vmatprep.subr.mxu0 0.0
  %857 = vmatpush1.msra.mxu0 0.0
  %858 = vmatprep.subr.mxu0 0.0
  %859 = vmatpush1.msra.mxu0 0.0
  %860 = vmatprep.subr.mxu0 0.0
  %861 = vmatpush1.msra.mxu0 0.0
  %862 = vmatprep.subr.mxu0 0.0
  %863 = vmatpush1.msra.mxu0 0.0
  %864 = vmatprep.subr.mxu0 0.0
  %865 = vmatpush1.msra.mxu0 0.0
  %866 = vmatprep.subr.mxu0 0.0
  %867 = vmatpush1.msra.mxu0 0.0
  %868 = vmatprep.subr.mxu0 0.0
  %869 = vmatpush1.msra.mxu0 0.0
  %870 = vmatprep.subr.mxu0 0.0
  %871 = vmatpush1.msra.mxu0 0.0
  %872 = vmatprep.subr.mxu0 0.0
  %873 = vmatpush1.msra.mxu0 0.0
  %874 = vmatprep.subr.mxu0 0.0
  %875 = vmatpush1.msra.mxu0 0.0
  %876 = vmatprep.subr.mxu0 0.0
  %877 = vmatpush1.msra.mxu0 0.0
  %878 = vmatprep.mubr.f32.mxu0 0.0
  %879 = vmatmul.mubr.f32.gmra.mrb[0].mxu0 %v791
  %v880 = vpop.f32.mrb[0].mxu0
  %v881 = vadd.f32 0.0, %v880
  %v882 = vpop.f32.mrb[0].mxu0
  %883 = vmatprep.mubr.f32.mxu0 0.0
  %884 = vmatmul.mubr.f32.gmra.mrb[0].mxu0 %v794
  %v885 = vpop.f32.mrb[0].mxu0
  %v886 = vadd.f32 0.0, %v885
  %v887 = vpop.f32.mrb[0].mxu0
  %888 = vmatprep.mubr.f32.mxu0 0.0
  %889 = vmatmul.mubr.f32.gmra.mrb[0].mxu0 %v797
  %v890 = vpop.f32.mrb[0].mxu0
  %v891 = vadd.f32 0.0, %v890
  %v892 = vpop.f32.mrb[0].mxu0
  %893 = vmatprep.mubr.f32.mxu0 0.0
  %894 = vmatmul.mubr.f32.gmra.mrb[0].mxu0 %v800
  %v895 = vpop.f32.mrb[0].mxu0
  %v896 = vadd.f32 0.0, %v895
  %v897 = vpop.f32.mrb[0].mxu0
  %898 = vmatprep.mubr.f32.mxu0 0.0
  %899 = vmatmul.mubr.f32.gmra.mrb[0].mxu0 %v803
  %v900 = vpop.f32.mrb[0].mxu0
  %v901 = vadd.f32 0.0, %v900
  %v902 = vpop.f32.mrb[0].mxu0
  %903 = vmatprep.mubr.f32.mxu0 0.0
  %904 = vmatmul.mubr.f32.gmra.mrb[0].mxu0 %v806
  %v905 = vpop.f32.mrb[0].mxu0
  %v906 = vadd.f32 0.0, %v905
  %v907 = vpop.f32.mrb[0].mxu0
  %908 = vmatprep.mubr.f32.mxu0 0.0
  %909 = vmatmul.mubr.f32.gmra.mrb[0].mxu0 %v809
  %v910 = vpop.f32.mrb[0].mxu0
  %v911 = vadd.f32 0.0, %v910
  %v912 = vpop.f32.mrb[0].mxu0
  %913 = vmatprep.mubr.f32.mxu0 0.0
  %914 = vmatmul.mubr.f32.gmra.mrb[0].mxu0 %v812
  %v915 = vpop.f32.mrb[0].mxu0
  %v916 = vadd.f32 0.0, %v915
  %v917 = vpop.f32.mrb[0].mxu0
  %918 = vdwg.mxu0
  %919 = vst.msk [vmem:[#allocation2] sm:$0xff] %vm523, %v881
  %920 = vst.msk [vmem:[#allocation2 + $0x8] sm:$0xff] %vm523, %v886
  %921 = vst.msk [vmem:[#allocation2 + $0x10] sm:$0xff] %vm523, %v891
  %922 = vst.msk [vmem:[#allocation2 + $0x18] sm:$0xff] %vm523, %v896
  %923 = vst.msk [vmem:[#allocation2 + $0x20] sm:$0xff] %vm523, %v901
  %924 = vst.msk [vmem:[#allocation2 + $0x28] sm:$0xff] %vm523, %v906
  %925 = vst.msk [vmem:[#allocation2 + $0x30] sm:$0xff] %vm523, %v911
  %926 = vst.msk [vmem:[#allocation2 + $0x38] sm:$0xff] %vm523, %v916
  %v928 = vsel %vm523, %v477, 0
  %v931 = vsel %vm523, %v482, 0
  %v934 = vsel %vm523, %v487, 0
  %v937 = vsel %vm523, %v492, 0
  %v940 = vsel %vm523, %v497, 0
  %v943 = vsel %vm523, %v502, 0
  %v946 = vsel %vm523, %v507, 0
  %v949 = vsel %vm523, %v512, 0
  %951 = vmatprep.subr.mxu0 0.0
  %952 = vmatpush1.xpose.msra.mxu0 %v928
  %953 = vmatprep.subr.mxu0 0.0
  %954 = vmatpush1.xpose.msra.mxu0 %v931
  %955 = vmatprep.subr.mxu0 0.0
  %956 = vmatpush1.xpose.msra.mxu0 %v934
  %957 = vmatprep.subr.mxu0 0.0
  %958 = vmatpush1.xpose.msra.mxu0 %v937
  %959 = vmatprep.subr.mxu0 0.0
  %960 = vmatpush1.xpose.msra.mxu0 %v940
  %961 = vmatprep.subr.mxu0 0.0
  %962 = vmatpush1.xpose.msra.mxu0 %v943
  %963 = vmatprep.subr.mxu0 0.0
  %964 = vmatpush1.xpose.msra.mxu0 %v946
  %965 = vmatprep.subr.mxu0 0.0
  %966 = vmatpush1.xpose.msra.mxu0 %v949
  %967 = vmatprep.subr.mxu0 0.0
  %968 = vmatpush1.xpose.msra.mxu0 0.0
  %969 = vmatprep.subr.mxu0 0.0
  %970 = vmatpush1.xpose.msra.mxu0 0.0
  %971 = vmatprep.subr.mxu0 0.0
  %972 = vmatpush1.xpose.msra.mxu0 0.0
  %973 = vmatprep.subr.mxu0 0.0
  %974 = vmatpush1.xpose.msra.mxu0 0.0
  %975 = vmatprep.subr.mxu0 0.0
  %976 = vmatpush1.xpose.msra.mxu0 0.0
  %977 = vmatprep.subr.mxu0 0.0
  %978 = vmatpush1.xpose.msra.mxu0 0.0
  %979 = vmatprep.subr.mxu0 0.0
  %980 = vmatpush1.xpose.msra.mxu0 0.0
  %981 = vmatprep.subr.mxu0 0.0
  %982 = vmatpush1.xpose.msra.mxu0 0.0
  %983 = vmatprep.subr.mxu0 0.0
  %984 = vmatpush1.xpose.msra.mxu0 0.0
  %985 = vmatprep.subr.mxu0 0.0
  %986 = vmatpush1.xpose.msra.mxu0 0.0
  %987 = vmatprep.subr.mxu0 0.0
  %988 = vmatpush1.xpose.msra.mxu0 0.0
  %989 = vmatprep.subr.mxu0 0.0
  %990 = vmatpush1.xpose.msra.mxu0 0.0
  %991 = vmatprep.subr.mxu0 0.0
  %992 = vmatpush1.xpose.msra.mxu0 0.0
  %993 = vmatprep.subr.mxu0 0.0
  %994 = vmatpush1.xpose.msra.mxu0 0.0
  %995 = vmatprep.subr.mxu0 0.0
  %996 = vmatpush1.xpose.msra.mxu0 0.0
  %997 = vmatprep.subr.mxu0 0.0
  %998 = vmatpush1.xpose.msra.mxu0 0.0
  %999 = vmatprep.subr.mxu0 0.0
  %1000 = vmatpush1.xpose.msra.mxu0 0.0
  %1001 = vmatprep.subr.mxu0 0.0
  %1002 = vmatpush1.xpose.msra.mxu0 0.0
  %1003 = vmatprep.subr.mxu0 0.0
  %1004 = vmatpush1.xpose.msra.mxu0 0.0
  %1005 = vmatprep.subr.mxu0 0.0
  %1006 = vmatpush1.xpose.msra.mxu0 0.0
  %1007 = vmatprep.subr.mxu0 0.0
  %1008 = vmatpush1.xpose.msra.mxu0 0.0
  %1009 = vmatprep.subr.mxu0 0.0
  %1010 = vmatpush1.xpose.msra.mxu0 0.0
  %1011 = vmatprep.subr.mxu0 0.0
  %1012 = vmatpush1.xpose.msra.mxu0 0.0
  %1013 = vmatprep.subr.mxu0 0.0
  %1014 = vmatpush1.xpose.msra.mxu0 0.0
  %1015 = vmatprep.mubr.f32.mxu0 0.0
  %1016 = vmatmul.mubr.f32.gmra.mrb[0].mxu0 %v525
  %v1017 = vpop.f32.mrb[0].mxu0
  %v1018 = vadd.f32 %v515, %v1017
  %v1019 = vpop.f32.mrb[0].mxu0
  %1020 = vmatprep.mubr.f32.mxu0 0.0
  %1021 = vmatmul.mubr.f32.gmra.mrb[0].mxu0 %v528
  %v1022 = vpop.f32.mrb[0].mxu0
  %v1023 = vadd.f32 %v516, %v1022
  %v1024 = vpop.f32.mrb[0].mxu0
  %1025 = vmatprep.mubr.f32.mxu0 0.0
  %1026 = vmatmul.mubr.f32.gmra.mrb[0].mxu0 %v531
  %v1027 = vpop.f32.mrb[0].mxu0
  %v1028 = vadd.f32 %v517, %v1027
  %v1029 = vpop.f32.mrb[0].mxu0
  %1030 = vmatprep.mubr.f32.mxu0 0.0
  %1031 = vmatmul.mubr.f32.gmra.mrb[0].mxu0 %v534
  %v1032 = vpop.f32.mrb[0].mxu0
  %v1033 = vadd.f32 %v518, %v1032
  %v1034 = vpop.f32.mrb[0].mxu0
  %1035 = vmatprep.mubr.f32.mxu0 0.0
  %1036 = vmatmul.mubr.f32.gmra.mrb[0].mxu0 %v537
  %v1037 = vpop.f32.mrb[0].mxu0
  %v1038 = vadd.f32 %v519, %v1037
  %v1039 = vpop.f32.mrb[0].mxu0
  %1040 = vmatprep.mubr.f32.mxu0 0.0
  %1041 = vmatmul.mubr.f32.gmra.mrb[0].mxu0 %v540
  %v1042 = vpop.f32.mrb[0].mxu0
  %v1043 = vadd.f32 %v520, %v1042
  %v1044 = vpop.f32.mrb[0].mxu0
  %1045 = vmatprep.mubr.f32.mxu0 0.0
  %1046 = vmatmul.mubr.f32.gmra.mrb[0].mxu0 %v543
  %v1047 = vpop.f32.mrb[0].mxu0
  %v1048 = vadd.f32 %v521, %v1047
  %v1049 = vpop.f32.mrb[0].mxu0
  %1050 = vmatprep.mubr.f32.mxu0 0.0
  %1051 = vmatmul.mubr.f32.gmra.mrb[0].mxu0 %v546
  %v1052 = vpop.f32.mrb[0].mxu0
  %v1053 = vadd.f32 %v522, %v1052
  %v1054 = vpop.f32.mrb[0].mxu0
  %1055 = vdwg.mxu0
  %v1056 = vsel %vm677, %v1018, -inf
  %1057 = vmax.xlane.f32.xlu0 %v1056
  %v1058 = vpop.xlane.xlu0 %1057
  %v1059 = vsel %vm677, %v1023, -inf
  %1060 = vmax.xlane.f32.xlu0 %v1059
  %v1061 = vpop.xlane.xlu0 %1060
  %v1062 = vsel %vm677, %v1028, -inf
  %1063 = vmax.xlane.f32.xlu0 %v1062
  %v1064 = vpop.xlane.xlu0 %1063
  %v1065 = vsel %vm677, %v1033, -inf
  %1066 = vmax.xlane.f32.xlu0 %v1065
  %v1067 = vpop.xlane.xlu0 %1066
  %v1068 = vsel %vm677, %v1038, -inf
  %1069 = vmax.xlane.f32.xlu0 %v1068
  %v1070 = vpop.xlane.xlu0 %1069
  %v1071 = vsel %vm677, %v1043, -inf
  %1072 = vmax.xlane.f32.xlu0 %v1071
  %v1073 = vpop.xlane.xlu0 %1072
  %v1074 = vsel %vm677, %v1048, -inf
  %1075 = vmax.xlane.f32.xlu0 %v1074
  %v1076 = vpop.xlane.xlu0 %1075
  %v1077 = vsel %vm677, %v1053, -inf
  %1078 = vmax.xlane.f32.xlu0 %v1077
  %v1079 = vpop.xlane.xlu0 %1078
  %v1080 = vsub.f32 %v1018, %v1058
  %v1081 = vsub.f32 %v1023, %v1061
  %v1082 = vsub.f32 %v1028, %v1064
  %v1083 = vsub.f32 %v1033, %v1067
  %v1084 = vsub.f32 %v1038, %v1070
  %v1085 = vsub.f32 %v1043, %v1073
  %v1086 = vsub.f32 %v1048, %v1076
  %v1087 = vsub.f32 %v1053, %v1079
  %v1088 = vmul.f32 %v1080, 1.442695
  %v1089 = vpow.pop %v1088
  %v1090 = vmul.f32 %v1081, 1.442695
  %v1091 = vpow.pop %v1090
  %v1092 = vmul.f32 %v1082, 1.442695
  %v1093 = vpow.pop %v1092
  %v1094 = vmul.f32 %v1083, 1.442695
  %v1095 = vpow.pop %v1094
  %v1096 = vmul.f32 %v1084, 1.442695
  %v1097 = vpow.pop %v1096
  %v1098 = vmul.f32 %v1085, 1.442695
  %v1099 = vpow.pop %v1098
  %v1100 = vmul.f32 %v1086, 1.442695
  %v1101 = vpow.pop %v1100
  %v1102 = vmul.f32 %v1087, 1.442695
  %v1103 = vpow.pop %v1102
  %v1104 = vsel %vm677, %v1089, 0.0
  %1105 = vadd.xlane.f32.xlu0 %v1104
  %v1106 = vpop.xlane.xlu0 %1105
  %v1107 = vsel %vm677, %v1091, 0.0
  %1108 = vadd.xlane.f32.xlu0 %v1107
  %v1109 = vpop.xlane.xlu0 %1108
  %v1110 = vsel %vm677, %v1093, 0.0
  %1111 = vadd.xlane.f32.xlu0 %v1110
  %v1112 = vpop.xlane.xlu0 %1111
  %v1113 = vsel %vm677, %v1095, 0.0
  %1114 = vadd.xlane.f32.xlu0 %v1113
  %v1115 = vpop.xlane.xlu0 %1114
  %v1116 = vsel %vm677, %v1097, 0.0
  %1117 = vadd.xlane.f32.xlu0 %v1116
  %v1118 = vpop.xlane.xlu0 %1117
  %v1119 = vsel %vm677, %v1099, 0.0
  %1120 = vadd.xlane.f32.xlu0 %v1119
  %v1121 = vpop.xlane.xlu0 %1120
  %v1122 = vsel %vm677, %v1101, 0.0
  %1123 = vadd.xlane.f32.xlu0 %v1122
  %v1124 = vpop.xlane.xlu0 %1123
  %v1125 = vsel %vm677, %v1103, 0.0
  %1126 = vadd.xlane.f32.xlu0 %v1125
  %v1127 = vpop.xlane.xlu0 %1126
  %v1128 = vrcp.pop %v1106
  %v1129 = vrcp.pop %v1109
  %v1130 = vrcp.pop %v1112
  %v1131 = vrcp.pop %v1115
  %v1132 = vrcp.pop %v1118
  %v1133 = vrcp.pop %v1121
  %v1134 = vrcp.pop %v1124
  %v1135 = vrcp.pop %v1127
  %v1136 = vmul.f32 %v1089, %v1128
  %v1137 = vmul.f32 %v1091, %v1129
  %v1138 = vmul.f32 %v1093, %v1130
  %v1139 = vmul.f32 %v1095, %v1131
  %v1140 = vmul.f32 %v1097, %v1132
  %v1141 = vmul.f32 %v1099, %v1133
  %v1142 = vmul.f32 %v1101, %v1134
  %v1143 = vmul.f32 %v1103, %v1135
  %1144 = vrot.lane.b32.xlu0 %v477, 96
  %v1145 = vpop.permute.xlu0 %1144
  %1146 = vrot.lane.b32.xlu0 %v482, 96
  %v1147 = vpop.permute.xlu0 %1146
  %1148 = vrot.lane.b32.xlu0 %v487, 96
  %v1149 = vpop.permute.xlu0 %1148
  %1150 = vrot.lane.b32.xlu0 %v492, 96
  %v1151 = vpop.permute.xlu0 %1150
  %1152 = vrot.lane.b32.xlu0 %v497, 96
  %v1153 = vpop.permute.xlu0 %1152
  %1154 = vrot.lane.b32.xlu0 %v502, 96
  %v1155 = vpop.permute.xlu0 %1154
  %1156 = vrot.lane.b32.xlu0 %v507, 96
  %v1157 = vpop.permute.xlu0 %1156
  %1158 = vrot.lane.b32.xlu0 %v512, 96
  %v1159 = vpop.permute.xlu0 %1158
  %v1169 = vsel %vm677, %v1136, 0
  %v1172 = vsel %vm677, %v1137, 0
  %v1175 = vsel %vm677, %v1138, 0
  %v1178 = vsel %vm677, %v1139, 0
  %v1181 = vsel %vm677, %v1140, 0
  %v1184 = vsel %vm677, %v1141, 0
  %v1187 = vsel %vm677, %v1142, 0
  %v1190 = vsel %vm677, %v1143, 0
  %1192 = vmatprep.subr.mxu0 0.0
  %1193 = vmatpush1.msra.mxu0 %v1145
  %1194 = vmatprep.subr.mxu0 0.0
  %1195 = vmatpush1.msra.mxu0 %v1147
  %1196 = vmatprep.subr.mxu0 0.0
  %1197 = vmatpush1.msra.mxu0 %v1149
  %1198 = vmatprep.subr.mxu0 0.0
  %1199 = vmatpush1.msra.mxu0 %v1151
  %1200 = vmatprep.subr.mxu0 0.0
  %1201 = vmatpush1.msra.mxu0 %v1153
  %1202 = vmatprep.subr.mxu0 0.0
  %1203 = vmatpush1.msra.mxu0 %v1155
  %1204 = vmatprep.subr.mxu0 0.0
  %1205 = vmatpush1.msra.mxu0 %v1157
  %1206 = vmatprep.subr.mxu0 0.0
  %1207 = vmatpush1.msra.mxu0 %v1159
  %1208 = vmatprep.subr.mxu0 0.0
  %1209 = vmatpush1.msra.mxu0 0.0
  %1210 = vmatprep.subr.mxu0 0.0
  %1211 = vmatpush1.msra.mxu0 0.0
  %1212 = vmatprep.subr.mxu0 0.0
  %1213 = vmatpush1.msra.mxu0 0.0
  %1214 = vmatprep.subr.mxu0 0.0
  %1215 = vmatpush1.msra.mxu0 0.0
  %1216 = vmatprep.subr.mxu0 0.0
  %1217 = vmatpush1.msra.mxu0 0.0
  %1218 = vmatprep.subr.mxu0 0.0
  %1219 = vmatpush1.msra.mxu0 0.0
  %1220 = vmatprep.subr.mxu0 0.0
  %1221 = vmatpush1.msra.mxu0 0.0
  %1222 = vmatprep.subr.mxu0 0.0
  %1223 = vmatpush1.msra.mxu0 0.0
  %1224 = vmatprep.subr.mxu0 0.0
  %1225 = vmatpush1.msra.mxu0 0.0
  %1226 = vmatprep.subr.mxu0 0.0
  %1227 = vmatpush1.msra.mxu0 0.0
  %1228 = vmatprep.subr.mxu0 0.0
  %1229 = vmatpush1.msra.mxu0 0.0
  %1230 = vmatprep.subr.mxu0 0.0
  %1231 = vmatpush1.msra.mxu0 0.0
  %1232 = vmatprep.subr.mxu0 0.0
  %1233 = vmatpush1.msra.mxu0 0.0
  %1234 = vmatprep.subr.mxu0 0.0
  %1235 = vmatpush1.msra.mxu0 0.0
  %1236 = vmatprep.subr.mxu0 0.0
  %1237 = vmatpush1.msra.mxu0 0.0
  %1238 = vmatprep.subr.mxu0 0.0
  %1239 = vmatpush1.msra.mxu0 0.0
  %1240 = vmatprep.subr.mxu0 0.0
  %1241 = vmatpush1.msra.mxu0 0.0
  %1242 = vmatprep.subr.mxu0 0.0
  %1243 = vmatpush1.msra.mxu0 0.0
  %1244 = vmatprep.subr.mxu0 0.0
  %1245 = vmatpush1.msra.mxu0 0.0
  %1246 = vmatprep.subr.mxu0 0.0
  %1247 = vmatpush1.msra.mxu0 0.0
  %1248 = vmatprep.subr.mxu0 0.0
  %1249 = vmatpush1.msra.mxu0 0.0
  %1250 = vmatprep.subr.mxu0 0.0
  %1251 = vmatpush1.msra.mxu0 0.0
  %1252 = vmatprep.subr.mxu0 0.0
  %1253 = vmatpush1.msra.mxu0 0.0
  %1254 = vmatprep.subr.mxu0 0.0
  %1255 = vmatpush1.msra.mxu0 0.0
  %1256 = vmatprep.mubr.f32.mxu0 0.0
  %1257 = vmatmul.mubr.f32.gmra.mrb[0].mxu0 %v1169
  %v1258 = vpop.f32.mrb[0].mxu0
  %v1259 = vadd.f32 0.0, %v1258
  %v1260 = vpop.f32.mrb[0].mxu0
  %1261 = vmatprep.mubr.f32.mxu0 0.0
  %1262 = vmatmul.mubr.f32.gmra.mrb[0].mxu0 %v1172
  %v1263 = vpop.f32.mrb[0].mxu0
  %v1264 = vadd.f32 0.0, %v1263
  %v1265 = vpop.f32.mrb[0].mxu0
  %1266 = vmatprep.mubr.f32.mxu0 0.0
  %1267 = vmatmul.mubr.f32.gmra.mrb[0].mxu0 %v1175
  %v1268 = vpop.f32.mrb[0].mxu0
  %v1269 = vadd.f32 0.0, %v1268
  %v1270 = vpop.f32.mrb[0].mxu0
  %1271 = vmatprep.mubr.f32.mxu0 0.0
  %1272 = vmatmul.mubr.f32.gmra.mrb[0].mxu0 %v1178
  %v1273 = vpop.f32.mrb[0].mxu0
  %v1274 = vadd.f32 0.0, %v1273
  %v1275 = vpop.f32.mrb[0].mxu0
  %1276 = vmatprep.mubr.f32.mxu0 0.0
  %1277 = vmatmul.mubr.f32.gmra.mrb[0].mxu0 %v1181
  %v1278 = vpop.f32.mrb[0].mxu0
  %v1279 = vadd.f32 0.0, %v1278
  %v1280 = vpop.f32.mrb[0].mxu0
  %1281 = vmatprep.mubr.f32.mxu0 0.0
  %1282 = vmatmul.mubr.f32.gmra.mrb[0].mxu0 %v1184
  %v1283 = vpop.f32.mrb[0].mxu0
  %v1284 = vadd.f32 0.0, %v1283
  %v1285 = vpop.f32.mrb[0].mxu0
  %1286 = vmatprep.mubr.f32.mxu0 0.0
  %1287 = vmatmul.mubr.f32.gmra.mrb[0].mxu0 %v1187
  %v1288 = vpop.f32.mrb[0].mxu0
  %v1289 = vadd.f32 0.0, %v1288
  %v1290 = vpop.f32.mrb[0].mxu0
  %1291 = vmatprep.mubr.f32.mxu0 0.0
  %1292 = vmatmul.mubr.f32.gmra.mrb[0].mxu0 %v1190
  %v1293 = vpop.f32.mrb[0].mxu0
  %v1294 = vadd.f32 0.0, %v1293
  %v1295 = vpop.f32.mrb[0].mxu0
  %1296 = vdwg.mxu0
  %1297 = vst.msk [vmem:[#allocation2 + $0x40] sm:$0xff] %vm523, %v1259
  %1298 = vst.msk [vmem:[#allocation2 + $0x48] sm:$0xff] %vm523, %v1264
  %1299 = vst.msk [vmem:[#allocation2 + $0x50] sm:$0xff] %vm523, %v1269
  %1300 = vst.msk [vmem:[#allocation2 + $0x58] sm:$0xff] %vm523, %v1274
  %1301 = vst.msk [vmem:[#allocation2 + $0x60] sm:$0xff] %vm523, %v1279
  %1302 = vst.msk [vmem:[#allocation2 + $0x68] sm:$0xff] %vm523, %v1284
  %1303 = vst.msk [vmem:[#allocation2 + $0x70] sm:$0xff] %vm523, %v1289
  %1304 = vst.msk [vmem:[#allocation2 + $0x78] sm:$0xff] %vm523, %v1294
  %v1305 = vld [vmem:[%s1 + $0x140] sm:$0xff]
  %v1306 = vld [vmem:[%s1 + $0x148] sm:$0xff]
  %v1307 = vld [vmem:[%s1 + $0x150] sm:$0xff]
  %v1308 = vld [vmem:[%s1 + $0x158] sm:$0xff]
  %v1309 = vld [vmem:[%s1 + $0x160] sm:$0xff]
  %v1310 = vld [vmem:[%s1 + $0x168] sm:$0xff]
  %v1311 = vld [vmem:[%s1 + $0x170] sm:$0xff]
  %v1312 = vld [vmem:[%s1 + $0x178] sm:$0xff]
  %1313 = vrot.lane.b32.xlu0 %v38, 120
  %v1314 = vpop.permute.xlu0 %1313
  %1315 = vrot.lane.b32.xlu0 %v39, 120
  %v1316 = vpop.permute.xlu0 %1315
  %1317 = vrot.lane.b32.xlu0 %v40, 120
  %v1318 = vpop.permute.xlu0 %1317
  %1319 = vrot.lane.b32.xlu0 %v41, 120
  %v1320 = vpop.permute.xlu0 %1319
  %1321 = vrot.lane.b32.xlu0 %v42, 120
  %v1322 = vpop.permute.xlu0 %1321
  %1323 = vrot.lane.b32.xlu0 %v43, 120
  %v1324 = vpop.permute.xlu0 %1323
  %1325 = vrot.lane.b32.xlu0 %v44, 120
  %v1326 = vpop.permute.xlu0 %1325
  %1327 = vrot.lane.b32.xlu0 %v45, 120
  %v1328 = vpop.permute.xlu0 %1327
  %1329 = vrot.lane.b32.xlu0 %v437, 120
  %v1330 = vpop.permute.xlu0 %1329
  %1331 = vrot.lane.b32.xlu0 %v442, 120
  %v1332 = vpop.permute.xlu0 %1331
  %1333 = vrot.lane.b32.xlu0 %v447, 120
  %v1334 = vpop.permute.xlu0 %1333
  %1335 = vrot.lane.b32.xlu0 %v452, 120
  %v1336 = vpop.permute.xlu0 %1335
  %1337 = vrot.lane.b32.xlu0 %v457, 120
  %v1338 = vpop.permute.xlu0 %1337
  %1339 = vrot.lane.b32.xlu0 %v462, 120
  %v1340 = vpop.permute.xlu0 %1339
  %1341 = vrot.lane.b32.xlu0 %v467, 120
  %v1342 = vpop.permute.xlu0 %1341
  %1343 = vrot.lane.b32.xlu0 %v472, 120
  %v1344 = vpop.permute.xlu0 %1343
  %v1345 = vsel %vm523, %v1314, 0
  %v1347 = vsel %vm523, %v1316, 0
  %v1349 = vsel %vm523, %v1318, 0
  %v1351 = vsel %vm523, %v1320, 0
  %v1353 = vsel %vm523, %v1322, 0
  %v1355 = vsel %vm523, %v1324, 0
  %v1357 = vsel %vm523, %v1326, 0
  %v1359 = vsel %vm523, %v1328, 0
  %v1361 = vsel %vm523, %v1330, 0
  %v1363 = vsel %vm523, %v1332, 0
  %v1365 = vsel %vm523, %v1334, 0
  %v1367 = vsel %vm523, %v1336, 0
  %v1369 = vsel %vm523, %v1338, 0
  %v1371 = vsel %vm523, %v1340, 0
  %v1373 = vsel %vm523, %v1342, 0
  %v1375 = vsel %vm523, %v1344, 0
  %1377 = vmatprep.subr.mxu0 0.0
  %1378 = vmatpush1.xpose.msra.mxu0 %v1361
  %1379 = vmatprep.subr.mxu0 0.0
  %1380 = vmatpush1.xpose.msra.mxu0 %v1363
  %1381 = vmatprep.subr.mxu0 0.0
  %1382 = vmatpush1.xpose.msra.mxu0 %v1365
  %1383 = vmatprep.subr.mxu0 0.0
  %1384 = vmatpush1.xpose.msra.mxu0 %v1367
  %1385 = vmatprep.subr.mxu0 0.0
  %1386 = vmatpush1.xpose.msra.mxu0 %v1369
  %1387 = vmatprep.subr.mxu0 0.0
  %1388 = vmatpush1.xpose.msra.mxu0 %v1371
  %1389 = vmatprep.subr.mxu0 0.0
  %1390 = vmatpush1.xpose.msra.mxu0 %v1373
  %1391 = vmatprep.subr.mxu0 0.0
  %1392 = vmatpush1.xpose.msra.mxu0 %v1375
  %1393 = vmatprep.subr.mxu0 0.0
  %1394 = vmatpush1.xpose.msra.mxu0 0.0
  %1395 = vmatprep.subr.mxu0 0.0
  %1396 = vmatpush1.xpose.msra.mxu0 0.0
  %1397 = vmatprep.subr.mxu0 0.0
  %1398 = vmatpush1.xpose.msra.mxu0 0.0
  %1399 = vmatprep.subr.mxu0 0.0
  %1400 = vmatpush1.xpose.msra.mxu0 0.0
  %1401 = vmatprep.subr.mxu0 0.0
  %1402 = vmatpush1.xpose.msra.mxu0 0.0
  %1403 = vmatprep.subr.mxu0 0.0
  %1404 = vmatpush1.xpose.msra.mxu0 0.0
  %1405 = vmatprep.subr.mxu0 0.0
  %1406 = vmatpush1.xpose.msra.mxu0 0.0
  %1407 = vmatprep.subr.mxu0 0.0
  %1408 = vmatpush1.xpose.msra.mxu0 0.0
  %1409 = vmatprep.subr.mxu0 0.0
  %1410 = vmatpush1.xpose.msra.mxu0 0.0
  %1411 = vmatprep.subr.mxu0 0.0
  %1412 = vmatpush1.xpose.msra.mxu0 0.0
  %1413 = vmatprep.subr.mxu0 0.0
  %1414 = vmatpush1.xpose.msra.mxu0 0.0
  %1415 = vmatprep.subr.mxu0 0.0
  %1416 = vmatpush1.xpose.msra.mxu0 0.0
  %1417 = vmatprep.subr.mxu0 0.0
  %1418 = vmatpush1.xpose.msra.mxu0 0.0
  %1419 = vmatprep.subr.mxu0 0.0
  %1420 = vmatpush1.xpose.msra.mxu0 0.0
  %1421 = vmatprep.subr.mxu0 0.0
  %1422 = vmatpush1.xpose.msra.mxu0 0.0
  %1423 = vmatprep.subr.mxu0 0.0
  %1424 = vmatpush1.xpose.msra.mxu0 0.0
  %1425 = vmatprep.subr.mxu0 0.0
  %1426 = vmatpush1.xpose.msra.mxu0 0.0
  %1427 = vmatprep.subr.mxu0 0.0
  %1428 = vmatpush1.xpose.msra.mxu0 0.0
  %1429 = vmatprep.subr.mxu0 0.0
  %1430 = vmatpush1.xpose.msra.mxu0 0.0
  %1431 = vmatprep.subr.mxu0 0.0
  %1432 = vmatpush1.xpose.msra.mxu0 0.0
  %1433 = vmatprep.subr.mxu0 0.0
  %1434 = vmatpush1.xpose.msra.mxu0 0.0
  %1435 = vmatprep.subr.mxu0 0.0
  %1436 = vmatpush1.xpose.msra.mxu0 0.0
  %1437 = vmatprep.subr.mxu0 0.0
  %1438 = vmatpush1.xpose.msra.mxu0 0.0
  %1439 = vmatprep.subr.mxu0 0.0
  %1440 = vmatpush1.xpose.msra.mxu0 0.0
  %1441 = vmatprep.mubr.f32.mxu0 0.0
  %1442 = vmatmul.mubr.f32.gmra.mrb[0].mxu0 %v1345
  %v1443 = vpop.f32.mrb[0].mxu0
  %v1444 = vadd.f32 %v1305, %v1443
  %v1445 = vpop.f32.mrb[0].mxu0
  %1446 = vmatprep.mubr.f32.mxu0 0.0
  %1447 = vmatmul.mubr.f32.gmra.mrb[0].mxu0 %v1347
  %v1448 = vpop.f32.mrb[0].mxu0
  %v1449 = vadd.f32 %v1306, %v1448
  %v1450 = vpop.f32.mrb[0].mxu0
  %1451 = vmatprep.mubr.f32.mxu0 0.0
  %1452 = vmatmul.mubr.f32.gmra.mrb[0].mxu0 %v1349
  %v1453 = vpop.f32.mrb[0].mxu0
  %v1454 = vadd.f32 %v1307, %v1453
  %v1455 = vpop.f32.mrb[0].mxu0
  %1456 = vmatprep.mubr.f32.mxu0 0.0
  %1457 = vmatmul.mubr.f32.gmra.mrb[0].mxu0 %v1351
  %v1458 = vpop.f32.mrb[0].mxu0
  %v1459 = vadd.f32 %v1308, %v1458
  %v1460 = vpop.f32.mrb[0].mxu0
  %1461 = vmatprep.mubr.f32.mxu0 0.0
  %1462 = vmatmul.mubr.f32.gmra.mrb[0].mxu0 %v1353
  %v1463 = vpop.f32.mrb[0].mxu0
  %v1464 = vadd.f32 %v1309, %v1463
  %v1465 = vpop.f32.mrb[0].mxu0
  %1466 = vmatprep.mubr.f32.mxu0 0.0
  %1467 = vmatmul.mubr.f32.gmra.mrb[0].mxu0 %v1355
  %v1468 = vpop.f32.mrb[0].mxu0
  %v1469 = vadd.f32 %v1310, %v1468
  %v1470 = vpop.f32.mrb[0].mxu0
  %1471 = vmatprep.mubr.f32.mxu0 0.0
  %1472 = vmatmul.mubr.f32.gmra.mrb[0].mxu0 %v1357
  %v1473 = vpop.f32.mrb[0].mxu0
  %v1474 = vadd.f32 %v1311, %v1473
  %v1475 = vpop.f32.mrb[0].mxu0
  %1476 = vmatprep.mubr.f32.mxu0 0.0
  %1477 = vmatmul.mubr.f32.gmra.mrb[0].mxu0 %v1359
  %v1478 = vpop.f32.mrb[0].mxu0
  %v1479 = vadd.f32 %v1312, %v1478
  %v1480 = vpop.f32.mrb[0].mxu0
  %1481 = vdwg.mxu0
  %v1482 = vsel %vm677, %v1444, -inf
  %1483 = vmax.xlane.f32.xlu0 %v1482
  %v1484 = vpop.xlane.xlu0 %1483
  %v1485 = vsel %vm677, %v1449, -inf
  %1486 = vmax.xlane.f32.xlu0 %v1485
  %v1487 = vpop.xlane.xlu0 %1486
  %v1488 = vsel %vm677, %v1454, -inf
  %1489 = vmax.xlane.f32.xlu0 %v1488
  %v1490 = vpop.xlane.xlu0 %1489
  %v1491 = vsel %vm677, %v1459, -inf
  %1492 = vmax.xlane.f32.xlu0 %v1491
  %v1493 = vpop.xlane.xlu0 %1492
  %v1494 = vsel %vm677, %v1464, -inf
  %1495 = vmax.xlane.f32.xlu0 %v1494
  %v1496 = vpop.xlane.xlu0 %1495
  %v1497 = vsel %vm677, %v1469, -inf
  %1498 = vmax.xlane.f32.xlu0 %v1497
  %v1499 = vpop.xlane.xlu0 %1498
  %v1500 = vsel %vm677, %v1474, -inf
  %1501 = vmax.xlane.f32.xlu0 %v1500
  %v1502 = vpop.xlane.xlu0 %1501
  %v1503 = vsel %vm677, %v1479, -inf
  %1504 = vmax.xlane.f32.xlu0 %v1503
  %v1505 = vpop.xlane.xlu0 %1504
  %v1506 = vsub.f32 %v1444, %v1484
  %v1507 = vsub.f32 %v1449, %v1487
  %v1508 = vsub.f32 %v1454, %v1490
  %v1509 = vsub.f32 %v1459, %v1493
  %v1510 = vsub.f32 %v1464, %v1496
  %v1511 = vsub.f32 %v1469, %v1499
  %v1512 = vsub.f32 %v1474, %v1502
  %v1513 = vsub.f32 %v1479, %v1505
  %v1514 = vmul.f32 %v1506, 1.442695
  %v1515 = vpow.pop %v1514
  %v1516 = vmul.f32 %v1507, 1.442695
  %v1517 = vpow.pop %v1516
  %v1518 = vmul.f32 %v1508, 1.442695
  %v1519 = vpow.pop %v1518
  %v1520 = vmul.f32 %v1509, 1.442695
  %v1521 = vpow.pop %v1520
  %v1522 = vmul.f32 %v1510, 1.442695
  %v1523 = vpow.pop %v1522
  %v1524 = vmul.f32 %v1511, 1.442695
  %v1525 = vpow.pop %v1524
  %v1526 = vmul.f32 %v1512, 1.442695
  %v1527 = vpow.pop %v1526
  %v1528 = vmul.f32 %v1513, 1.442695
  %v1529 = vpow.pop %v1528
  %v1530 = vsel %vm677, %v1515, 0.0
  %1531 = vadd.xlane.f32.xlu0 %v1530
  %v1532 = vpop.xlane.xlu0 %1531
  %v1533 = vsel %vm677, %v1517, 0.0
  %1534 = vadd.xlane.f32.xlu0 %v1533
  %v1535 = vpop.xlane.xlu0 %1534
  %v1536 = vsel %vm677, %v1519, 0.0
  %1537 = vadd.xlane.f32.xlu0 %v1536
  %v1538 = vpop.xlane.xlu0 %1537
  %v1539 = vsel %vm677, %v1521, 0.0
  %1540 = vadd.xlane.f32.xlu0 %v1539
  %v1541 = vpop.xlane.xlu0 %1540
  %v1542 = vsel %vm677, %v1523, 0.0
  %1543 = vadd.xlane.f32.xlu0 %v1542
  %v1544 = vpop.xlane.xlu0 %1543
  %v1545 = vsel %vm677, %v1525, 0.0
  %1546 = vadd.xlane.f32.xlu0 %v1545
  %v1547 = vpop.xlane.xlu0 %1546
  %v1548 = vsel %vm677, %v1527, 0.0
  %1549 = vadd.xlane.f32.xlu0 %v1548
  %v1550 = vpop.xlane.xlu0 %1549
  %v1551 = vsel %vm677, %v1529, 0.0
  %1552 = vadd.xlane.f32.xlu0 %v1551
  %v1553 = vpop.xlane.xlu0 %1552
  %v1554 = vrcp.pop %v1532
  %v1555 = vrcp.pop %v1535
  %v1556 = vrcp.pop %v1538
  %v1557 = vrcp.pop %v1541
  %v1558 = vrcp.pop %v1544
  %v1559 = vrcp.pop %v1547
  %v1560 = vrcp.pop %v1550
  %v1561 = vrcp.pop %v1553
  %v1562 = vmul.f32 %v1515, %v1554
  %v1563 = vmul.f32 %v1517, %v1555
  %v1564 = vmul.f32 %v1519, %v1556
  %v1565 = vmul.f32 %v1521, %v1557
  %v1566 = vmul.f32 %v1523, %v1558
  %v1567 = vmul.f32 %v1525, %v1559
  %v1568 = vmul.f32 %v1527, %v1560
  %v1569 = vmul.f32 %v1529, %v1561
  %1570 = vrot.lane.b32.xlu0 %v437, 88
  %v1571 = vpop.permute.xlu0 %1570
  %1572 = vrot.lane.b32.xlu0 %v442, 88
  %v1573 = vpop.permute.xlu0 %1572
  %1574 = vrot.lane.b32.xlu0 %v447, 88
  %v1575 = vpop.permute.xlu0 %1574
  %1576 = vrot.lane.b32.xlu0 %v452, 88
  %v1577 = vpop.permute.xlu0 %1576
  %1578 = vrot.lane.b32.xlu0 %v457, 88
  %v1579 = vpop.permute.xlu0 %1578
  %1580 = vrot.lane.b32.xlu0 %v462, 88
  %v1581 = vpop.permute.xlu0 %1580
  %1582 = vrot.lane.b32.xlu0 %v467, 88
  %v1583 = vpop.permute.xlu0 %1582
  %1584 = vrot.lane.b32.xlu0 %v472, 88
  %v1585 = vpop.permute.xlu0 %1584
  %v1595 = vsel %vm677, %v1562, 0
  %v1598 = vsel %vm677, %v1563, 0
  %v1601 = vsel %vm677, %v1564, 0
  %v1604 = vsel %vm677, %v1565, 0
  %v1607 = vsel %vm677, %v1566, 0
  %v1610 = vsel %vm677, %v1567, 0
  %v1613 = vsel %vm677, %v1568, 0
  %v1616 = vsel %vm677, %v1569, 0
  %1618 = vmatprep.subr.mxu0 0.0
  %1619 = vmatpush1.msra.mxu0 %v1571
  %1620 = vmatprep.subr.mxu0 0.0
  %1621 = vmatpush1.msra.mxu0 %v1573
  %1622 = vmatprep.subr.mxu0 0.0
  %1623 = vmatpush1.msra.mxu0 %v1575
  %1624 = vmatprep.subr.mxu0 0.0
  %1625 = vmatpush1.msra.mxu0 %v1577
  %1626 = vmatprep.subr.mxu0 0.0
  %1627 = vmatpush1.msra.mxu0 %v1579
  %1628 = vmatprep.subr.mxu0 0.0
  %1629 = vmatpush1.msra.mxu0 %v1581
  %1630 = vmatprep.subr.mxu0 0.0
  %1631 = vmatpush1.msra.mxu0 %v1583
  %1632 = vmatprep.subr.mxu0 0.0
  %1633 = vmatpush1.msra.mxu0 %v1585
  %1634 = vmatprep.subr.mxu0 0.0
  %1635 = vmatpush1.msra.mxu0 0.0
  %1636 = vmatprep.subr.mxu0 0.0
  %1637 = vmatpush1.msra.mxu0 0.0
  %1638 = vmatprep.subr.mxu0 0.0
  %1639 = vmatpush1.msra.mxu0 0.0
  %1640 = vmatprep.subr.mxu0 0.0
  %1641 = vmatpush1.msra.mxu0 0.0
  %1642 = vmatprep.subr.mxu0 0.0
  %1643 = vmatpush1.msra.mxu0 0.0
  %1644 = vmatprep.subr.mxu0 0.0
  %1645 = vmatpush1.msra.mxu0 0.0
  %1646 = vmatprep.subr.mxu0 0.0
  %1647 = vmatpush1.msra.mxu0 0.0
  %1648 = vmatprep.subr.mxu0 0.0
  %1649 = vmatpush1.msra.mxu0 0.0
  %1650 = vmatprep.subr.mxu0 0.0
  %1651 = vmatpush1.msra.mxu0 0.0
  %1652 = vmatprep.subr.mxu0 0.0
  %1653 = vmatpush1.msra.mxu0 0.0
  %1654 = vmatprep.subr.mxu0 0.0
  %1655 = vmatpush1.msra.mxu0 0.0
  %1656 = vmatprep.subr.mxu0 0.0
  %1657 = vmatpush1.msra.mxu0 0.0
  %1658 = vmatprep.subr.mxu0 0.0
  %1659 = vmatpush1.msra.mxu0 0.0
  %1660 = vmatprep.subr.mxu0 0.0
  %1661 = vmatpush1.msra.mxu0 0.0
  %1662 = vmatprep.subr.mxu0 0.0
  %1663 = vmatpush1.msra.mxu0 0.0
  %1664 = vmatprep.subr.mxu0 0.0
  %1665 = vmatpush1.msra.mxu0 0.0
  %1666 = vmatprep.subr.mxu0 0.0
  %1667 = vmatpush1.msra.mxu0 0.0
  %1668 = vmatprep.subr.mxu0 0.0
  %1669 = vmatpush1.msra.mxu0 0.0
  %1670 = vmatprep.subr.mxu0 0.0
  %1671 = vmatpush1.msra.mxu0 0.0
  %1672 = vmatprep.subr.mxu0 0.0
  %1673 = vmatpush1.msra.mxu0 0.0
  %1674 = vmatprep.subr.mxu0 0.0
  %1675 = vmatpush1.msra.mxu0 0.0
  %1676 = vmatprep.subr.mxu0 0.0
  %1677 = vmatpush1.msra.mxu0 0.0
  %1678 = vmatprep.subr.mxu0 0.0
  %1679 = vmatpush1.msra.mxu0 0.0
  %1680 = vmatprep.subr.mxu0 0.0
  %1681 = vmatpush1.msra.mxu0 0.0
  %1682 = vmatprep.mubr.f32.mxu0 0.0
  %1683 = vmatmul.mubr.f32.gmra.mrb[0].mxu0 %v1595
  %v1684 = vpop.f32.mrb[0].mxu0
  %v1685 = vadd.f32 0.0, %v1684
  %v1686 = vpop.f32.mrb[0].mxu0
  %1687 = vmatprep.mubr.f32.mxu0 0.0
  %1688 = vmatmul.mubr.f32.gmra.mrb[0].mxu0 %v1598
  %v1689 = vpop.f32.mrb[0].mxu0
  %v1690 = vadd.f32 0.0, %v1689
  %v1691 = vpop.f32.mrb[0].mxu0
  %1692 = vmatprep.mubr.f32.mxu0 0.0
  %1693 = vmatmul.mubr.f32.gmra.mrb[0].mxu0 %v1601
  %v1694 = vpop.f32.mrb[0].mxu0
  %v1695 = vadd.f32 0.0, %v1694
  %v1696 = vpop.f32.mrb[0].mxu0
  %1697 = vmatprep.mubr.f32.mxu0 0.0
  %1698 = vmatmul.mubr.f32.gmra.mrb[0].mxu0 %v1604
  %v1699 = vpop.f32.mrb[0].mxu0
  %v1700 = vadd.f32 0.0, %v1699
  %v1701 = vpop.f32.mrb[0].mxu0
  %1702 = vmatprep.mubr.f32.mxu0 0.0
  %1703 = vmatmul.mubr.f32.gmra.mrb[0].mxu0 %v1607
  %v1704 = vpop.f32.mrb[0].mxu0
  %v1705 = vadd.f32 0.0, %v1704
  %v1706 = vpop.f32.mrb[0].mxu0
  %1707 = vmatprep.mubr.f32.mxu0 0.0
  %1708 = vmatmul.mubr.f32.gmra.mrb[0].mxu0 %v1610
  %v1709 = vpop.f32.mrb[0].mxu0
  %v1710 = vadd.f32 0.0, %v1709
  %v1711 = vpop.f32.mrb[0].mxu0
  %1712 = vmatprep.mubr.f32.mxu0 0.0
  %1713 = vmatmul.mubr.f32.gmra.mrb[0].mxu0 %v1613
  %v1714 = vpop.f32.mrb[0].mxu0
  %v1715 = vadd.f32 0.0, %v1714
  %v1716 = vpop.f32.mrb[0].mxu0
  %1717 = vmatprep.mubr.f32.mxu0 0.0
  %1718 = vmatmul.mubr.f32.gmra.mrb[0].mxu0 %v1616
  %v1719 = vpop.f32.mrb[0].mxu0
  %v1720 = vadd.f32 0.0, %v1719
  %v1721 = vpop.f32.mrb[0].mxu0
  %1722 = vdwg.mxu0
  %1731 = vrot.lane.b32.xlu0 %v1685, 8
  %v1732 = vpop.permute.xlu0 %1731
  %1733 = vrot.lane.b32.xlu0 %v1690, 8
  %v1734 = vpop.permute.xlu0 %1733
  %1735 = vrot.lane.b32.xlu0 %v1695, 8
  %v1736 = vpop.permute.xlu0 %1735
  %1737 = vrot.lane.b32.xlu0 %v1700, 8
  %v1738 = vpop.permute.xlu0 %1737
  %1739 = vrot.lane.b32.xlu0 %v1705, 8
  %v1740 = vpop.permute.xlu0 %1739
  %1741 = vrot.lane.b32.xlu0 %v1710, 8
  %v1742 = vpop.permute.xlu0 %1741
  %1743 = vrot.lane.b32.xlu0 %v1715, 8
  %v1744 = vpop.permute.xlu0 %1743
  %1745 = vrot.lane.b32.xlu0 %v1720, 8
  %v1746 = vpop.permute.xlu0 %1745
  %vm1755 = vcmask 130112
  %1756 = vst.msk [vmem:[#allocation2] sm:$0xff] %vm1755, %v1732
  %1757 = vst.msk [vmem:[#allocation2 + $0x8] sm:$0xff] %vm1755, %v1734
  %1758 = vst.msk [vmem:[#allocation2 + $0x10] sm:$0xff] %vm1755, %v1736
  %1759 = vst.msk [vmem:[#allocation2 + $0x18] sm:$0xff] %vm1755, %v1738
  %1760 = vst.msk [vmem:[#allocation2 + $0x20] sm:$0xff] %vm1755, %v1740
  %1761 = vst.msk [vmem:[#allocation2 + $0x28] sm:$0xff] %vm1755, %v1742
  %1762 = vst.msk [vmem:[#allocation2 + $0x30] sm:$0xff] %vm1755, %v1744
  %1763 = vst.msk [vmem:[#allocation2 + $0x38] sm:$0xff] %vm1755, %v1746
  %1764 = vrot.lane.b32.xlu0 %v477, 120
  %v1765 = vpop.permute.xlu0 %1764
  %1766 = vrot.lane.b32.xlu0 %v482, 120
  %v1767 = vpop.permute.xlu0 %1766
  %1768 = vrot.lane.b32.xlu0 %v487, 120
  %v1769 = vpop.permute.xlu0 %1768
  %1770 = vrot.lane.b32.xlu0 %v492, 120
  %v1771 = vpop.permute.xlu0 %1770
  %1772 = vrot.lane.b32.xlu0 %v497, 120
  %v1773 = vpop.permute.xlu0 %1772
  %1774 = vrot.lane.b32.xlu0 %v502, 120
  %v1775 = vpop.permute.xlu0 %1774
  %1776 = vrot.lane.b32.xlu0 %v507, 120
  %v1777 = vpop.permute.xlu0 %1776
  %1778 = vrot.lane.b32.xlu0 %v512, 120
  %v1779 = vpop.permute.xlu0 %1778
  %v1780 = vsel %vm523, %v1765, 0
  %v1782 = vsel %vm523, %v1767, 0
  %v1784 = vsel %vm523, %v1769, 0
  %v1786 = vsel %vm523, %v1771, 0
  %v1788 = vsel %vm523, %v1773, 0
  %v1790 = vsel %vm523, %v1775, 0
  %v1792 = vsel %vm523, %v1777, 0
  %v1794 = vsel %vm523, %v1779, 0
  %1796 = vmatprep.subr.mxu0 0.0
  %1797 = vmatpush1.xpose.msra.mxu0 %v1780
  %1798 = vmatprep.subr.mxu0 0.0
  %1799 = vmatpush1.xpose.msra.mxu0 %v1782
  %1800 = vmatprep.subr.mxu0 0.0
  %1801 = vmatpush1.xpose.msra.mxu0 %v1784
  %1802 = vmatprep.subr.mxu0 0.0
  %1803 = vmatpush1.xpose.msra.mxu0 %v1786
  %1804 = vmatprep.subr.mxu0 0.0
  %1805 = vmatpush1.xpose.msra.mxu0 %v1788
  %1806 = vmatprep.subr.mxu0 0.0
  %1807 = vmatpush1.xpose.msra.mxu0 %v1790
  %1808 = vmatprep.subr.mxu0 0.0
  %1809 = vmatpush1.xpose.msra.mxu0 %v1792
  %1810 = vmatprep.subr.mxu0 0.0
  %1811 = vmatpush1.xpose.msra.mxu0 %v1794
  %1812 = vmatprep.subr.mxu0 0.0
  %1813 = vmatpush1.xpose.msra.mxu0 0.0
  %1814 = vmatprep.subr.mxu0 0.0
  %1815 = vmatpush1.xpose.msra.mxu0 0.0
  %1816 = vmatprep.subr.mxu0 0.0
  %1817 = vmatpush1.xpose.msra.mxu0 0.0
  %1818 = vmatprep.subr.mxu0 0.0
  %1819 = vmatpush1.xpose.msra.mxu0 0.0
  %1820 = vmatprep.subr.mxu0 0.0
  %1821 = vmatpush1.xpose.msra.mxu0 0.0
  %1822 = vmatprep.subr.mxu0 0.0
  %1823 = vmatpush1.xpose.msra.mxu0 0.0
  %1824 = vmatprep.subr.mxu0 0.0
  %1825 = vmatpush1.xpose.msra.mxu0 0.0
  %1826 = vmatprep.subr.mxu0 0.0
  %1827 = vmatpush1.xpose.msra.mxu0 0.0
  %1828 = vmatprep.subr.mxu0 0.0
  %1829 = vmatpush1.xpose.msra.mxu0 0.0
  %1830 = vmatprep.subr.mxu0 0.0
  %1831 = vmatpush1.xpose.msra.mxu0 0.0
  %1832 = vmatprep.subr.mxu0 0.0
  %1833 = vmatpush1.xpose.msra.mxu0 0.0
  %1834 = vmatprep.subr.mxu0 0.0
  %1835 = vmatpush1.xpose.msra.mxu0 0.0
  %1836 = vmatprep.subr.mxu0 0.0
  %1837 = vmatpush1.xpose.msra.mxu0 0.0
  %1838 = vmatprep.subr.mxu0 0.0
  %1839 = vmatpush1.xpose.msra.mxu0 0.0
  %1840 = vmatprep.subr.mxu0 0.0
  %1841 = vmatpush1.xpose.msra.mxu0 0.0
  %1842 = vmatprep.subr.mxu0 0.0
  %1843 = vmatpush1.xpose.msra.mxu0 0.0
  %1844 = vmatprep.subr.mxu0 0.0
  %1845 = vmatpush1.xpose.msra.mxu0 0.0
  %1846 = vmatprep.subr.mxu0 0.0
  %1847 = vmatpush1.xpose.msra.mxu0 0.0
  %1848 = vmatprep.subr.mxu0 0.0
  %1849 = vmatpush1.xpose.msra.mxu0 0.0
  %1850 = vmatprep.subr.mxu0 0.0
  %1851 = vmatpush1.xpose.msra.mxu0 0.0
  %1852 = vmatprep.subr.mxu0 0.0
  %1853 = vmatpush1.xpose.msra.mxu0 0.0
  %1854 = vmatprep.subr.mxu0 0.0
  %1855 = vmatpush1.xpose.msra.mxu0 0.0
  %1856 = vmatprep.subr.mxu0 0.0
  %1857 = vmatpush1.xpose.msra.mxu0 0.0
  %1858 = vmatprep.subr.mxu0 0.0
  %1859 = vmatpush1.xpose.msra.mxu0 0.0
  %1860 = vmatprep.mubr.f32.mxu0 0.0
  %1861 = vmatmul.mubr.f32.gmra.mrb[0].mxu0 %v1345
  %v1862 = vpop.f32.mrb[0].mxu0
  %v1863 = vadd.f32 %v1305, %v1862
  %v1864 = vpop.f32.mrb[0].mxu0
  %1865 = vmatprep.mubr.f32.mxu0 0.0
  %1866 = vmatmul.mubr.f32.gmra.mrb[0].mxu0 %v1347
  %v1867 = vpop.f32.mrb[0].mxu0
  %v1868 = vadd.f32 %v1306, %v1867
  %v1869 = vpop.f32.mrb[0].mxu0
  %1870 = vmatprep.mubr.f32.mxu0 0.0
  %1871 = vmatmul.mubr.f32.gmra.mrb[0].mxu0 %v1349
  %v1872 = vpop.f32.mrb[0].mxu0
  %v1873 = vadd.f32 %v1307, %v1872
  %v1874 = vpop.f32.mrb[0].mxu0
  %1875 = vmatprep.mubr.f32.mxu0 0.0
  %1876 = vmatmul.mubr.f32.gmra.mrb[0].mxu0 %v1351
  %v1877 = vpop.f32.mrb[0].mxu0
  %v1878 = vadd.f32 %v1308, %v1877
  %v1879 = vpop.f32.mrb[0].mxu0
  %1880 = vmatprep.mubr.f32.mxu0 0.0
  %1881 = vmatmul.mubr.f32.gmra.mrb[0].mxu0 %v1353
  %v1882 = vpop.f32.mrb[0].mxu0
  %v1883 = vadd.f32 %v1309, %v1882
  %v1884 = vpop.f32.mrb[0].mxu0
  %1885 = vmatprep.mubr.f32.mxu0 0.0
  %1886 = vmatmul.mubr.f32.gmra.mrb[0].mxu0 %v1355
  %v1887 = vpop.f32.mrb[0].mxu0
  %v1888 = vadd.f32 %v1310, %v1887
  %v1889 = vpop.f32.mrb[0].mxu0
  %1890 = vmatprep.mubr.f32.mxu0 0.0
  %1891 = vmatmul.mubr.f32.gmra.mrb[0].mxu0 %v1357
  %v1892 = vpop.f32.mrb[0].mxu0
  %v1893 = vadd.f32 %v1311, %v1892
  %v1894 = vpop.f32.mrb[0].mxu0
  %1895 = vmatprep.mubr.f32.mxu0 0.0
  %1896 = vmatmul.mubr.f32.gmra.mrb[0].mxu0 %v1359
  %v1897 = vpop.f32.mrb[0].mxu0
  %v1898 = vadd.f32 %v1312, %v1897
  %v1899 = vpop.f32.mrb[0].mxu0
  %1900 = vdwg.mxu0
  %v1901 = vsel %vm677, %v1863, -inf
  %1902 = vmax.xlane.f32.xlu0 %v1901
  %v1903 = vpop.xlane.xlu0 %1902
  %v1904 = vsel %vm677, %v1868, -inf
  %1905 = vmax.xlane.f32.xlu0 %v1904
  %v1906 = vpop.xlane.xlu0 %1905
  %v1907 = vsel %vm677, %v1873, -inf
  %1908 = vmax.xlane.f32.xlu0 %v1907
  %v1909 = vpop.xlane.xlu0 %1908
  %v1910 = vsel %vm677, %v1878, -inf
  %1911 = vmax.xlane.f32.xlu0 %v1910
  %v1912 = vpop.xlane.xlu0 %1911
  %v1913 = vsel %vm677, %v1883, -inf
  %1914 = vmax.xlane.f32.xlu0 %v1913
  %v1915 = vpop.xlane.xlu0 %1914
  %v1916 = vsel %vm677, %v1888, -inf
  %1917 = vmax.xlane.f32.xlu0 %v1916
  %v1918 = vpop.xlane.xlu0 %1917
  %v1919 = vsel %vm677, %v1893, -inf
  %1920 = vmax.xlane.f32.xlu0 %v1919
  %v1921 = vpop.xlane.xlu0 %1920
  %v1922 = vsel %vm677, %v1898, -inf
  %1923 = vmax.xlane.f32.xlu0 %v1922
  %v1924 = vpop.xlane.xlu0 %1923
  %v1925 = vsub.f32 %v1863, %v1903
  %v1926 = vsub.f32 %v1868, %v1906
  %v1927 = vsub.f32 %v1873, %v1909
  %v1928 = vsub.f32 %v1878, %v1912
  %v1929 = vsub.f32 %v1883, %v1915
  %v1930 = vsub.f32 %v1888, %v1918
  %v1931 = vsub.f32 %v1893, %v1921
  %v1932 = vsub.f32 %v1898, %v1924
  %v1933 = vmul.f32 %v1925, 1.442695
  %v1934 = vpow.pop %v1933
  %v1935 = vmul.f32 %v1926, 1.442695
  %v1936 = vpow.pop %v1935
  %v1937 = vmul.f32 %v1927, 1.442695
  %v1938 = vpow.pop %v1937
  %v1939 = vmul.f32 %v1928, 1.442695
  %v1940 = vpow.pop %v1939
  %v1941 = vmul.f32 %v1929, 1.442695
  %v1942 = vpow.pop %v1941
  %v1943 = vmul.f32 %v1930, 1.442695
  %v1944 = vpow.pop %v1943
  %v1945 = vmul.f32 %v1931, 1.442695
  %v1946 = vpow.pop %v1945
  %v1947 = vmul.f32 %v1932, 1.442695
  %v1948 = vpow.pop %v1947
  %v1949 = vsel %vm677, %v1934, 0.0
  %1950 = vadd.xlane.f32.xlu0 %v1949
  %v1951 = vpop.xlane.xlu0 %1950
  %v1952 = vsel %vm677, %v1936, 0.0
  %1953 = vadd.xlane.f32.xlu0 %v1952
  %v1954 = vpop.xlane.xlu0 %1953
  %v1955 = vsel %vm677, %v1938, 0.0
  %1956 = vadd.xlane.f32.xlu0 %v1955
  %v1957 = vpop.xlane.xlu0 %1956
  %v1958 = vsel %vm677, %v1940, 0.0
  %1959 = vadd.xlane.f32.xlu0 %v1958
  %v1960 = vpop.xlane.xlu0 %1959
  %v1961 = vsel %vm677, %v1942, 0.0
  %1962 = vadd.xlane.f32.xlu0 %v1961
  %v1963 = vpop.xlane.xlu0 %1962
  %v1964 = vsel %vm677, %v1944, 0.0
  %1965 = vadd.xlane.f32.xlu0 %v1964
  %v1966 = vpop.xlane.xlu0 %1965
  %v1967 = vsel %vm677, %v1946, 0.0
  %1968 = vadd.xlane.f32.xlu0 %v1967
  %v1969 = vpop.xlane.xlu0 %1968
  %v1970 = vsel %vm677, %v1948, 0.0
  %1971 = vadd.xlane.f32.xlu0 %v1970
  %v1972 = vpop.xlane.xlu0 %1971
  %v1973 = vrcp.pop %v1951
  %v1974 = vrcp.pop %v1954
  %v1975 = vrcp.pop %v1957
  %v1976 = vrcp.pop %v1960
  %v1977 = vrcp.pop %v1963
  %v1978 = vrcp.pop %v1966
  %v1979 = vrcp.pop %v1969
  %v1980 = vrcp.pop %v1972
  %v1981 = vmul.f32 %v1934, %v1973
  %v1982 = vmul.f32 %v1936, %v1974
  %v1983 = vmul.f32 %v1938, %v1975
  %v1984 = vmul.f32 %v1940, %v1976
  %v1985 = vmul.f32 %v1942, %v1977
  %v1986 = vmul.f32 %v1944, %v1978
  %v1987 = vmul.f32 %v1946, %v1979
  %v1988 = vmul.f32 %v1948, %v1980
  %1989 = vrot.lane.b32.xlu0 %v477, 88
  %v1990 = vpop.permute.xlu0 %1989
  %1991 = vrot.lane.b32.xlu0 %v482, 88
  %v1992 = vpop.permute.xlu0 %1991
  %1993 = vrot.lane.b32.xlu0 %v487, 88
  %v1994 = vpop.permute.xlu0 %1993
  %1995 = vrot.lane.b32.xlu0 %v492, 88
  %v1996 = vpop.permute.xlu0 %1995
  %1997 = vrot.lane.b32.xlu0 %v497, 88
  %v1998 = vpop.permute.xlu0 %1997
  %1999 = vrot.lane.b32.xlu0 %v502, 88
  %v2000 = vpop.permute.xlu0 %1999
  %2001 = vrot.lane.b32.xlu0 %v507, 88
  %v2002 = vpop.permute.xlu0 %2001
  %2003 = vrot.lane.b32.xlu0 %v512, 88
  %v2004 = vpop.permute.xlu0 %2003
  %v2014 = vsel %vm677, %v1981, 0
  %v2017 = vsel %vm677, %v1982, 0
  %v2020 = vsel %vm677, %v1983, 0
  %v2023 = vsel %vm677, %v1984, 0
  %v2026 = vsel %vm677, %v1985, 0
  %v2029 = vsel %vm677, %v1986, 0
  %v2032 = vsel %vm677, %v1987, 0
  %v2035 = vsel %vm677, %v1988, 0
  %2037 = vmatprep.subr.mxu0 0.0
  %2038 = vmatpush1.msra.mxu0 %v1990
  %2039 = vmatprep.subr.mxu0 0.0
  %2040 = vmatpush1.msra.mxu0 %v1992
  %2041 = vmatprep.subr.mxu0 0.0
  %2042 = vmatpush1.msra.mxu0 %v1994
  %2043 = vmatprep.subr.mxu0 0.0
  %2044 = vmatpush1.msra.mxu0 %v1996
  %2045 = vmatprep.subr.mxu0 0.0
  %2046 = vmatpush1.msra.mxu0 %v1998
  %2047 = vmatprep.subr.mxu0 0.0
  %2048 = vmatpush1.msra.mxu0 %v2000
  %2049 = vmatprep.subr.mxu0 0.0
  %2050 = vmatpush1.msra.mxu0 %v2002
  %2051 = vmatprep.subr.mxu0 0.0
  %2052 = vmatpush1.msra.mxu0 %v2004
  %2053 = vmatprep.subr.mxu0 0.0
  %2054 = vmatpush1.msra.mxu0 0.0
  %2055 = vmatprep.subr.mxu0 0.0
  %2056 = vmatpush1.msra.mxu0 0.0
  %2057 = vmatprep.subr.mxu0 0.0
  %2058 = vmatpush1.msra.mxu0 0.0
  %2059 = vmatprep.subr.mxu0 0.0
  %2060 = vmatpush1.msra.mxu0 0.0
  %2061 = vmatprep.subr.mxu0 0.0
  %2062 = vmatpush1.msra.mxu0 0.0
  %2063 = vmatprep.subr.mxu0 0.0
  %2064 = vmatpush1.msra.mxu0 0.0
  %2065 = vmatprep.subr.mxu0 0.0
  %2066 = vmatpush1.msra.mxu0 0.0
  %2067 = vmatprep.subr.mxu0 0.0
  %2068 = vmatpush1.msra.mxu0 0.0
  %2069 = vmatprep.subr.mxu0 0.0
  %2070 = vmatpush1.msra.mxu0 0.0
  %2071 = vmatprep.subr.mxu0 0.0
  %2072 = vmatpush1.msra.mxu0 0.0
  %2073 = vmatprep.subr.mxu0 0.0
  %2074 = vmatpush1.msra.mxu0 0.0
  %2075 = vmatprep.subr.mxu0 0.0
  %2076 = vmatpush1.msra.mxu0 0.0
  %2077 = vmatprep.subr.mxu0 0.0
  %2078 = vmatpush1.msra.mxu0 0.0
  %2079 = vmatprep.subr.mxu0 0.0
  %2080 = vmatpush1.msra.mxu0 0.0
  %2081 = vmatprep.subr.mxu0 0.0
  %2082 = vmatpush1.msra.mxu0 0.0
  %2083 = vmatprep.subr.mxu0 0.0
  %2084 = vmatpush1.msra.mxu0 0.0
  %2085 = vmatprep.subr.mxu0 0.0
  %2086 = vmatpush1.msra.mxu0 0.0
  %2087 = vmatprep.subr.mxu0 0.0
  %2088 = vmatpush1.msra.mxu0 0.0
  %2089 = vmatprep.subr.mxu0 0.0
  %2090 = vmatpush1.msra.mxu0 0.0
  %2091 = vmatprep.subr.mxu0 0.0
  %2092 = vmatpush1.msra.mxu0 0.0
  %2093 = vmatprep.subr.mxu0 0.0
  %2094 = vmatpush1.msra.mxu0 0.0
  %2095 = vmatprep.subr.mxu0 0.0
  %2096 = vmatpush1.msra.mxu0 0.0
  %2097 = vmatprep.subr.mxu0 0.0
  %2098 = vmatpush1.msra.mxu0 0.0
  %2099 = vmatprep.subr.mxu0 0.0
  %2100 = vmatpush1.msra.mxu0 0.0
  %2101 = vmatprep.mubr.f32.mxu0 0.0
  %2102 = vmatmul.mubr.f32.gmra.mrb[0].mxu0 %v2014
  %v2103 = vpop.f32.mrb[0].mxu0
  %v2104 = vadd.f32 0.0, %v2103
  %v2105 = vpop.f32.mrb[0].mxu0
  %2106 = vmatprep.mubr.f32.mxu0 0.0
  %2107 = vmatmul.mubr.f32.gmra.mrb[0].mxu0 %v2017
  %v2108 = vpop.f32.mrb[0].mxu0
  %v2109 = vadd.f32 0.0, %v2108
  %v2110 = vpop.f32.mrb[0].mxu0
  %2111 = vmatprep.mubr.f32.mxu0 0.0
  %2112 = vmatmul.mubr.f32.gmra.mrb[0].mxu0 %v2020
  %v2113 = vpop.f32.mrb[0].mxu0
  %v2114 = vadd.f32 0.0, %v2113
  %v2115 = vpop.f32.mrb[0].mxu0
  %2116 = vmatprep.mubr.f32.mxu0 0.0
  %2117 = vmatmul.mubr.f32.gmra.mrb[0].mxu0 %v2023
  %v2118 = vpop.f32.mrb[0].mxu0
  %v2119 = vadd.f32 0.0, %v2118
  %v2120 = vpop.f32.mrb[0].mxu0
  %2121 = vmatprep.mubr.f32.mxu0 0.0
  %2122 = vmatmul.mubr.f32.gmra.mrb[0].mxu0 %v2026
  %v2123 = vpop.f32.mrb[0].mxu0
  %v2124 = vadd.f32 0.0, %v2123
  %v2125 = vpop.f32.mrb[0].mxu0
  %2126 = vmatprep.mubr.f32.mxu0 0.0
  %2127 = vmatmul.mubr.f32.gmra.mrb[0].mxu0 %v2029
  %v2128 = vpop.f32.mrb[0].mxu0
  %v2129 = vadd.f32 0.0, %v2128
  %v2130 = vpop.f32.mrb[0].mxu0
  %2131 = vmatprep.mubr.f32.mxu0 0.0
  %2132 = vmatmul.mubr.f32.gmra.mrb[0].mxu0 %v2032
  %v2133 = vpop.f32.mrb[0].mxu0
  %v2134 = vadd.f32 0.0, %v2133
  %v2135 = vpop.f32.mrb[0].mxu0
  %2136 = vmatprep.mubr.f32.mxu0 0.0
  %2137 = vmatmul.mubr.f32.gmra.mrb[0].mxu0 %v2035
  %v2138 = vpop.f32.mrb[0].mxu0
  %v2139 = vadd.f32 0.0, %v2138
  %v2140 = vpop.f32.mrb[0].mxu0
  %2141 = vdwg.mxu0
  %2150 = vrot.lane.b32.xlu0 %v2104, 8
  %v2151 = vpop.permute.xlu0 %2150
  %2152 = vrot.lane.b32.xlu0 %v2109, 8
  %v2153 = vpop.permute.xlu0 %2152
  %2154 = vrot.lane.b32.xlu0 %v2114, 8
  %v2155 = vpop.permute.xlu0 %2154
  %2156 = vrot.lane.b32.xlu0 %v2119, 8
  %v2157 = vpop.permute.xlu0 %2156
  %2158 = vrot.lane.b32.xlu0 %v2124, 8
  %v2159 = vpop.permute.xlu0 %2158
  %2160 = vrot.lane.b32.xlu0 %v2129, 8
  %v2161 = vpop.permute.xlu0 %2160
  %2162 = vrot.lane.b32.xlu0 %v2134, 8
  %v2163 = vpop.permute.xlu0 %2162
  %2164 = vrot.lane.b32.xlu0 %v2139, 8
  %v2165 = vpop.permute.xlu0 %2164
  %2174 = vst.msk [vmem:[#allocation2 + $0x40] sm:$0xff] %vm1755, %v2151
  %2175 = vst.msk [vmem:[#allocation2 + $0x48] sm:$0xff] %vm1755, %v2153
  %2176 = vst.msk [vmem:[#allocation2 + $0x50] sm:$0xff] %vm1755, %v2155
  %2177 = vst.msk [vmem:[#allocation2 + $0x58] sm:$0xff] %vm1755, %v2157
  %2178 = vst.msk [vmem:[#allocation2 + $0x60] sm:$0xff] %vm1755, %v2159
  %2179 = vst.msk [vmem:[#allocation2 + $0x68] sm:$0xff] %vm1755, %v2161
  %2180 = vst.msk [vmem:[#allocation2 + $0x70] sm:$0xff] %vm1755, %v2163
  %2181 = vst.msk [vmem:[#allocation2 + $0x78] sm:$0xff] %vm1755, %v2165
  %v2182 = vld [vmem:[%s1 + $0x180] sm:$0xff]
  %v2183 = vld [vmem:[%s1 + $0x188] sm:$0xff]
  %v2184 = vld [vmem:[%s1 + $0x190] sm:$0xff]
  %v2185 = vld [vmem:[%s1 + $0x198] sm:$0xff]
  %v2186 = vld [vmem:[%s1 + $0x1a0] sm:$0xff]
  %v2187 = vld [vmem:[%s1 + $0x1a8] sm:$0xff]
  %v2188 = vld [vmem:[%s1 + $0x1b0] sm:$0xff]
  %v2189 = vld [vmem:[%s1 + $0x1b8] sm:$0xff]
  %2190 = vrot.lane.b32.xlu0 %v38, 112
  %v2191 = vpop.permute.xlu0 %2190
  %2192 = vrot.lane.b32.xlu0 %v39, 112
  %v2193 = vpop.permute.xlu0 %2192
  %2194 = vrot.lane.b32.xlu0 %v40, 112
  %v2195 = vpop.permute.xlu0 %2194
  %2196 = vrot.lane.b32.xlu0 %v41, 112
  %v2197 = vpop.permute.xlu0 %2196
  %2198 = vrot.lane.b32.xlu0 %v42, 112
  %v2199 = vpop.permute.xlu0 %2198
  %2200 = vrot.lane.b32.xlu0 %v43, 112
  %v2201 = vpop.permute.xlu0 %2200
  %2202 = vrot.lane.b32.xlu0 %v44, 112
  %v2203 = vpop.permute.xlu0 %2202
  %2204 = vrot.lane.b32.xlu0 %v45, 112
  %v2205 = vpop.permute.xlu0 %2204
  %2206 = vrot.lane.b32.xlu0 %v437, 112
  %v2207 = vpop.permute.xlu0 %2206
  %2208 = vrot.lane.b32.xlu0 %v442, 112
  %v2209 = vpop.permute.xlu0 %2208
  %2210 = vrot.lane.b32.xlu0 %v447, 112
  %v2211 = vpop.permute.xlu0 %2210
  %2212 = vrot.lane.b32.xlu0 %v452, 112
  %v2213 = vpop.permute.xlu0 %2212
  %2214 = vrot.lane.b32.xlu0 %v457, 112
  %v2215 = vpop.permute.xlu0 %2214
  %2216 = vrot.lane.b32.xlu0 %v462, 112
  %v2217 = vpop.permute.xlu0 %2216
  %2218 = vrot.lane.b32.xlu0 %v467, 112
  %v2219 = vpop.permute.xlu0 %2218
  %2220 = vrot.lane.b32.xlu0 %v472, 112
  %v2221 = vpop.permute.xlu0 %2220
  %v2222 = vsel %vm523, %v2191, 0
  %v2224 = vsel %vm523, %v2193, 0
  %v2226 = vsel %vm523, %v2195, 0
  %v2228 = vsel %vm523, %v2197, 0
  %v2230 = vsel %vm523, %v2199, 0
  %v2232 = vsel %vm523, %v2201, 0
  %v2234 = vsel %vm523, %v2203, 0
  %v2236 = vsel %vm523, %v2205, 0
  %v2238 = vsel %vm523, %v2207, 0
  %v2240 = vsel %vm523, %v2209, 0
  %v2242 = vsel %vm523, %v2211, 0
  %v2244 = vsel %vm523, %v2213, 0
  %v2246 = vsel %vm523, %v2215, 0
  %v2248 = vsel %vm523, %v2217, 0
  %v2250 = vsel %vm523, %v2219, 0
  %v2252 = vsel %vm523, %v2221, 0
  %2254 = vmatprep.subr.mxu0 0.0
  %2255 = vmatpush1.xpose.msra.mxu0 %v2238
  %2256 = vmatprep.subr.mxu0 0.0
  %2257 = vmatpush1.xpose.msra.mxu0 %v2240
  %2258 = vmatprep.subr.mxu0 0.0
  %2259 = vmatpush1.xpose.msra.mxu0 %v2242
  %2260 = vmatprep.subr.mxu0 0.0
  %2261 = vmatpush1.xpose.msra.mxu0 %v2244
  %2262 = vmatprep.subr.mxu0 0.0
  %2263 = vmatpush1.xpose.msra.mxu0 %v2246
  %2264 = vmatprep.subr.mxu0 0.0
  %2265 = vmatpush1.xpose.msra.mxu0 %v2248
  %2266 = vmatprep.subr.mxu0 0.0
  %2267 = vmatpush1.xpose.msra.mxu0 %v2250
  %2268 = vmatprep.subr.mxu0 0.0
  %2269 = vmatpush1.xpose.msra.mxu0 %v2252
  %2270 = vmatprep.subr.mxu0 0.0
  %2271 = vmatpush1.xpose.msra.mxu0 0.0
  %2272 = vmatprep.subr.mxu0 0.0
  %2273 = vmatpush1.xpose.msra.mxu0 0.0
  %2274 = vmatprep.subr.mxu0 0.0
  %2275 = vmatpush1.xpose.msra.mxu0 0.0
  %2276 = vmatprep.subr.mxu0 0.0
  %2277 = vmatpush1.xpose.msra.mxu0 0.0
  %2278 = vmatprep.subr.mxu0 0.0
  %2279 = vmatpush1.xpose.msra.mxu0 0.0
  %2280 = vmatprep.subr.mxu0 0.0
  %2281 = vmatpush1.xpose.msra.mxu0 0.0
  %2282 = vmatprep.subr.mxu0 0.0
  %2283 = vmatpush1.xpose.msra.mxu0 0.0
  %2284 = vmatprep.subr.mxu0 0.0
  %2285 = vmatpush1.xpose.msra.mxu0 0.0
  %2286 = vmatprep.subr.mxu0 0.0
  %2287 = vmatpush1.xpose.msra.mxu0 0.0
  %2288 = vmatprep.subr.mxu0 0.0
  %2289 = vmatpush1.xpose.msra.mxu0 0.0
  %2290 = vmatprep.subr.mxu0 0.0
  %2291 = vmatpush1.xpose.msra.mxu0 0.0
  %2292 = vmatprep.subr.mxu0 0.0
  %2293 = vmatpush1.xpose.msra.mxu0 0.0
  %2294 = vmatprep.subr.mxu0 0.0
  %2295 = vmatpush1.xpose.msra.mxu0 0.0
  %2296 = vmatprep.subr.mxu0 0.0
  %2297 = vmatpush1.xpose.msra.mxu0 0.0
  %2298 = vmatprep.subr.mxu0 0.0
  %2299 = vmatpush1.xpose.msra.mxu0 0.0
  %2300 = vmatprep.subr.mxu0 0.0
  %2301 = vmatpush1.xpose.msra.mxu0 0.0
  %2302 = vmatprep.subr.mxu0 0.0
  %2303 = vmatpush1.xpose.msra.mxu0 0.0
  %2304 = vmatprep.subr.mxu0 0.0
  %2305 = vmatpush1.xpose.msra.mxu0 0.0
  %2306 = vmatprep.subr.mxu0 0.0
  %2307 = vmatpush1.xpose.msra.mxu0 0.0
  %2308 = vmatprep.subr.mxu0 0.0
  %2309 = vmatpush1.xpose.msra.mxu0 0.0
  %2310 = vmatprep.subr.mxu0 0.0
  %2311 = vmatpush1.xpose.msra.mxu0 0.0
  %2312 = vmatprep.subr.mxu0 0.0
  %2313 = vmatpush1.xpose.msra.mxu0 0.0
  %2314 = vmatprep.subr.mxu0 0.0
  %2315 = vmatpush1.xpose.msra.mxu0 0.0
  %2316 = vmatprep.subr.mxu0 0.0
  %2317 = vmatpush1.xpose.msra.mxu0 0.0
  %2318 = vmatprep.mubr.f32.mxu0 0.0
  %2319 = vmatmul.mubr.f32.gmra.mrb[0].mxu0 %v2222
  %v2320 = vpop.f32.mrb[0].mxu0
  %v2321 = vadd.f32 %v2182, %v2320
  %v2322 = vpop.f32.mrb[0].mxu0
  %2323 = vmatprep.mubr.f32.mxu0 0.0
  %2324 = vmatmul.mubr.f32.gmra.mrb[0].mxu0 %v2224
  %v2325 = vpop.f32.mrb[0].mxu0
  %v2326 = vadd.f32 %v2183, %v2325
  %v2327 = vpop.f32.mrb[0].mxu0
  %2328 = vmatprep.mubr.f32.mxu0 0.0
  %2329 = vmatmul.mubr.f32.gmra.mrb[0].mxu0 %v2226
  %v2330 = vpop.f32.mrb[0].mxu0
  %v2331 = vadd.f32 %v2184, %v2330
  %v2332 = vpop.f32.mrb[0].mxu0
  %2333 = vmatprep.mubr.f32.mxu0 0.0
  %2334 = vmatmul.mubr.f32.gmra.mrb[0].mxu0 %v2228
  %v2335 = vpop.f32.mrb[0].mxu0
  %v2336 = vadd.f32 %v2185, %v2335
  %v2337 = vpop.f32.mrb[0].mxu0
  %2338 = vmatprep.mubr.f32.mxu0 0.0
  %2339 = vmatmul.mubr.f32.gmra.mrb[0].mxu0 %v2230
  %v2340 = vpop.f32.mrb[0].mxu0
  %v2341 = vadd.f32 %v2186, %v2340
  %v2342 = vpop.f32.mrb[0].mxu0
  %2343 = vmatprep.mubr.f32.mxu0 0.0
  %2344 = vmatmul.mubr.f32.gmra.mrb[0].mxu0 %v2232
  %v2345 = vpop.f32.mrb[0].mxu0
  %v2346 = vadd.f32 %v2187, %v2345
  %v2347 = vpop.f32.mrb[0].mxu0
  %2348 = vmatprep.mubr.f32.mxu0 0.0
  %2349 = vmatmul.mubr.f32.gmra.mrb[0].mxu0 %v2234
  %v2350 = vpop.f32.mrb[0].mxu0
  %v2351 = vadd.f32 %v2188, %v2350
  %v2352 = vpop.f32.mrb[0].mxu0
  %2353 = vmatprep.mubr.f32.mxu0 0.0
  %2354 = vmatmul.mubr.f32.gmra.mrb[0].mxu0 %v2236
  %v2355 = vpop.f32.mrb[0].mxu0
  %v2356 = vadd.f32 %v2189, %v2355
  %v2357 = vpop.f32.mrb[0].mxu0
  %2358 = vdwg.mxu0
  %v2359 = vsel %vm677, %v2321, -inf
  %2360 = vmax.xlane.f32.xlu0 %v2359
  %v2361 = vpop.xlane.xlu0 %2360
  %v2362 = vsel %vm677, %v2326, -inf
  %2363 = vmax.xlane.f32.xlu0 %v2362
  %v2364 = vpop.xlane.xlu0 %2363
  %v2365 = vsel %vm677, %v2331, -inf
  %2366 = vmax.xlane.f32.xlu0 %v2365
  %v2367 = vpop.xlane.xlu0 %2366
  %v2368 = vsel %vm677, %v2336, -inf
  %2369 = vmax.xlane.f32.xlu0 %v2368
  %v2370 = vpop.xlane.xlu0 %2369
  %v2371 = vsel %vm677, %v2341, -inf
  %2372 = vmax.xlane.f32.xlu0 %v2371
  %v2373 = vpop.xlane.xlu0 %2372
  %v2374 = vsel %vm677, %v2346, -inf
  %2375 = vmax.xlane.f32.xlu0 %v2374
  %v2376 = vpop.xlane.xlu0 %2375
  %v2377 = vsel %vm677, %v2351, -inf
  %2378 = vmax.xlane.f32.xlu0 %v2377
  %v2379 = vpop.xlane.xlu0 %2378
  %v2380 = vsel %vm677, %v2356, -inf
  %2381 = vmax.xlane.f32.xlu0 %v2380
  %v2382 = vpop.xlane.xlu0 %2381
  %v2383 = vsub.f32 %v2321, %v2361
  %v2384 = vsub.f32 %v2326, %v2364
  %v2385 = vsub.f32 %v2331, %v2367
  %v2386 = vsub.f32 %v2336, %v2370
  %v2387 = vsub.f32 %v2341, %v2373
  %v2388 = vsub.f32 %v2346, %v2376
  %v2389 = vsub.f32 %v2351, %v2379
  %v2390 = vsub.f32 %v2356, %v2382
  %v2391 = vmul.f32 %v2383, 1.442695
  %v2392 = vpow.pop %v2391
  %v2393 = vmul.f32 %v2384, 1.442695
  %v2394 = vpow.pop %v2393
  %v2395 = vmul.f32 %v2385, 1.442695
  %v2396 = vpow.pop %v2395
  %v2397 = vmul.f32 %v2386, 1.442695
  %v2398 = vpow.pop %v2397
  %v2399 = vmul.f32 %v2387, 1.442695
  %v2400 = vpow.pop %v2399
  %v2401 = vmul.f32 %v2388, 1.442695
  %v2402 = vpow.pop %v2401
  %v2403 = vmul.f32 %v2389, 1.442695
  %v2404 = vpow.pop %v2403
  %v2405 = vmul.f32 %v2390, 1.442695
  %v2406 = vpow.pop %v2405
  %v2407 = vsel %vm677, %v2392, 0.0
  %2408 = vadd.xlane.f32.xlu0 %v2407
  %v2409 = vpop.xlane.xlu0 %2408
  %v2410 = vsel %vm677, %v2394, 0.0
  %2411 = vadd.xlane.f32.xlu0 %v2410
  %v2412 = vpop.xlane.xlu0 %2411
  %v2413 = vsel %vm677, %v2396, 0.0
  %2414 = vadd.xlane.f32.xlu0 %v2413
  %v2415 = vpop.xlane.xlu0 %2414
  %v2416 = vsel %vm677, %v2398, 0.0
  %2417 = vadd.xlane.f32.xlu0 %v2416
  %v2418 = vpop.xlane.xlu0 %2417
  %v2419 = vsel %vm677, %v2400, 0.0
  %2420 = vadd.xlane.f32.xlu0 %v2419
  %v2421 = vpop.xlane.xlu0 %2420
  %v2422 = vsel %vm677, %v2402, 0.0
  %2423 = vadd.xlane.f32.xlu0 %v2422
  %v2424 = vpop.xlane.xlu0 %2423
  %v2425 = vsel %vm677, %v2404, 0.0
  %2426 = vadd.xlane.f32.xlu0 %v2425
  %v2427 = vpop.xlane.xlu0 %2426
  %v2428 = vsel %vm677, %v2406, 0.0
  %2429 = vadd.xlane.f32.xlu0 %v2428
  %v2430 = vpop.xlane.xlu0 %2429
  %v2431 = vrcp.pop %v2409
  %v2432 = vrcp.pop %v2412
  %v2433 = vrcp.pop %v2415
  %v2434 = vrcp.pop %v2418
  %v2435 = vrcp.pop %v2421
  %v2436 = vrcp.pop %v2424
  %v2437 = vrcp.pop %v2427
  %v2438 = vrcp.pop %v2430
  %v2439 = vmul.f32 %v2392, %v2431
  %v2440 = vmul.f32 %v2394, %v2432
  %v2441 = vmul.f32 %v2396, %v2433
  %v2442 = vmul.f32 %v2398, %v2434
  %v2443 = vmul.f32 %v2400, %v2435
  %v2444 = vmul.f32 %v2402, %v2436
  %v2445 = vmul.f32 %v2404, %v2437
  %v2446 = vmul.f32 %v2406, %v2438
  %2447 = vrot.lane.b32.xlu0 %v437, 80
  %v2448 = vpop.permute.xlu0 %2447
  %2449 = vrot.lane.b32.xlu0 %v442, 80
  %v2450 = vpop.permute.xlu0 %2449
  %2451 = vrot.lane.b32.xlu0 %v447, 80
  %v2452 = vpop.permute.xlu0 %2451
  %2453 = vrot.lane.b32.xlu0 %v452, 80
  %v2454 = vpop.permute.xlu0 %2453
  %2455 = vrot.lane.b32.xlu0 %v457, 80
  %v2456 = vpop.permute.xlu0 %2455
  %2457 = vrot.lane.b32.xlu0 %v462, 80
  %v2458 = vpop.permute.xlu0 %2457
  %2459 = vrot.lane.b32.xlu0 %v467, 80
  %v2460 = vpop.permute.xlu0 %2459
  %2461 = vrot.lane.b32.xlu0 %v472, 80
  %v2462 = vpop.permute.xlu0 %2461
  %v2472 = vsel %vm677, %v2439, 0
  %v2475 = vsel %vm677, %v2440, 0
  %v2478 = vsel %vm677, %v2441, 0
  %v2481 = vsel %vm677, %v2442, 0
  %v2484 = vsel %vm677, %v2443, 0
  %v2487 = vsel %vm677, %v2444, 0
  %v2490 = vsel %vm677, %v2445, 0
  %v2493 = vsel %vm677, %v2446, 0
  %2495 = vmatprep.subr.mxu0 0.0
  %2496 = vmatpush1.msra.mxu0 %v2448
  %2497 = vmatprep.subr.mxu0 0.0
  %2498 = vmatpush1.msra.mxu0 %v2450
  %2499 = vmatprep.subr.mxu0 0.0
  %2500 = vmatpush1.msra.mxu0 %v2452
  %2501 = vmatprep.subr.mxu0 0.0
  %2502 = vmatpush1.msra.mxu0 %v2454
  %2503 = vmatprep.subr.mxu0 0.0
  %2504 = vmatpush1.msra.mxu0 %v2456
  %2505 = vmatprep.subr.mxu0 0.0
  %2506 = vmatpush1.msra.mxu0 %v2458
  %2507 = vmatprep.subr.mxu0 0.0
  %2508 = vmatpush1.msra.mxu0 %v2460
  %2509 = vmatprep.subr.mxu0 0.0
  %2510 = vmatpush1.msra.mxu0 %v2462
  %2511 = vmatprep.subr.mxu0 0.0
  %2512 = vmatpush1.msra.mxu0 0.0
  %2513 = vmatprep.subr.mxu0 0.0
  %2514 = vmatpush1.msra.mxu0 0.0
  %2515 = vmatprep.subr.mxu0 0.0
  %2516 = vmatpush1.msra.mxu0 0.0
  %2517 = vmatprep.subr.mxu0 0.0
  %2518 = vmatpush1.msra.mxu0 0.0
  %2519 = vmatprep.subr.mxu0 0.0
  %2520 = vmatpush1.msra.mxu0 0.0
  %2521 = vmatprep.subr.mxu0 0.0
  %2522 = vmatpush1.msra.mxu0 0.0
  %2523 = vmatprep.subr.mxu0 0.0
  %2524 = vmatpush1.msra.mxu0 0.0
  %2525 = vmatprep.subr.mxu0 0.0
  %2526 = vmatpush1.msra.mxu0 0.0
  %2527 = vmatprep.subr.mxu0 0.0
  %2528 = vmatpush1.msra.mxu0 0.0
  %2529 = vmatprep.subr.mxu0 0.0
  %2530 = vmatpush1.msra.mxu0 0.0
  %2531 = vmatprep.subr.mxu0 0.0
  %2532 = vmatpush1.msra.mxu0 0.0
  %2533 = vmatprep.subr.mxu0 0.0
  %2534 = vmatpush1.msra.mxu0 0.0
  %2535 = vmatprep.subr.mxu0 0.0
  %2536 = vmatpush1.msra.mxu0 0.0
  %2537 = vmatprep.subr.mxu0 0.0
  %2538 = vmatpush1.msra.mxu0 0.0
  %2539 = vmatprep.subr.mxu0 0.0
  %2540 = vmatpush1.msra.mxu0 0.0
  %2541 = vmatprep.subr.mxu0 0.0
  %2542 = vmatpush1.msra.mxu0 0.0
  %2543 = vmatprep.subr.mxu0 0.0
  %2544 = vmatpush1.msra.mxu0 0.0
  %2545 = vmatprep.subr.mxu0 0.0
  %2546 = vmatpush1.msra.mxu0 0.0
  %2547 = vmatprep.subr.mxu0 0.0
  %2548 = vmatpush1.msra.mxu0 0.0
  %2549 = vmatprep.subr.mxu0 0.0
  %2550 = vmatpush1.msra.mxu0 0.0
  %2551 = vmatprep.subr.mxu0 0.0
  %2552 = vmatpush1.msra.mxu0 0.0
  %2553 = vmatprep.subr.mxu0 0.0
  %2554 = vmatpush1.msra.mxu0 0.0
  %2555 = vmatprep.subr.mxu0 0.0
  %2556 = vmatpush1.msra.mxu0 0.0
  %2557 = vmatprep.subr.mxu0 0.0
  %2558 = vmatpush1.msra.mxu0 0.0
  %2559 = vmatprep.mubr.f32.mxu0 0.0
  %2560 = vmatmul.mubr.f32.gmra.mrb[0].mxu0 %v2472
  %v2561 = vpop.f32.mrb[0].mxu0
  %v2562 = vadd.f32 0.0, %v2561
  %v2563 = vpop.f32.mrb[0].mxu0
  %2564 = vmatprep.mubr.f32.mxu0 0.0
  %2565 = vmatmul.mubr.f32.gmra.mrb[0].mxu0 %v2475
  %v2566 = vpop.f32.mrb[0].mxu0
  %v2567 = vadd.f32 0.0, %v2566
  %v2568 = vpop.f32.mrb[0].mxu0
  %2569 = vmatprep.mubr.f32.mxu0 0.0
  %2570 = vmatmul.mubr.f32.gmra.mrb[0].mxu0 %v2478
  %v2571 = vpop.f32.mrb[0].mxu0
  %v2572 = vadd.f32 0.0, %v2571
  %v2573 = vpop.f32.mrb[0].mxu0
  %2574 = vmatprep.mubr.f32.mxu0 0.0
  %2575 = vmatmul.mubr.f32.gmra.mrb[0].mxu0 %v2481
  %v2576 = vpop.f32.mrb[0].mxu0
  %v2577 = vadd.f32 0.0, %v2576
  %v2578 = vpop.f32.mrb[0].mxu0
  %2579 = vmatprep.mubr.f32.mxu0 0.0
  %2580 = vmatmul.mubr.f32.gmra.mrb[0].mxu0 %v2484
  %v2581 = vpop.f32.mrb[0].mxu0
  %v2582 = vadd.f32 0.0, %v2581
  %v2583 = vpop.f32.mrb[0].mxu0
  %2584 = vmatprep.mubr.f32.mxu0 0.0
  %2585 = vmatmul.mubr.f32.gmra.mrb[0].mxu0 %v2487
  %v2586 = vpop.f32.mrb[0].mxu0
  %v2587 = vadd.f32 0.0, %v2586
  %v2588 = vpop.f32.mrb[0].mxu0
  %2589 = vmatprep.mubr.f32.mxu0 0.0
  %2590 = vmatmul.mubr.f32.gmra.mrb[0].mxu0 %v2490
  %v2591 = vpop.f32.mrb[0].mxu0
  %v2592 = vadd.f32 0.0, %v2591
  %v2593 = vpop.f32.mrb[0].mxu0
  %2594 = vmatprep.mubr.f32.mxu0 0.0
  %2595 = vmatmul.mubr.f32.gmra.mrb[0].mxu0 %v2493
  %v2596 = vpop.f32.mrb[0].mxu0
  %v2597 = vadd.f32 0.0, %v2596
  %v2598 = vpop.f32.mrb[0].mxu0
  %2599 = vdwg.mxu0
  %2608 = vrot.lane.b32.xlu0 %v2562, 16
  %v2609 = vpop.permute.xlu0 %2608
  %2610 = vrot.lane.b32.xlu0 %v2567, 16
  %v2611 = vpop.permute.xlu0 %2610
  %2612 = vrot.lane.b32.xlu0 %v2572, 16
  %v2613 = vpop.permute.xlu0 %2612
  %2614 = vrot.lane.b32.xlu0 %v2577, 16
  %v2615 = vpop.permute.xlu0 %2614
  %2616 = vrot.lane.b32.xlu0 %v2582, 16
  %v2617 = vpop.permute.xlu0 %2616
  %2618 = vrot.lane.b32.xlu0 %v2587, 16
  %v2619 = vpop.permute.xlu0 %2618
  %2620 = vrot.lane.b32.xlu0 %v2592, 16
  %v2621 = vpop.permute.xlu0 %2620
  %2622 = vrot.lane.b32.xlu0 %v2597, 16
  %v2623 = vpop.permute.xlu0 %2622
  %vm2632 = vcmask 195712
  %2633 = vst.msk [vmem:[#allocation2] sm:$0xff] %vm2632, %v2609
  %2634 = vst.msk [vmem:[#allocation2 + $0x8] sm:$0xff] %vm2632, %v2611
  %2635 = vst.msk [vmem:[#allocation2 + $0x10] sm:$0xff] %vm2632, %v2613
  %2636 = vst.msk [vmem:[#allocation2 + $0x18] sm:$0xff] %vm2632, %v2615
  %2637 = vst.msk [vmem:[#allocation2 + $0x20] sm:$0xff] %vm2632, %v2617
  %2638 = vst.msk [vmem:[#allocation2 + $0x28] sm:$0xff] %vm2632, %v2619
  %2639 = vst.msk [vmem:[#allocation2 + $0x30] sm:$0xff] %vm2632, %v2621
  %2640 = vst.msk [vmem:[#allocation2 + $0x38] sm:$0xff] %vm2632, %v2623
  %2641 = vrot.lane.b32.xlu0 %v477, 112
  %v2642 = vpop.permute.xlu0 %2641
  %2643 = vrot.lane.b32.xlu0 %v482, 112
  %v2644 = vpop.permute.xlu0 %2643
  %2645 = vrot.lane.b32.xlu0 %v487, 112
  %v2646 = vpop.permute.xlu0 %2645
  %2647 = vrot.lane.b32.xlu0 %v492, 112
  %v2648 = vpop.permute.xlu0 %2647
  %2649 = vrot.lane.b32.xlu0 %v497, 112
  %v2650 = vpop.permute.xlu0 %2649
  %2651 = vrot.lane.b32.xlu0 %v502, 112
  %v2652 = vpop.permute.xlu0 %2651
  %2653 = vrot.lane.b32.xlu0 %v507, 112
  %v2654 = vpop.permute.xlu0 %2653
  %2655 = vrot.lane.b32.xlu0 %v512, 112
  %v2656 = vpop.permute.xlu0 %2655
  %v2657 = vsel %vm523, %v2642, 0
  %v2659 = vsel %vm523, %v2644, 0
  %v2661 = vsel %vm523, %v2646, 0
  %v2663 = vsel %vm523, %v2648, 0
  %v2665 = vsel %vm523, %v2650, 0
  %v2667 = vsel %vm523, %v2652, 0
  %v2669 = vsel %vm523, %v2654, 0
  %v2671 = vsel %vm523, %v2656, 0
  %2673 = vmatprep.subr.mxu0 0.0
  %2674 = vmatpush1.xpose.msra.mxu0 %v2657
  %2675 = vmatprep.subr.mxu0 0.0
  %2676 = vmatpush1.xpose.msra.mxu0 %v2659
  %2677 = vmatprep.subr.mxu0 0.0
  %2678 = vmatpush1.xpose.msra.mxu0 %v2661
  %2679 = vmatprep.subr.mxu0 0.0
  %2680 = vmatpush1.xpose.msra.mxu0 %v2663
  %2681 = vmatprep.subr.mxu0 0.0
  %2682 = vmatpush1.xpose.msra.mxu0 %v2665
  %2683 = vmatprep.subr.mxu0 0.0
  %2684 = vmatpush1.xpose.msra.mxu0 %v2667
  %2685 = vmatprep.subr.mxu0 0.0
  %2686 = vmatpush1.xpose.msra.mxu0 %v2669
  %2687 = vmatprep.subr.mxu0 0.0
  %2688 = vmatpush1.xpose.msra.mxu0 %v2671
  %2689 = vmatprep.subr.mxu0 0.0
  %2690 = vmatpush1.xpose.msra.mxu0 0.0
  %2691 = vmatprep.subr.mxu0 0.0
  %2692 = vmatpush1.xpose.msra.mxu0 0.0
  %2693 = vmatprep.subr.mxu0 0.0
  %2694 = vmatpush1.xpose.msra.mxu0 0.0
  %2695 = vmatprep.subr.mxu0 0.0
  %2696 = vmatpush1.xpose.msra.mxu0 0.0
  %2697 = vmatprep.subr.mxu0 0.0
  %2698 = vmatpush1.xpose.msra.mxu0 0.0
  %2699 = vmatprep.subr.mxu0 0.0
  %2700 = vmatpush1.xpose.msra.mxu0 0.0
  %2701 = vmatprep.subr.mxu0 0.0
  %2702 = vmatpush1.xpose.msra.mxu0 0.0
  %2703 = vmatprep.subr.mxu0 0.0
  %2704 = vmatpush1.xpose.msra.mxu0 0.0
  %2705 = vmatprep.subr.mxu0 0.0
  %2706 = vmatpush1.xpose.msra.mxu0 0.0
  %2707 = vmatprep.subr.mxu0 0.0
  %2708 = vmatpush1.xpose.msra.mxu0 0.0
  %2709 = vmatprep.subr.mxu0 0.0
  %2710 = vmatpush1.xpose.msra.mxu0 0.0
  %2711 = vmatprep.subr.mxu0 0.0
  %2712 = vmatpush1.xpose.msra.mxu0 0.0
  %2713 = vmatprep.subr.mxu0 0.0
  %2714 = vmatpush1.xpose.msra.mxu0 0.0
  %2715 = vmatprep.subr.mxu0 0.0
  %2716 = vmatpush1.xpose.msra.mxu0 0.0
  %2717 = vmatprep.subr.mxu0 0.0
  %2718 = vmatpush1.xpose.msra.mxu0 0.0
  %2719 = vmatprep.subr.mxu0 0.0
  %2720 = vmatpush1.xpose.msra.mxu0 0.0
  %2721 = vmatprep.subr.mxu0 0.0
  %2722 = vmatpush1.xpose.msra.mxu0 0.0
  %2723 = vmatprep.subr.mxu0 0.0
  %2724 = vmatpush1.xpose.msra.mxu0 0.0
  %2725 = vmatprep.subr.mxu0 0.0
  %2726 = vmatpush1.xpose.msra.mxu0 0.0
  %2727 = vmatprep.subr.mxu0 0.0
  %2728 = vmatpush1.xpose.msra.mxu0 0.0
  %2729 = vmatprep.subr.mxu0 0.0
  %2730 = vmatpush1.xpose.msra.mxu0 0.0
  %2731 = vmatprep.subr.mxu0 0.0
  %2732 = vmatpush1.xpose.msra.mxu0 0.0
  %2733 = vmatprep.subr.mxu0 0.0
  %2734 = vmatpush1.xpose.msra.mxu0 0.0
  %2735 = vmatprep.subr.mxu0 0.0
  %2736 = vmatpush1.xpose.msra.mxu0 0.0
  %2737 = vmatprep.mubr.f32.mxu0 0.0
  %2738 = vmatmul.mubr.f32.gmra.mrb[0].mxu0 %v2222
  %v2739 = vpop.f32.mrb[0].mxu0
  %v2740 = vadd.f32 %v2182, %v2739
  %v2741 = vpop.f32.mrb[0].mxu0
  %2742 = vmatprep.mubr.f32.mxu0 0.0
  %2743 = vmatmul.mubr.f32.gmra.mrb[0].mxu0 %v2224
  %v2744 = vpop.f32.mrb[0].mxu0
  %v2745 = vadd.f32 %v2183, %v2744
  %v2746 = vpop.f32.mrb[0].mxu0
  %2747 = vmatprep.mubr.f32.mxu0 0.0
  %2748 = vmatmul.mubr.f32.gmra.mrb[0].mxu0 %v2226
  %v2749 = vpop.f32.mrb[0].mxu0
  %v2750 = vadd.f32 %v2184, %v2749
  %v2751 = vpop.f32.mrb[0].mxu0
  %2752 = vmatprep.mubr.f32.mxu0 0.0
  %2753 = vmatmul.mubr.f32.gmra.mrb[0].mxu0 %v2228
  %v2754 = vpop.f32.mrb[0].mxu0
  %v2755 = vadd.f32 %v2185, %v2754
  %v2756 = vpop.f32.mrb[0].mxu0
  %2757 = vmatprep.mubr.f32.mxu0 0.0
  %2758 = vmatmul.mubr.f32.gmra.mrb[0].mxu0 %v2230
  %v2759 = vpop.f32.mrb[0].mxu0
  %v2760 = vadd.f32 %v2186, %v2759
  %v2761 = vpop.f32.mrb[0].mxu0
  %2762 = vmatprep.mubr.f32.mxu0 0.0
  %2763 = vmatmul.mubr.f32.gmra.mrb[0].mxu0 %v2232
  %v2764 = vpop.f32.mrb[0].mxu0
  %v2765 = vadd.f32 %v2187, %v2764
  %v2766 = vpop.f32.mrb[0].mxu0
  %2767 = vmatprep.mubr.f32.mxu0 0.0
  %2768 = vmatmul.mubr.f32.gmra.mrb[0].mxu0 %v2234
  %v2769 = vpop.f32.mrb[0].mxu0
  %v2770 = vadd.f32 %v2188, %v2769
  %v2771 = vpop.f32.mrb[0].mxu0
  %2772 = vmatprep.mubr.f32.mxu0 0.0
  %2773 = vmatmul.mubr.f32.gmra.mrb[0].mxu0 %v2236
  %v2774 = vpop.f32.mrb[0].mxu0
  %v2775 = vadd.f32 %v2189, %v2774
  %v2776 = vpop.f32.mrb[0].mxu0
  %2777 = vdwg.mxu0
  %v2778 = vsel %vm677, %v2740, -inf
  %2779 = vmax.xlane.f32.xlu0 %v2778
  %v2780 = vpop.xlane.xlu0 %2779
  %v2781 = vsel %vm677, %v2745, -inf
  %2782 = vmax.xlane.f32.xlu0 %v2781
  %v2783 = vpop.xlane.xlu0 %2782
  %v2784 = vsel %vm677, %v2750, -inf
  %2785 = vmax.xlane.f32.xlu0 %v2784
  %v2786 = vpop.xlane.xlu0 %2785
  %v2787 = vsel %vm677, %v2755, -inf
  %2788 = vmax.xlane.f32.xlu0 %v2787
  %v2789 = vpop.xlane.xlu0 %2788
  %v2790 = vsel %vm677, %v2760, -inf
  %2791 = vmax.xlane.f32.xlu0 %v2790
  %v2792 = vpop.xlane.xlu0 %2791
  %v2793 = vsel %vm677, %v2765, -inf
  %2794 = vmax.xlane.f32.xlu0 %v2793
  %v2795 = vpop.xlane.xlu0 %2794
  %v2796 = vsel %vm677, %v2770, -inf
  %2797 = vmax.xlane.f32.xlu0 %v2796
  %v2798 = vpop.xlane.xlu0 %2797
  %v2799 = vsel %vm677, %v2775, -inf
  %2800 = vmax.xlane.f32.xlu0 %v2799
  %v2801 = vpop.xlane.xlu0 %2800
  %v2802 = vsub.f32 %v2740, %v2780
  %v2803 = vsub.f32 %v2745, %v2783
  %v2804 = vsub.f32 %v2750, %v2786
  %v2805 = vsub.f32 %v2755, %v2789
  %v2806 = vsub.f32 %v2760, %v2792
  %v2807 = vsub.f32 %v2765, %v2795
  %v2808 = vsub.f32 %v2770, %v2798
  %v2809 = vsub.f32 %v2775, %v2801
  %v2810 = vmul.f32 %v2802, 1.442695
  %v2811 = vpow.pop %v2810
  %v2812 = vmul.f32 %v2803, 1.442695
  %v2813 = vpow.pop %v2812
  %v2814 = vmul.f32 %v2804, 1.442695
  %v2815 = vpow.pop %v2814
  %v2816 = vmul.f32 %v2805, 1.442695
  %v2817 = vpow.pop %v2816
  %v2818 = vmul.f32 %v2806, 1.442695
  %v2819 = vpow.pop %v2818
  %v2820 = vmul.f32 %v2807, 1.442695
  %v2821 = vpow.pop %v2820
  %v2822 = vmul.f32 %v2808, 1.442695
  %v2823 = vpow.pop %v2822
  %v2824 = vmul.f32 %v2809, 1.442695
  %v2825 = vpow.pop %v2824
  %v2826 = vsel %vm677, %v2811, 0.0
  %2827 = vadd.xlane.f32.xlu0 %v2826
  %v2828 = vpop.xlane.xlu0 %2827
  %v2829 = vsel %vm677, %v2813, 0.0
  %2830 = vadd.xlane.f32.xlu0 %v2829
  %v2831 = vpop.xlane.xlu0 %2830
  %v2832 = vsel %vm677, %v2815, 0.0
  %2833 = vadd.xlane.f32.xlu0 %v2832
  %v2834 = vpop.xlane.xlu0 %2833
  %v2835 = vsel %vm677, %v2817, 0.0
  %2836 = vadd.xlane.f32.xlu0 %v2835
  %v2837 = vpop.xlane.xlu0 %2836
  %v2838 = vsel %vm677, %v2819, 0.0
  %2839 = vadd.xlane.f32.xlu0 %v2838
  %v2840 = vpop.xlane.xlu0 %2839
  %v2841 = vsel %vm677, %v2821, 0.0
  %2842 = vadd.xlane.f32.xlu0 %v2841
  %v2843 = vpop.xlane.xlu0 %2842
  %v2844 = vsel %vm677, %v2823, 0.0
  %2845 = vadd.xlane.f32.xlu0 %v2844
  %v2846 = vpop.xlane.xlu0 %2845
  %v2847 = vsel %vm677, %v2825, 0.0
  %2848 = vadd.xlane.f32.xlu0 %v2847
  %v2849 = vpop.xlane.xlu0 %2848
  %v2850 = vrcp.pop %v2828
  %v2851 = vrcp.pop %v2831
  %v2852 = vrcp.pop %v2834
  %v2853 = vrcp.pop %v2837
  %v2854 = vrcp.pop %v2840
  %v2855 = vrcp.pop %v2843
  %v2856 = vrcp.pop %v2846
  %v2857 = vrcp.pop %v2849
  %v2858 = vmul.f32 %v2811, %v2850
  %v2859 = vmul.f32 %v2813, %v2851
  %v2860 = vmul.f32 %v2815, %v2852
  %v2861 = vmul.f32 %v2817, %v2853
  %v2862 = vmul.f32 %v2819, %v2854
  %v2863 = vmul.f32 %v2821, %v2855
  %v2864 = vmul.f32 %v2823, %v2856
  %v2865 = vmul.f32 %v2825, %v2857
  %2866 = vrot.lane.b32.xlu0 %v477, 80
  %v2867 = vpop.permute.xlu0 %2866
  %2868 = vrot.lane.b32.xlu0 %v482, 80
  %v2869 = vpop.permute.xlu0 %2868
  %2870 = vrot.lane.b32.xlu0 %v487, 80
  %v2871 = vpop.permute.xlu0 %2870
  %2872 = vrot.lane.b32.xlu0 %v492, 80
  %v2873 = vpop.permute.xlu0 %2872
  %2874 = vrot.lane.b32.xlu0 %v497, 80
  %v2875 = vpop.permute.xlu0 %2874
  %2876 = vrot.lane.b32.xlu0 %v502, 80
  %v2877 = vpop.permute.xlu0 %2876
  %2878 = vrot.lane.b32.xlu0 %v507, 80
  %v2879 = vpop.permute.xlu0 %2878
  %2880 = vrot.lane.b32.xlu0 %v512, 80
  %v2881 = vpop.permute.xlu0 %2880
  %v2891 = vsel %vm677, %v2858, 0
  %v2894 = vsel %vm677, %v2859, 0
  %v2897 = vsel %vm677, %v2860, 0
  %v2900 = vsel %vm677, %v2861, 0
  %v2903 = vsel %vm677, %v2862, 0
  %v2906 = vsel %vm677, %v2863, 0
  %v2909 = vsel %vm677, %v2864, 0
  %v2912 = vsel %vm677, %v2865, 0
  %2914 = vmatprep.subr.mxu0 0.0
  %2915 = vmatpush1.msra.mxu0 %v2867
  %2916 = vmatprep.subr.mxu0 0.0
  %2917 = vmatpush1.msra.mxu0 %v2869
  %2918 = vmatprep.subr.mxu0 0.0
  %2919 = vmatpush1.msra.mxu0 %v2871
  %2920 = vmatprep.subr.mxu0 0.0
  %2921 = vmatpush1.msra.mxu0 %v2873
  %2922 = vmatprep.subr.mxu0 0.0
  %2923 = vmatpush1.msra.mxu0 %v2875
  %2924 = vmatprep.subr.mxu0 0.0
  %2925 = vmatpush1.msra.mxu0 %v2877
  %2926 = vmatprep.subr.mxu0 0.0
  %2927 = vmatpush1.msra.mxu0 %v2879
  %2928 = vmatprep.subr.mxu0 0.0
  %2929 = vmatpush1.msra.mxu0 %v2881
  %2930 = vmatprep.subr.mxu0 0.0
  %2931 = vmatpush1.msra.mxu0 0.0
  %2932 = vmatprep.subr.mxu0 0.0
  %2933 = vmatpush1.msra.mxu0 0.0
  %2934 = vmatprep.subr.mxu0 0.0
  %2935 = vmatpush1.msra.mxu0 0.0
  %2936 = vmatprep.subr.mxu0 0.0
  %2937 = vmatpush1.msra.mxu0 0.0
  %2938 = vmatprep.subr.mxu0 0.0
  %2939 = vmatpush1.msra.mxu0 0.0
  %2940 = vmatprep.subr.mxu0 0.0
  %2941 = vmatpush1.msra.mxu0 0.0
  %2942 = vmatprep.subr.mxu0 0.0
  %2943 = vmatpush1.msra.mxu0 0.0
  %2944 = vmatprep.subr.mxu0 0.0
  %2945 = vmatpush1.msra.mxu0 0.0
  %2946 = vmatprep.subr.mxu0 0.0
  %2947 = vmatpush1.msra.mxu0 0.0
  %2948 = vmatprep.subr.mxu0 0.0
  %2949 = vmatpush1.msra.mxu0 0.0
  %2950 = vmatprep.subr.mxu0 0.0
  %2951 = vmatpush1.msra.mxu0 0.0
  %2952 = vmatprep.subr.mxu0 0.0
  %2953 = vmatpush1.msra.mxu0 0.0
  %2954 = vmatprep.subr.mxu0 0.0
  %2955 = vmatpush1.msra.mxu0 0.0
  %2956 = vmatprep.subr.mxu0 0.0
  %2957 = vmatpush1.msra.mxu0 0.0
  %2958 = vmatprep.subr.mxu0 0.0
  %2959 = vmatpush1.msra.mxu0 0.0
  %2960 = vmatprep.subr.mxu0 0.0
  %2961 = vmatpush1.msra.mxu0 0.0
  %2962 = vmatprep.subr.mxu0 0.0
  %2963 = vmatpush1.msra.mxu0 0.0
  %2964 = vmatprep.subr.mxu0 0.0
  %2965 = vmatpush1.msra.mxu0 0.0
  %2966 = vmatprep.subr.mxu0 0.0
  %2967 = vmatpush1.msra.mxu0 0.0
  %2968 = vmatprep.subr.mxu0 0.0
  %2969 = vmatpush1.msra.mxu0 0.0
  %2970 = vmatprep.subr.mxu0 0.0
  %2971 = vmatpush1.msra.mxu0 0.0
  %2972 = vmatprep.subr.mxu0 0.0
  %2973 = vmatpush1.msra.mxu0 0.0
  %2974 = vmatprep.subr.mxu0 0.0
  %2975 = vmatpush1.msra.mxu0 0.0
  %2976 = vmatprep.subr.mxu0 0.0
  %2977 = vmatpush1.msra.mxu0 0.0
  %2978 = vmatprep.mubr.f32.mxu0 0.0
  %2979 = vmatmul.mubr.f32.gmra.mrb[0].mxu0 %v2891
  %v2980 = vpop.f32.mrb[0].mxu0
  %v2981 = vadd.f32 0.0, %v2980
  %v2982 = vpop.f32.mrb[0].mxu0
  %2983 = vmatprep.mubr.f32.mxu0 0.0
  %2984 = vmatmul.mubr.f32.gmra.mrb[0].mxu0 %v2894
  %v2985 = vpop.f32.mrb[0].mxu0
  %v2986 = vadd.f32 0.0, %v2985
  %v2987 = vpop.f32.mrb[0].mxu0
  %2988 = vmatprep.mubr.f32.mxu0 0.0
  %2989 = vmatmul.mubr.f32.gmra.mrb[0].mxu0 %v2897
  %v2990 = vpop.f32.mrb[0].mxu0
  %v2991 = vadd.f32 0.0, %v2990
  %v2992 = vpop.f32.mrb[0].mxu0
  %2993 = vmatprep.mubr.f32.mxu0 0.0
  %2994 = vmatmul.mubr.f32.gmra.mrb[0].mxu0 %v2900
  %v2995 = vpop.f32.mrb[0].mxu0
  %v2996 = vadd.f32 0.0, %v2995
  %v2997 = vpop.f32.mrb[0].mxu0
  %2998 = vmatprep.mubr.f32.mxu0 0.0
  %2999 = vmatmul.mubr.f32.gmra.mrb[0].mxu0 %v2903
  %v3000 = vpop.f32.mrb[0].mxu0
  %v3001 = vadd.f32 0.0, %v3000
  %v3002 = vpop.f32.mrb[0].mxu0
  %3003 = vmatprep.mubr.f32.mxu0 0.0
  %3004 = vmatmul.mubr.f32.gmra.mrb[0].mxu0 %v2906
  %v3005 = vpop.f32.mrb[0].mxu0
  %v3006 = vadd.f32 0.0, %v3005
  %v3007 = vpop.f32.mrb[0].mxu0
  %3008 = vmatprep.mubr.f32.mxu0 0.0
  %3009 = vmatmul.mubr.f32.gmra.mrb[0].mxu0 %v2909
  %v3010 = vpop.f32.mrb[0].mxu0
  %v3011 = vadd.f32 0.0, %v3010
  %v3012 = vpop.f32.mrb[0].mxu0
  %3013 = vmatprep.mubr.f32.mxu0 0.0
  %3014 = vmatmul.mubr.f32.gmra.mrb[0].mxu0 %v2912
  %v3015 = vpop.f32.mrb[0].mxu0
  %v3016 = vadd.f32 0.0, %v3015
  %v3017 = vpop.f32.mrb[0].mxu0
  %3018 = vdwg.mxu0
  %3027 = vrot.lane.b32.xlu0 %v2981, 16
  %v3028 = vpop.permute.xlu0 %3027
  %3029 = vrot.lane.b32.xlu0 %v2986, 16
  %v3030 = vpop.permute.xlu0 %3029
  %3031 = vrot.lane.b32.xlu0 %v2991, 16
  %v3032 = vpop.permute.xlu0 %3031
  %3033 = vrot.lane.b32.xlu0 %v2996, 16
  %v3034 = vpop.permute.xlu0 %3033
  %3035 = vrot.lane.b32.xlu0 %v3001, 16
  %v3036 = vpop.permute.xlu0 %3035
  %3037 = vrot.lane.b32.xlu0 %v3006, 16
  %v3038 = vpop.permute.xlu0 %3037
  %3039 = vrot.lane.b32.xlu0 %v3011, 16
  %v3040 = vpop.permute.xlu0 %3039
  %3041 = vrot.lane.b32.xlu0 %v3016, 16
  %v3042 = vpop.permute.xlu0 %3041
  %3051 = vst.msk [vmem:[#allocation2 + $0x40] sm:$0xff] %vm2632, %v3028
  %3052 = vst.msk [vmem:[#allocation2 + $0x48] sm:$0xff] %vm2632, %v3030
  %3053 = vst.msk [vmem:[#allocation2 + $0x50] sm:$0xff] %vm2632, %v3032
  %3054 = vst.msk [vmem:[#allocation2 + $0x58] sm:$0xff] %vm2632, %v3034
  %3055 = vst.msk [vmem:[#allocation2 + $0x60] sm:$0xff] %vm2632, %v3036
  %3056 = vst.msk [vmem:[#allocation2 + $0x68] sm:$0xff] %vm2632, %v3038
  %3057 = vst.msk [vmem:[#allocation2 + $0x70] sm:$0xff] %vm2632, %v3040
  %3058 = vst.msk [vmem:[#allocation2 + $0x78] sm:$0xff] %vm2632, %v3042
  %v3059 = vld [vmem:[%s1 + $0x1c0] sm:$0xff]
  %v3060 = vld [vmem:[%s1 + $0x1c8] sm:$0xff]
  %v3061 = vld [vmem:[%s1 + $0x1d0] sm:$0xff]
  %v3062 = vld [vmem:[%s1 + $0x1d8] sm:$0xff]
  %v3063 = vld [vmem:[%s1 + $0x1e0] sm:$0xff]
  %v3064 = vld [vmem:[%s1 + $0x1e8] sm:$0xff]
  %v3065 = vld [vmem:[%s1 + $0x1f0] sm:$0xff]
  %v3066 = vld [vmem:[%s1 + $0x1f8] sm:$0xff]
  %3067 = vrot.lane.b32.xlu0 %v38, 104
  %v3068 = vpop.permute.xlu0 %3067
  %3069 = vrot.lane.b32.xlu0 %v39, 104
  %v3070 = vpop.permute.xlu0 %3069
  %3071 = vrot.lane.b32.xlu0 %v40, 104
  %v3072 = vpop.permute.xlu0 %3071
  %3073 = vrot.lane.b32.xlu0 %v41, 104
  %v3074 = vpop.permute.xlu0 %3073
  %3075 = vrot.lane.b32.xlu0 %v42, 104
  %v3076 = vpop.permute.xlu0 %3075
  %3077 = vrot.lane.b32.xlu0 %v43, 104
  %v3078 = vpop.permute.xlu0 %3077
  %3079 = vrot.lane.b32.xlu0 %v44, 104
  %v3080 = vpop.permute.xlu0 %3079
  %3081 = vrot.lane.b32.xlu0 %v45, 104
  %v3082 = vpop.permute.xlu0 %3081
  %3083 = vrot.lane.b32.xlu0 %v437, 104
  %v3084 = vpop.permute.xlu0 %3083
  %3085 = vrot.lane.b32.xlu0 %v442, 104
  %v3086 = vpop.permute.xlu0 %3085
  %3087 = vrot.lane.b32.xlu0 %v447, 104
  %v3088 = vpop.permute.xlu0 %3087
  %3089 = vrot.lane.b32.xlu0 %v452, 104
  %v3090 = vpop.permute.xlu0 %3089
  %3091 = vrot.lane.b32.xlu0 %v457, 104
  %v3092 = vpop.permute.xlu0 %3091
  %3093 = vrot.lane.b32.xlu0 %v462, 104
  %v3094 = vpop.permute.xlu0 %3093
  %3095 = vrot.lane.b32.xlu0 %v467, 104
  %v3096 = vpop.permute.xlu0 %3095
  %3097 = vrot.lane.b32.xlu0 %v472, 104
  %v3098 = vpop.permute.xlu0 %3097
  %v3099 = vsel %vm523, %v3068, 0
  %v3101 = vsel %vm523, %v3070, 0
  %v3103 = vsel %vm523, %v3072, 0
  %v3105 = vsel %vm523, %v3074, 0
  %v3107 = vsel %vm523, %v3076, 0
  %v3109 = vsel %vm523, %v3078, 0
  %v3111 = vsel %vm523, %v3080, 0
  %v3113 = vsel %vm523, %v3082, 0
  %v3115 = vsel %vm523, %v3084, 0
  %v3117 = vsel %vm523, %v3086, 0
  %v3119 = vsel %vm523, %v3088, 0
  %v3121 = vsel %vm523, %v3090, 0
  %v3123 = vsel %vm523, %v3092, 0
  %v3125 = vsel %vm523, %v3094, 0
  %v3127 = vsel %vm523, %v3096, 0
  %v3129 = vsel %vm523, %v3098, 0
  %3131 = vmatprep.subr.mxu0 0.0
  %3132 = vmatpush1.xpose.msra.mxu0 %v3115
  %3133 = vmatprep.subr.mxu0 0.0
  %3134 = vmatpush1.xpose.msra.mxu0 %v3117
  %3135 = vmatprep.subr.mxu0 0.0
  %3136 = vmatpush1.xpose.msra.mxu0 %v3119
  %3137 = vmatprep.subr.mxu0 0.0
  %3138 = vmatpush1.xpose.msra.mxu0 %v3121
  %3139 = vmatprep.subr.mxu0 0.0
  %3140 = vmatpush1.xpose.msra.mxu0 %v3123
  %3141 = vmatprep.subr.mxu0 0.0
  %3142 = vmatpush1.xpose.msra.mxu0 %v3125
  %3143 = vmatprep.subr.mxu0 0.0
  %3144 = vmatpush1.xpose.msra.mxu0 %v3127
  %3145 = vmatprep.subr.mxu0 0.0
  %3146 = vmatpush1.xpose.msra.mxu0 %v3129
  %3147 = vmatprep.subr.mxu0 0.0
  %3148 = vmatpush1.xpose.msra.mxu0 0.0
  %3149 = vmatprep.subr.mxu0 0.0
  %3150 = vmatpush1.xpose.msra.mxu0 0.0
  %3151 = vmatprep.subr.mxu0 0.0
  %3152 = vmatpush1.xpose.msra.mxu0 0.0
  %3153 = vmatprep.subr.mxu0 0.0
  %3154 = vmatpush1.xpose.msra.mxu0 0.0
  %3155 = vmatprep.subr.mxu0 0.0
  %3156 = vmatpush1.xpose.msra.mxu0 0.0
  %3157 = vmatprep.subr.mxu0 0.0
  %3158 = vmatpush1.xpose.msra.mxu0 0.0
  %3159 = vmatprep.subr.mxu0 0.0
  %3160 = vmatpush1.xpose.msra.mxu0 0.0
  %3161 = vmatprep.subr.mxu0 0.0
  %3162 = vmatpush1.xpose.msra.mxu0 0.0
  %3163 = vmatprep.subr.mxu0 0.0
  %3164 = vmatpush1.xpose.msra.mxu0 0.0
  %3165 = vmatprep.subr.mxu0 0.0
  %3166 = vmatpush1.xpose.msra.mxu0 0.0
  %3167 = vmatprep.subr.mxu0 0.0
  %3168 = vmatpush1.xpose.msra.mxu0 0.0
  %3169 = vmatprep.subr.mxu0 0.0
  %3170 = vmatpush1.xpose.msra.mxu0 0.0
  %3171 = vmatprep.subr.mxu0 0.0
  %3172 = vmatpush1.xpose.msra.mxu0 0.0
  %3173 = vmatprep.subr.mxu0 0.0
  %3174 = vmatpush1.xpose.msra.mxu0 0.0
  %3175 = vmatprep.subr.mxu0 0.0
  %3176 = vmatpush1.xpose.msra.mxu0 0.0
  %3177 = vmatprep.subr.mxu0 0.0
  %3178 = vmatpush1.xpose.msra.mxu0 0.0
  %3179 = vmatprep.subr.mxu0 0.0
  %3180 = vmatpush1.xpose.msra.mxu0 0.0
  %3181 = vmatprep.subr.mxu0 0.0
  %3182 = vmatpush1.xpose.msra.mxu0 0.0
  %3183 = vmatprep.subr.mxu0 0.0
  %3184 = vmatpush1.xpose.msra.mxu0 0.0
  %3185 = vmatprep.subr.mxu0 0.0
  %3186 = vmatpush1.xpose.msra.mxu0 0.0
  %3187 = vmatprep.subr.mxu0 0.0
  %3188 = vmatpush1.xpose.msra.mxu0 0.0
  %3189 = vmatprep.subr.mxu0 0.0
  %3190 = vmatpush1.xpose.msra.mxu0 0.0
  %3191 = vmatprep.subr.mxu0 0.0
  %3192 = vmatpush1.xpose.msra.mxu0 0.0
  %3193 = vmatprep.subr.mxu0 0.0
  %3194 = vmatpush1.xpose.msra.mxu0 0.0
  %3195 = vmatprep.mubr.f32.mxu0 0.0
  %3196 = vmatmul.mubr.f32.gmra.mrb[0].mxu0 %v3099
  %v3197 = vpop.f32.mrb[0].mxu0
  %v3198 = vadd.f32 %v3059, %v3197
  %v3199 = vpop.f32.mrb[0].mxu0
  %3200 = vmatprep.mubr.f32.mxu0 0.0
  %3201 = vmatmul.mubr.f32.gmra.mrb[0].mxu0 %v3101
  %v3202 = vpop.f32.mrb[0].mxu0
  %v3203 = vadd.f32 %v3060, %v3202
  %v3204 = vpop.f32.mrb[0].mxu0
  %3205 = vmatprep.mubr.f32.mxu0 0.0
  %3206 = vmatmul.mubr.f32.gmra.mrb[0].mxu0 %v3103
  %v3207 = vpop.f32.mrb[0].mxu0
  %v3208 = vadd.f32 %v3061, %v3207
  %v3209 = vpop.f32.mrb[0].mxu0
  %3210 = vmatprep.mubr.f32.mxu0 0.0
  %3211 = vmatmul.mubr.f32.gmra.mrb[0].mxu0 %v3105
  %v3212 = vpop.f32.mrb[0].mxu0
  %v3213 = vadd.f32 %v3062, %v3212
  %v3214 = vpop.f32.mrb[0].mxu0
  %3215 = vmatprep.mubr.f32.mxu0 0.0
  %3216 = vmatmul.mubr.f32.gmra.mrb[0].mxu0 %v3107
  %v3217 = vpop.f32.mrb[0].mxu0
  %v3218 = vadd.f32 %v3063, %v3217
  %v3219 = vpop.f32.mrb[0].mxu0
  %3220 = vmatprep.mubr.f32.mxu0 0.0
  %3221 = vmatmul.mubr.f32.gmra.mrb[0].mxu0 %v3109
  %v3222 = vpop.f32.mrb[0].mxu0
  %v3223 = vadd.f32 %v3064, %v3222
  %v3224 = vpop.f32.mrb[0].mxu0
  %3225 = vmatprep.mubr.f32.mxu0 0.0
  %3226 = vmatmul.mubr.f32.gmra.mrb[0].mxu0 %v3111
  %v3227 = vpop.f32.mrb[0].mxu0
  %v3228 = vadd.f32 %v3065, %v3227
  %v3229 = vpop.f32.mrb[0].mxu0
  %3230 = vmatprep.mubr.f32.mxu0 0.0
  %3231 = vmatmul.mubr.f32.gmra.mrb[0].mxu0 %v3113
  %v3232 = vpop.f32.mrb[0].mxu0
  %v3233 = vadd.f32 %v3066, %v3232
  %v3234 = vpop.f32.mrb[0].mxu0
  %3235 = vdwg.mxu0
  %v3236 = vsel %vm677, %v3198, -inf
  %3237 = vmax.xlane.f32.xlu0 %v3236
  %v3238 = vpop.xlane.xlu0 %3237
  %v3239 = vsel %vm677, %v3203, -inf
  %3240 = vmax.xlane.f32.xlu0 %v3239
  %v3241 = vpop.xlane.xlu0 %3240
  %v3242 = vsel %vm677, %v3208, -inf
  %3243 = vmax.xlane.f32.xlu0 %v3242
  %v3244 = vpop.xlane.xlu0 %3243
  %v3245 = vsel %vm677, %v3213, -inf
  %3246 = vmax.xlane.f32.xlu0 %v3245
  %v3247 = vpop.xlane.xlu0 %3246
  %v3248 = vsel %vm677, %v3218, -inf
  %3249 = vmax.xlane.f32.xlu0 %v3248
  %v3250 = vpop.xlane.xlu0 %3249
  %v3251 = vsel %vm677, %v3223, -inf
  %3252 = vmax.xlane.f32.xlu0 %v3251
  %v3253 = vpop.xlane.xlu0 %3252
  %v3254 = vsel %vm677, %v3228, -inf
  %3255 = vmax.xlane.f32.xlu0 %v3254
  %v3256 = vpop.xlane.xlu0 %3255
  %v3257 = vsel %vm677, %v3233, -inf
  %3258 = vmax.xlane.f32.xlu0 %v3257
  %v3259 = vpop.xlane.xlu0 %3258
  %v3260 = vsub.f32 %v3198, %v3238
  %v3261 = vsub.f32 %v3203, %v3241
  %v3262 = vsub.f32 %v3208, %v3244
  %v3263 = vsub.f32 %v3213, %v3247
  %v3264 = vsub.f32 %v3218, %v3250
  %v3265 = vsub.f32 %v3223, %v3253
  %v3266 = vsub.f32 %v3228, %v3256
  %v3267 = vsub.f32 %v3233, %v3259
  %v3268 = vmul.f32 %v3260, 1.442695
  %v3269 = vpow.pop %v3268
  %v3270 = vmul.f32 %v3261, 1.442695
  %v3271 = vpow.pop %v3270
  %v3272 = vmul.f32 %v3262, 1.442695
  %v3273 = vpow.pop %v3272
  %v3274 = vmul.f32 %v3263, 1.442695
  %v3275 = vpow.pop %v3274
  %v3276 = vmul.f32 %v3264, 1.442695
  %v3277 = vpow.pop %v3276
  %v3278 = vmul.f32 %v3265, 1.442695
  %v3279 = vpow.pop %v3278
  %v3280 = vmul.f32 %v3266, 1.442695
  %v3281 = vpow.pop %v3280
  %v3282 = vmul.f32 %v3267, 1.442695
  %v3283 = vpow.pop %v3282
  %v3284 = vsel %vm677, %v3269, 0.0
  %3285 = vadd.xlane.f32.xlu0 %v3284
  %v3286 = vpop.xlane.xlu0 %3285
  %v3287 = vsel %vm677, %v3271, 0.0
  %3288 = vadd.xlane.f32.xlu0 %v3287
  %v3289 = vpop.xlane.xlu0 %3288
  %v3290 = vsel %vm677, %v3273, 0.0
  %3291 = vadd.xlane.f32.xlu0 %v3290
  %v3292 = vpop.xlane.xlu0 %3291
  %v3293 = vsel %vm677, %v3275, 0.0
  %3294 = vadd.xlane.f32.xlu0 %v3293
  %v3295 = vpop.xlane.xlu0 %3294
  %v3296 = vsel %vm677, %v3277, 0.0
  %3297 = vadd.xlane.f32.xlu0 %v3296
  %v3298 = vpop.xlane.xlu0 %3297
  %v3299 = vsel %vm677, %v3279, 0.0
  %3300 = vadd.xlane.f32.xlu0 %v3299
  %v3301 = vpop.xlane.xlu0 %3300
  %v3302 = vsel %vm677, %v3281, 0.0
  %3303 = vadd.xlane.f32.xlu0 %v3302
  %v3304 = vpop.xlane.xlu0 %3303
  %v3305 = vsel %vm677, %v3283, 0.0
  %3306 = vadd.xlane.f32.xlu0 %v3305
  %v3307 = vpop.xlane.xlu0 %3306
  %v3308 = vrcp.pop %v3286
  %v3309 = vrcp.pop %v3289
  %v3310 = vrcp.pop %v3292
  %v3311 = vrcp.pop %v3295
  %v3312 = vrcp.pop %v3298
  %v3313 = vrcp.pop %v3301
  %v3314 = vrcp.pop %v3304
  %v3315 = vrcp.pop %v3307
  %v3316 = vmul.f32 %v3269, %v3308
  %v3317 = vmul.f32 %v3271, %v3309
  %v3318 = vmul.f32 %v3273, %v3310
  %v3319 = vmul.f32 %v3275, %v3311
  %v3320 = vmul.f32 %v3277, %v3312
  %v3321 = vmul.f32 %v3279, %v3313
  %v3322 = vmul.f32 %v3281, %v3314
  %v3323 = vmul.f32 %v3283, %v3315
  %3324 = vrot.lane.b32.xlu0 %v437, 72
  %v3325 = vpop.permute.xlu0 %3324
  %3326 = vrot.lane.b32.xlu0 %v442, 72
  %v3327 = vpop.permute.xlu0 %3326
  %3328 = vrot.lane.b32.xlu0 %v447, 72
  %v3329 = vpop.permute.xlu0 %3328
  %3330 = vrot.lane.b32.xlu0 %v452, 72
  %v3331 = vpop.permute.xlu0 %3330
  %3332 = vrot.lane.b32.xlu0 %v457, 72
  %v3333 = vpop.permute.xlu0 %3332
  %3334 = vrot.lane.b32.xlu0 %v462, 72
  %v3335 = vpop.permute.xlu0 %3334
  %3336 = vrot.lane.b32.xlu0 %v467, 72
  %v3337 = vpop.permute.xlu0 %3336
  %3338 = vrot.lane.b32.xlu0 %v472, 72
  %v3339 = vpop.permute.xlu0 %3338
  %v3349 = vsel %vm677, %v3316, 0
  %v3352 = vsel %vm677, %v3317, 0
  %v3355 = vsel %vm677, %v3318, 0
  %v3358 = vsel %vm677, %v3319, 0
  %v3361 = vsel %vm677, %v3320, 0
  %v3364 = vsel %vm677, %v3321, 0
  %v3367 = vsel %vm677, %v3322, 0
  %v3370 = vsel %vm677, %v3323, 0
  %3372 = vmatprep.subr.mxu0 0.0
  %3373 = vmatpush1.msra.mxu0 %v3325
  %3374 = vmatprep.subr.mxu0 0.0
  %3375 = vmatpush1.msra.mxu0 %v3327
  %3376 = vmatprep.subr.mxu0 0.0
  %3377 = vmatpush1.msra.mxu0 %v3329
  %3378 = vmatprep.subr.mxu0 0.0
  %3379 = vmatpush1.msra.mxu0 %v3331
  %3380 = vmatprep.subr.mxu0 0.0
  %3381 = vmatpush1.msra.mxu0 %v3333
  %3382 = vmatprep.subr.mxu0 0.0
  %3383 = vmatpush1.msra.mxu0 %v3335
  %3384 = vmatprep.subr.mxu0 0.0
  %3385 = vmatpush1.msra.mxu0 %v3337
  %3386 = vmatprep.subr.mxu0 0.0
  %3387 = vmatpush1.msra.mxu0 %v3339
  %3388 = vmatprep.subr.mxu0 0.0
  %3389 = vmatpush1.msra.mxu0 0.0
  %3390 = vmatprep.subr.mxu0 0.0
  %3391 = vmatpush1.msra.mxu0 0.0
  %3392 = vmatprep.subr.mxu0 0.0
  %3393 = vmatpush1.msra.mxu0 0.0
  %3394 = vmatprep.subr.mxu0 0.0
  %3395 = vmatpush1.msra.mxu0 0.0
  %3396 = vmatprep.subr.mxu0 0.0
  %3397 = vmatpush1.msra.mxu0 0.0
  %3398 = vmatprep.subr.mxu0 0.0
  %3399 = vmatpush1.msra.mxu0 0.0
  %3400 = vmatprep.subr.mxu0 0.0
  %3401 = vmatpush1.msra.mxu0 0.0
  %3402 = vmatprep.subr.mxu0 0.0
  %3403 = vmatpush1.msra.mxu0 0.0
  %3404 = vmatprep.subr.mxu0 0.0
  %3405 = vmatpush1.msra.mxu0 0.0
  %3406 = vmatprep.subr.mxu0 0.0
  %3407 = vmatpush1.msra.mxu0 0.0
  %3408 = vmatprep.subr.mxu0 0.0
  %3409 = vmatpush1.msra.mxu0 0.0
  %3410 = vmatprep.subr.mxu0 0.0
  %3411 = vmatpush1.msra.mxu0 0.0
  %3412 = vmatprep.subr.mxu0 0.0
  %3413 = vmatpush1.msra.mxu0 0.0
  %3414 = vmatprep.subr.mxu0 0.0
  %3415 = vmatpush1.msra.mxu0 0.0
  %3416 = vmatprep.subr.mxu0 0.0
  %3417 = vmatpush1.msra.mxu0 0.0
  %3418 = vmatprep.subr.mxu0 0.0
  %3419 = vmatpush1.msra.mxu0 0.0
  %3420 = vmatprep.subr.mxu0 0.0
  %3421 = vmatpush1.msra.mxu0 0.0
  %3422 = vmatprep.subr.mxu0 0.0
  %3423 = vmatpush1.msra.mxu0 0.0
  %3424 = vmatprep.subr.mxu0 0.0
  %3425 = vmatpush1.msra.mxu0 0.0
  %3426 = vmatprep.subr.mxu0 0.0
  %3427 = vmatpush1.msra.mxu0 0.0
  %3428 = vmatprep.subr.mxu0 0.0
  %3429 = vmatpush1.msra.mxu0 0.0
  %3430 = vmatprep.subr.mxu0 0.0
  %3431 = vmatpush1.msra.mxu0 0.0
  %3432 = vmatprep.subr.mxu0 0.0
  %3433 = vmatpush1.msra.mxu0 0.0
  %3434 = vmatprep.subr.mxu0 0.0
  %3435 = vmatpush1.msra.mxu0 0.0
  %3436 = vmatprep.mubr.f32.mxu0 0.0
  %3437 = vmatmul.mubr.f32.gmra.mrb[0].mxu0 %v3349
  %v3438 = vpop.f32.mrb[0].mxu0
  %v3439 = vadd.f32 0.0, %v3438
  %v3440 = vpop.f32.mrb[0].mxu0
  %3441 = vmatprep.mubr.f32.mxu0 0.0
  %3442 = vmatmul.mubr.f32.gmra.mrb[0].mxu0 %v3352
  %v3443 = vpop.f32.mrb[0].mxu0
  %v3444 = vadd.f32 0.0, %v3443
  %v3445 = vpop.f32.mrb[0].mxu0
  %3446 = vmatprep.mubr.f32.mxu0 0.0
  %3447 = vmatmul.mubr.f32.gmra.mrb[0].mxu0 %v3355
  %v3448 = vpop.f32.mrb[0].mxu0
  %v3449 = vadd.f32 0.0, %v3448
  %v3450 = vpop.f32.mrb[0].mxu0
  %3451 = vmatprep.mubr.f32.mxu0 0.0
  %3452 = vmatmul.mubr.f32.gmra.mrb[0].mxu0 %v3358
  %v3453 = vpop.f32.mrb[0].mxu0
  %v3454 = vadd.f32 0.0, %v3453
  %v3455 = vpop.f32.mrb[0].mxu0
  %3456 = vmatprep.mubr.f32.mxu0 0.0
  %3457 = vmatmul.mubr.f32.gmra.mrb[0].mxu0 %v3361
  %v3458 = vpop.f32.mrb[0].mxu0
  %v3459 = vadd.f32 0.0, %v3458
  %v3460 = vpop.f32.mrb[0].mxu0
  %3461 = vmatprep.mubr.f32.mxu0 0.0
  %3462 = vmatmul.mubr.f32.gmra.mrb[0].mxu0 %v3364
  %v3463 = vpop.f32.mrb[0].mxu0
  %v3464 = vadd.f32 0.0, %v3463
  %v3465 = vpop.f32.mrb[0].mxu0
  %3466 = vmatprep.mubr.f32.mxu0 0.0
  %3467 = vmatmul.mubr.f32.gmra.mrb[0].mxu0 %v3367
  %v3468 = vpop.f32.mrb[0].mxu0
  %v3469 = vadd.f32 0.0, %v3468
  %v3470 = vpop.f32.mrb[0].mxu0
  %3471 = vmatprep.mubr.f32.mxu0 0.0
  %3472 = vmatmul.mubr.f32.gmra.mrb[0].mxu0 %v3370
  %v3473 = vpop.f32.mrb[0].mxu0
  %v3474 = vadd.f32 0.0, %v3473
  %v3475 = vpop.f32.mrb[0].mxu0
  %3476 = vdwg.mxu0
  %3485 = vrot.lane.b32.xlu0 %v3439, 24
  %v3486 = vpop.permute.xlu0 %3485
  %3487 = vrot.lane.b32.xlu0 %v3444, 24
  %v3488 = vpop.permute.xlu0 %3487
  %3489 = vrot.lane.b32.xlu0 %v3449, 24
  %v3490 = vpop.permute.xlu0 %3489
  %3491 = vrot.lane.b32.xlu0 %v3454, 24
  %v3492 = vpop.permute.xlu0 %3491
  %3493 = vrot.lane.b32.xlu0 %v3459, 24
  %v3494 = vpop.permute.xlu0 %3493
  %3495 = vrot.lane.b32.xlu0 %v3464, 24
  %v3496 = vpop.permute.xlu0 %3495
  %3497 = vrot.lane.b32.xlu0 %v3469, 24
  %v3498 = vpop.permute.xlu0 %3497
  %3499 = vrot.lane.b32.xlu0 %v3474, 24
  %v3500 = vpop.permute.xlu0 %3499
  %vm3509 = vcmask 261312
  %3510 = vst.msk [vmem:[#allocation2] sm:$0xff] %vm3509, %v3486
  %3511 = vst.msk [vmem:[#allocation2 + $0x8] sm:$0xff] %vm3509, %v3488
  %3512 = vst.msk [vmem:[#allocation2 + $0x10] sm:$0xff] %vm3509, %v3490
  %3513 = vst.msk [vmem:[#allocation2 + $0x18] sm:$0xff] %vm3509, %v3492
  %3514 = vst.msk [vmem:[#allocation2 + $0x20] sm:$0xff] %vm3509, %v3494
  %3515 = vst.msk [vmem:[#allocation2 + $0x28] sm:$0xff] %vm3509, %v3496
  %3516 = vst.msk [vmem:[#allocation2 + $0x30] sm:$0xff] %vm3509, %v3498
  %3517 = vst.msk [vmem:[#allocation2 + $0x38] sm:$0xff] %vm3509, %v3500
  %3518 = vrot.lane.b32.xlu0 %v477, 104
  %v3519 = vpop.permute.xlu0 %3518
  %3520 = vrot.lane.b32.xlu0 %v482, 104
  %v3521 = vpop.permute.xlu0 %3520
  %3522 = vrot.lane.b32.xlu0 %v487, 104
  %v3523 = vpop.permute.xlu0 %3522
  %3524 = vrot.lane.b32.xlu0 %v492, 104
  %v3525 = vpop.permute.xlu0 %3524
  %3526 = vrot.lane.b32.xlu0 %v497, 104
  %v3527 = vpop.permute.xlu0 %3526
  %3528 = vrot.lane.b32.xlu0 %v502, 104
  %v3529 = vpop.permute.xlu0 %3528
  %3530 = vrot.lane.b32.xlu0 %v507, 104
  %v3531 = vpop.permute.xlu0 %3530
  %3532 = vrot.lane.b32.xlu0 %v512, 104
  %v3533 = vpop.permute.xlu0 %3532
  %v3534 = vsel %vm523, %v3519, 0
  %v3536 = vsel %vm523, %v3521, 0
  %v3538 = vsel %vm523, %v3523, 0
  %v3540 = vsel %vm523, %v3525, 0
  %v3542 = vsel %vm523, %v3527, 0
  %v3544 = vsel %vm523, %v3529, 0
  %v3546 = vsel %vm523, %v3531, 0
  %v3548 = vsel %vm523, %v3533, 0
  %3550 = vmatprep.subr.mxu0 0.0
  %3551 = vmatpush1.xpose.msra.mxu0 %v3534
  %3552 = vmatprep.subr.mxu0 0.0
  %3553 = vmatpush1.xpose.msra.mxu0 %v3536
  %3554 = vmatprep.subr.mxu0 0.0
  %3555 = vmatpush1.xpose.msra.mxu0 %v3538
  %3556 = vmatprep.subr.mxu0 0.0
  %3557 = vmatpush1.xpose.msra.mxu0 %v3540
  %3558 = vmatprep.subr.mxu0 0.0
  %3559 = vmatpush1.xpose.msra.mxu0 %v3542
  %3560 = vmatprep.subr.mxu0 0.0
  %3561 = vmatpush1.xpose.msra.mxu0 %v3544
  %3562 = vmatprep.subr.mxu0 0.0
  %3563 = vmatpush1.xpose.msra.mxu0 %v3546
  %3564 = vmatprep.subr.mxu0 0.0
  %3565 = vmatpush1.xpose.msra.mxu0 %v3548
  %3566 = vmatprep.subr.mxu0 0.0
  %3567 = vmatpush1.xpose.msra.mxu0 0.0
  %3568 = vmatprep.subr.mxu0 0.0
  %3569 = vmatpush1.xpose.msra.mxu0 0.0
  %3570 = vmatprep.subr.mxu0 0.0
  %3571 = vmatpush1.xpose.msra.mxu0 0.0
  %3572 = vmatprep.subr.mxu0 0.0
  %3573 = vmatpush1.xpose.msra.mxu0 0.0
  %3574 = vmatprep.subr.mxu0 0.0
  %3575 = vmatpush1.xpose.msra.mxu0 0.0
  %3576 = vmatprep.subr.mxu0 0.0
  %3577 = vmatpush1.xpose.msra.mxu0 0.0
  %3578 = vmatprep.subr.mxu0 0.0
  %3579 = vmatpush1.xpose.msra.mxu0 0.0
  %3580 = vmatprep.subr.mxu0 0.0
  %3581 = vmatpush1.xpose.msra.mxu0 0.0
  %3582 = vmatprep.subr.mxu0 0.0
  %3583 = vmatpush1.xpose.msra.mxu0 0.0
  %3584 = vmatprep.subr.mxu0 0.0
  %3585 = vmatpush1.xpose.msra.mxu0 0.0
  %3586 = vmatprep.subr.mxu0 0.0
  %3587 = vmatpush1.xpose.msra.mxu0 0.0
  %3588 = vmatprep.subr.mxu0 0.0
  %3589 = vmatpush1.xpose.msra.mxu0 0.0
  %3590 = vmatprep.subr.mxu0 0.0
  %3591 = vmatpush1.xpose.msra.mxu0 0.0
  %3592 = vmatprep.subr.mxu0 0.0
  %3593 = vmatpush1.xpose.msra.mxu0 0.0
  %3594 = vmatprep.subr.mxu0 0.0
  %3595 = vmatpush1.xpose.msra.mxu0 0.0
  %3596 = vmatprep.subr.mxu0 0.0
  %3597 = vmatpush1.xpose.msra.mxu0 0.0
  %3598 = vmatprep.subr.mxu0 0.0
  %3599 = vmatpush1.xpose.msra.mxu0 0.0
  %3600 = vmatprep.subr.mxu0 0.0
  %3601 = vmatpush1.xpose.msra.mxu0 0.0
  %3602 = vmatprep.subr.mxu0 0.0
  %3603 = vmatpush1.xpose.msra.mxu0 0.0
  %3604 = vmatprep.subr.mxu0 0.0
  %3605 = vmatpush1.xpose.msra.mxu0 0.0
  %3606 = vmatprep.subr.mxu0 0.0
  %3607 = vmatpush1.xpose.msra.mxu0 0.0
  %3608 = vmatprep.subr.mxu0 0.0
  %3609 = vmatpush1.xpose.msra.mxu0 0.0
  %3610 = vmatprep.subr.mxu0 0.0
  %3611 = vmatpush1.xpose.msra.mxu0 0.0
  %3612 = vmatprep.subr.mxu0 0.0
  %3613 = vmatpush1.xpose.msra.mxu0 0.0
  %3614 = vmatprep.mubr.f32.mxu0 0.0
  %3615 = vmatmul.mubr.f32.gmra.mrb[0].mxu0 %v3099
  %v3616 = vpop.f32.mrb[0].mxu0
  %v3617 = vadd.f32 %v3059, %v3616
  %v3618 = vpop.f32.mrb[0].mxu0
  %3619 = vmatprep.mubr.f32.mxu0 0.0
  %3620 = vmatmul.mubr.f32.gmra.mrb[0].mxu0 %v3101
  %v3621 = vpop.f32.mrb[0].mxu0
  %v3622 = vadd.f32 %v3060, %v3621
  %v3623 = vpop.f32.mrb[0].mxu0
  %3624 = vmatprep.mubr.f32.mxu0 0.0
  %3625 = vmatmul.mubr.f32.gmra.mrb[0].mxu0 %v3103
  %v3626 = vpop.f32.mrb[0].mxu0
  %v3627 = vadd.f32 %v3061, %v3626
  %v3628 = vpop.f32.mrb[0].mxu0
  %3629 = vmatprep.mubr.f32.mxu0 0.0
  %3630 = vmatmul.mubr.f32.gmra.mrb[0].mxu0 %v3105
  %v3631 = vpop.f32.mrb[0].mxu0
  %v3632 = vadd.f32 %v3062, %v3631
  %v3633 = vpop.f32.mrb[0].mxu0
  %3634 = vmatprep.mubr.f32.mxu0 0.0
  %3635 = vmatmul.mubr.f32.gmra.mrb[0].mxu0 %v3107
  %v3636 = vpop.f32.mrb[0].mxu0
  %v3637 = vadd.f32 %v3063, %v3636
  %v3638 = vpop.f32.mrb[0].mxu0
  %3639 = vmatprep.mubr.f32.mxu0 0.0
  %3640 = vmatmul.mubr.f32.gmra.mrb[0].mxu0 %v3109
  %v3641 = vpop.f32.mrb[0].mxu0
  %v3642 = vadd.f32 %v3064, %v3641
  %v3643 = vpop.f32.mrb[0].mxu0
  %3644 = vmatprep.mubr.f32.mxu0 0.0
  %3645 = vmatmul.mubr.f32.gmra.mrb[0].mxu0 %v3111
  %v3646 = vpop.f32.mrb[0].mxu0
  %v3647 = vadd.f32 %v3065, %v3646
  %v3648 = vpop.f32.mrb[0].mxu0
  %3649 = vmatprep.mubr.f32.mxu0 0.0
  %3650 = vmatmul.mubr.f32.gmra.mrb[0].mxu0 %v3113
  %v3651 = vpop.f32.mrb[0].mxu0
  %v3652 = vadd.f32 %v3066, %v3651
  %v3653 = vpop.f32.mrb[0].mxu0
  %3654 = vdwg.mxu0
  %v3655 = vsel %vm677, %v3617, -inf
  %3656 = vmax.xlane.f32.xlu0 %v3655
  %v3657 = vpop.xlane.xlu0 %3656
  %v3658 = vsel %vm677, %v3622, -inf
  %3659 = vmax.xlane.f32.xlu0 %v3658
  %v3660 = vpop.xlane.xlu0 %3659
  %v3661 = vsel %vm677, %v3627, -inf
  %3662 = vmax.xlane.f32.xlu0 %v3661
  %v3663 = vpop.xlane.xlu0 %3662
  %v3664 = vsel %vm677, %v3632, -inf
  %3665 = vmax.xlane.f32.xlu0 %v3664
  %v3666 = vpop.xlane.xlu0 %3665
  %v3667 = vsel %vm677, %v3637, -inf
  %3668 = vmax.xlane.f32.xlu0 %v3667
  %v3669 = vpop.xlane.xlu0 %3668
  %v3670 = vsel %vm677, %v3642, -inf
  %3671 = vmax.xlane.f32.xlu0 %v3670
  %v3672 = vpop.xlane.xlu0 %3671
  %v3673 = vsel %vm677, %v3647, -inf
  %3674 = vmax.xlane.f32.xlu0 %v3673
  %v3675 = vpop.xlane.xlu0 %3674
  %v3676 = vsel %vm677, %v3652, -inf
  %3677 = vmax.xlane.f32.xlu0 %v3676
  %v3678 = vpop.xlane.xlu0 %3677
  %v3679 = vsub.f32 %v3617, %v3657
  %v3680 = vsub.f32 %v3622, %v3660
  %v3681 = vsub.f32 %v3627, %v3663
  %v3682 = vsub.f32 %v3632, %v3666
  %v3683 = vsub.f32 %v3637, %v3669
  %v3684 = vsub.f32 %v3642, %v3672
  %v3685 = vsub.f32 %v3647, %v3675
  %v3686 = vsub.f32 %v3652, %v3678
  %v3687 = vmul.f32 %v3679, 1.442695
  %v3688 = vpow.pop %v3687
  %v3689 = vmul.f32 %v3680, 1.442695
  %v3690 = vpow.pop %v3689
  %v3691 = vmul.f32 %v3681, 1.442695
  %v3692 = vpow.pop %v3691
  %v3693 = vmul.f32 %v3682, 1.442695
  %v3694 = vpow.pop %v3693
  %v3695 = vmul.f32 %v3683, 1.442695
  %v3696 = vpow.pop %v3695
  %v3697 = vmul.f32 %v3684, 1.442695
  %v3698 = vpow.pop %v3697
  %v3699 = vmul.f32 %v3685, 1.442695
  %v3700 = vpow.pop %v3699
  %v3701 = vmul.f32 %v3686, 1.442695
  %v3702 = vpow.pop %v3701
  %v3703 = vsel %vm677, %v3688, 0.0
  %3704 = vadd.xlane.f32.xlu0 %v3703
  %v3705 = vpop.xlane.xlu0 %3704
  %v3706 = vsel %vm677, %v3690, 0.0
  %3707 = vadd.xlane.f32.xlu0 %v3706
  %v3708 = vpop.xlane.xlu0 %3707
  %v3709 = vsel %vm677, %v3692, 0.0
  %3710 = vadd.xlane.f32.xlu0 %v3709
  %v3711 = vpop.xlane.xlu0 %3710
  %v3712 = vsel %vm677, %v3694, 0.0
  %3713 = vadd.xlane.f32.xlu0 %v3712
  %v3714 = vpop.xlane.xlu0 %3713
  %v3715 = vsel %vm677, %v3696, 0.0
  %3716 = vadd.xlane.f32.xlu0 %v3715
  %v3717 = vpop.xlane.xlu0 %3716
  %v3718 = vsel %vm677, %v3698, 0.0
  %3719 = vadd.xlane.f32.xlu0 %v3718
  %v3720 = vpop.xlane.xlu0 %3719
  %v3721 = vsel %vm677, %v3700, 0.0
  %3722 = vadd.xlane.f32.xlu0 %v3721
  %v3723 = vpop.xlane.xlu0 %3722
  %v3724 = vsel %vm677, %v3702, 0.0
  %3725 = vadd.xlane.f32.xlu0 %v3724
  %v3726 = vpop.xlane.xlu0 %3725
  %v3727 = vrcp.pop %v3705
  %v3728 = vrcp.pop %v3708
  %v3729 = vrcp.pop %v3711
  %v3730 = vrcp.pop %v3714
  %v3731 = vrcp.pop %v3717
  %v3732 = vrcp.pop %v3720
  %v3733 = vrcp.pop %v3723
  %v3734 = vrcp.pop %v3726
  %v3735 = vmul.f32 %v3688, %v3727
  %v3736 = vmul.f32 %v3690, %v3728
  %v3737 = vmul.f32 %v3692, %v3729
  %v3738 = vmul.f32 %v3694, %v3730
  %v3739 = vmul.f32 %v3696, %v3731
  %v3740 = vmul.f32 %v3698, %v3732
  %v3741 = vmul.f32 %v3700, %v3733
  %v3742 = vmul.f32 %v3702, %v3734
  %3743 = vrot.lane.b32.xlu0 %v477, 72
  %v3744 = vpop.permute.xlu0 %3743
  %3745 = vrot.lane.b32.xlu0 %v482, 72
  %v3746 = vpop.permute.xlu0 %3745
  %3747 = vrot.lane.b32.xlu0 %v487, 72
  %v3748 = vpop.permute.xlu0 %3747
  %3749 = vrot.lane.b32.xlu0 %v492, 72
  %v3750 = vpop.permute.xlu0 %3749
  %3751 = vrot.lane.b32.xlu0 %v497, 72
  %v3752 = vpop.permute.xlu0 %3751
  %3753 = vrot.lane.b32.xlu0 %v502, 72
  %v3754 = vpop.permute.xlu0 %3753
  %3755 = vrot.lane.b32.xlu0 %v507, 72
  %v3756 = vpop.permute.xlu0 %3755
  %3757 = vrot.lane.b32.xlu0 %v512, 72
  %v3758 = vpop.permute.xlu0 %3757
  %v3768 = vsel %vm677, %v3735, 0
  %v3771 = vsel %vm677, %v3736, 0
  %v3774 = vsel %vm677, %v3737, 0
  %v3777 = vsel %vm677, %v3738, 0
  %v3780 = vsel %vm677, %v3739, 0
  %v3783 = vsel %vm677, %v3740, 0
  %v3786 = vsel %vm677, %v3741, 0
  %v3789 = vsel %vm677, %v3742, 0
  %3791 = vmatprep.subr.mxu0 0.0
  %3792 = vmatpush1.msra.mxu0 %v3744
  %3793 = vmatprep.subr.mxu0 0.0
  %3794 = vmatpush1.msra.mxu0 %v3746
  %3795 = vmatprep.subr.mxu0 0.0
  %3796 = vmatpush1.msra.mxu0 %v3748
  %3797 = vmatprep.subr.mxu0 0.0
  %3798 = vmatpush1.msra.mxu0 %v3750
  %3799 = vmatprep.subr.mxu0 0.0
  %3800 = vmatpush1.msra.mxu0 %v3752
  %3801 = vmatprep.subr.mxu0 0.0
  %3802 = vmatpush1.msra.mxu0 %v3754
  %3803 = vmatprep.subr.mxu0 0.0
  %3804 = vmatpush1.msra.mxu0 %v3756
  %3805 = vmatprep.subr.mxu0 0.0
  %3806 = vmatpush1.msra.mxu0 %v3758
  %3807 = vmatprep.subr.mxu0 0.0
  %3808 = vmatpush1.msra.mxu0 0.0
  %3809 = vmatprep.subr.mxu0 0.0
  %3810 = vmatpush1.msra.mxu0 0.0
  %3811 = vmatprep.subr.mxu0 0.0
  %3812 = vmatpush1.msra.mxu0 0.0
  %3813 = vmatprep.subr.mxu0 0.0
  %3814 = vmatpush1.msra.mxu0 0.0
  %3815 = vmatprep.subr.mxu0 0.0
  %3816 = vmatpush1.msra.mxu0 0.0
  %3817 = vmatprep.subr.mxu0 0.0
  %3818 = vmatpush1.msra.mxu0 0.0
  %3819 = vmatprep.subr.mxu0 0.0
  %3820 = vmatpush1.msra.mxu0 0.0
  %3821 = vmatprep.subr.mxu0 0.0
  %3822 = vmatpush1.msra.mxu0 0.0
  %3823 = vmatprep.subr.mxu0 0.0
  %3824 = vmatpush1.msra.mxu0 0.0
  %3825 = vmatprep.subr.mxu0 0.0
  %3826 = vmatpush1.msra.mxu0 0.0
  %3827 = vmatprep.subr.mxu0 0.0
  %3828 = vmatpush1.msra.mxu0 0.0
  %3829 = vmatprep.subr.mxu0 0.0
  %3830 = vmatpush1.msra.mxu0 0.0
  %3831 = vmatprep.subr.mxu0 0.0
  %3832 = vmatpush1.msra.mxu0 0.0
  %3833 = vmatprep.subr.mxu0 0.0
  %3834 = vmatpush1.msra.mxu0 0.0
  %3835 = vmatprep.subr.mxu0 0.0
  %3836 = vmatpush1.msra.mxu0 0.0
  %3837 = vmatprep.subr.mxu0 0.0
  %3838 = vmatpush1.msra.mxu0 0.0
  %3839 = vmatprep.subr.mxu0 0.0
  %3840 = vmatpush1.msra.mxu0 0.0
  %3841 = vmatprep.subr.mxu0 0.0
  %3842 = vmatpush1.msra.mxu0 0.0
  %3843 = vmatprep.subr.mxu0 0.0
  %3844 = vmatpush1.msra.mxu0 0.0
  %3845 = vmatprep.subr.mxu0 0.0
  %3846 = vmatpush1.msra.mxu0 0.0
  %3847 = vmatprep.subr.mxu0 0.0
  %3848 = vmatpush1.msra.mxu0 0.0
  %3849 = vmatprep.subr.mxu0 0.0
  %3850 = vmatpush1.msra.mxu0 0.0
  %3851 = vmatprep.subr.mxu0 0.0
  %3852 = vmatpush1.msra.mxu0 0.0
  %3853 = vmatprep.subr.mxu0 0.0
  %3854 = vmatpush1.msra.mxu0 0.0
  %3855 = vmatprep.mubr.f32.mxu0 0.0
  %3856 = vmatmul.mubr.f32.gmra.mrb[0].mxu0 %v3768
  %v3857 = vpop.f32.mrb[0].mxu0
  %v3858 = vadd.f32 0.0, %v3857
  %v3859 = vpop.f32.mrb[0].mxu0
  %3860 = vmatprep.mubr.f32.mxu0 0.0
  %3861 = vmatmul.mubr.f32.gmra.mrb[0].mxu0 %v3771
  %v3862 = vpop.f32.mrb[0].mxu0
  %v3863 = vadd.f32 0.0, %v3862
  %v3864 = vpop.f32.mrb[0].mxu0
  %3865 = vmatprep.mubr.f32.mxu0 0.0
  %3866 = vmatmul.mubr.f32.gmra.mrb[0].mxu0 %v3774
  %v3867 = vpop.f32.mrb[0].mxu0
  %v3868 = vadd.f32 0.0, %v3867
  %v3869 = vpop.f32.mrb[0].mxu0
  %3870 = vmatprep.mubr.f32.mxu0 0.0
  %3871 = vmatmul.mubr.f32.gmra.mrb[0].mxu0 %v3777
  %v3872 = vpop.f32.mrb[0].mxu0
  %v3873 = vadd.f32 0.0, %v3872
  %v3874 = vpop.f32.mrb[0].mxu0
  %3875 = vmatprep.mubr.f32.mxu0 0.0
  %3876 = vmatmul.mubr.f32.gmra.mrb[0].mxu0 %v3780
  %v3877 = vpop.f32.mrb[0].mxu0
  %v3878 = vadd.f32 0.0, %v3877
  %v3879 = vpop.f32.mrb[0].mxu0
  %3880 = vmatprep.mubr.f32.mxu0 0.0
  %3881 = vmatmul.mubr.f32.gmra.mrb[0].mxu0 %v3783
  %v3882 = vpop.f32.mrb[0].mxu0
  %v3883 = vadd.f32 0.0, %v3882
  %v3884 = vpop.f32.mrb[0].mxu0
  %3885 = vmatprep.mubr.f32.mxu0 0.0
  %3886 = vmatmul.mubr.f32.gmra.mrb[0].mxu0 %v3786
  %v3887 = vpop.f32.mrb[0].mxu0
  %v3888 = vadd.f32 0.0, %v3887
  %v3889 = vpop.f32.mrb[0].mxu0
  %3890 = vmatprep.mubr.f32.mxu0 0.0
  %3891 = vmatmul.mubr.f32.gmra.mrb[0].mxu0 %v3789
  %v3892 = vpop.f32.mrb[0].mxu0
  %v3893 = vadd.f32 0.0, %v3892
  %v3894 = vpop.f32.mrb[0].mxu0
  %3895 = vdwg.mxu0
  %3904 = vrot.lane.b32.xlu0 %v3858, 24
  %v3905 = vpop.permute.xlu0 %3904
  %3906 = vrot.lane.b32.xlu0 %v3863, 24
  %v3907 = vpop.permute.xlu0 %3906
  %3908 = vrot.lane.b32.xlu0 %v3868, 24
  %v3909 = vpop.permute.xlu0 %3908
  %3910 = vrot.lane.b32.xlu0 %v3873, 24
  %v3911 = vpop.permute.xlu0 %3910
  %3912 = vrot.lane.b32.xlu0 %v3878, 24
  %v3913 = vpop.permute.xlu0 %3912
  %3914 = vrot.lane.b32.xlu0 %v3883, 24
  %v3915 = vpop.permute.xlu0 %3914
  %3916 = vrot.lane.b32.xlu0 %v3888, 24
  %v3917 = vpop.permute.xlu0 %3916
  %3918 = vrot.lane.b32.xlu0 %v3893, 24
  %v3919 = vpop.permute.xlu0 %3918
  %3928 = vst.msk [vmem:[#allocation2 + $0x40] sm:$0xff] %vm3509, %v3905
  %3929 = vst.msk [vmem:[#allocation2 + $0x48] sm:$0xff] %vm3509, %v3907
  %3930 = vst.msk [vmem:[#allocation2 + $0x50] sm:$0xff] %vm3509, %v3909
  %3931 = vst.msk [vmem:[#allocation2 + $0x58] sm:$0xff] %vm3509, %v3911
  %3932 = vst.msk [vmem:[#allocation2 + $0x60] sm:$0xff] %vm3509, %v3913
  %3933 = vst.msk [vmem:[#allocation2 + $0x68] sm:$0xff] %vm3509, %v3915
  %3934 = vst.msk [vmem:[#allocation2 + $0x70] sm:$0xff] %vm3509, %v3917
  %3935 = vst.msk [vmem:[#allocation2 + $0x78] sm:$0xff] %vm3509, %v3919
  %v3936 = vld [vmem:[#allocation2] sm:$0xff]
  %v3937 = vld [vmem:[#allocation2 + $0x8] sm:$0xff]
  %v3938 = vld [vmem:[#allocation2 + $0x10] sm:$0xff]
  %v3939 = vld [vmem:[#allocation2 + $0x18] sm:$0xff]
  %v3940 = vld [vmem:[#allocation2 + $0x20] sm:$0xff]
  %v3941 = vld [vmem:[#allocation2 + $0x28] sm:$0xff]
  %v3942 = vld [vmem:[#allocation2 + $0x30] sm:$0xff]
  %v3943 = vld [vmem:[#allocation2 + $0x38] sm:$0xff]
  %v3944 = vld [vmem:[#allocation2 + $0x40] sm:$0xff]
  %v3945 = vld [vmem:[#allocation2 + $0x48] sm:$0xff]
  %v3946 = vld [vmem:[#allocation2 + $0x50] sm:$0xff]
  %v3947 = vld [vmem:[#allocation2 + $0x58] sm:$0xff]
  %v3948 = vld [vmem:[#allocation2 + $0x60] sm:$0xff]
  %v3949 = vld [vmem:[#allocation2 + $0x68] sm:$0xff]
  %v3950 = vld [vmem:[#allocation2 + $0x70] sm:$0xff]
  %v3951 = vld [vmem:[#allocation2 + $0x78] sm:$0xff]
  %v3953 = vsel %vm68, %v3936, 0
  %v3956 = vsel %vm68, %v3937, 0
  %v3959 = vsel %vm68, %v3938, 0
  %v3962 = vsel %vm68, %v3939, 0
  %v3965 = vsel %vm68, %v3940, 0
  %v3968 = vsel %vm68, %v3941, 0
  %v3971 = vsel %vm68, %v3942, 0
  %v3974 = vsel %vm68, %v3943, 0
  %v3977 = vsel %vm68, %v3944, 0
  %v3980 = vsel %vm68, %v3945, 0
  %v3983 = vsel %vm68, %v3946, 0
  %v3986 = vsel %vm68, %v3947, 0
  %v3989 = vsel %vm68, %v3948, 0
  %v3992 = vsel %vm68, %v3949, 0
  %v3995 = vsel %vm68, %v3950, 0
  %v3998 = vsel %vm68, %v3951, 0
  %4000 = vmatprep.subr.mxu0 0.0
  %4001 = vmatpush1.msra.mxu0 %v34
  %4002 = vmatprep.subr.mxu0 0.0
  %4003 = vmatpush1.msra.mxu0 %v35
  %4004 = vmatprep.subr.mxu0 0.0
  %4005 = vmatpush1.msra.mxu0 %v36
  %4006 = vmatprep.subr.mxu0 0.0
  %4007 = vmatpush1.msra.mxu0 %v37
  %4008 = vmatprep.subr.mxu0 0.0
  %4009 = vmatpush1.msra.mxu0 0.0
  %4010 = vmatprep.subr.mxu0 0.0
  %4011 = vmatpush1.msra.mxu0 0.0
  %4012 = vmatprep.subr.mxu0 0.0
  %4013 = vmatpush1.msra.mxu0 0.0
  %4014 = vmatprep.subr.mxu0 0.0
  %4015 = vmatpush1.msra.mxu0 0.0
  %4016 = vmatprep.subr.mxu0 0.0
  %4017 = vmatpush1.msra.mxu0 0.0
  %4018 = vmatprep.subr.mxu0 0.0
  %4019 = vmatpush1.msra.mxu0 0.0
  %4020 = vmatprep.subr.mxu0 0.0
  %4021 = vmatpush1.msra.mxu0 0.0
  %4022 = vmatprep.subr.mxu0 0.0
  %4023 = vmatpush1.msra.mxu0 0.0
  %4024 = vmatprep.subr.mxu0 0.0
  %4025 = vmatpush1.msra.mxu0 0.0
  %4026 = vmatprep.subr.mxu0 0.0
  %4027 = vmatpush1.msra.mxu0 0.0
  %4028 = vmatprep.subr.mxu0 0.0
  %4029 = vmatpush1.msra.mxu0 0.0
  %4030 = vmatprep.subr.mxu0 0.0
  %4031 = vmatpush1.msra.mxu0 0.0
  %4032 = vmatprep.subr.mxu0 0.0
  %4033 = vmatpush1.msra.mxu0 0.0
  %4034 = vmatprep.subr.mxu0 0.0
  %4035 = vmatpush1.msra.mxu0 0.0
  %4036 = vmatprep.subr.mxu0 0.0
  %4037 = vmatpush1.msra.mxu0 0.0
  %4038 = vmatprep.subr.mxu0 0.0
  %4039 = vmatpush1.msra.mxu0 0.0
  %4040 = vmatprep.subr.mxu0 0.0
  %4041 = vmatpush1.msra.mxu0 0.0
  %4042 = vmatprep.subr.mxu0 0.0
  %4043 = vmatpush1.msra.mxu0 0.0
  %4044 = vmatprep.subr.mxu0 0.0
  %4045 = vmatpush1.msra.mxu0 0.0
  %4046 = vmatprep.subr.mxu0 0.0
  %4047 = vmatpush1.msra.mxu0 0.0
  %4048 = vmatprep.subr.mxu0 0.0
  %4049 = vmatpush1.msra.mxu0 0.0
  %4050 = vmatprep.subr.mxu0 0.0
  %4051 = vmatpush1.msra.mxu0 0.0
  %4052 = vmatprep.subr.mxu0 0.0
  %4053 = vmatpush1.msra.mxu0 0.0
  %4054 = vmatprep.subr.mxu0 0.0
  %4055 = vmatpush1.msra.mxu0 0.0
  %4056 = vmatprep.subr.mxu0 0.0
  %4057 = vmatpush1.msra.mxu0 0.0
  %4058 = vmatprep.subr.mxu0 0.0
  %4059 = vmatpush1.msra.mxu0 0.0
  %4060 = vmatprep.subr.mxu0 0.0
  %4061 = vmatpush1.msra.mxu0 0.0
  %4062 = vmatprep.subr.mxu0 0.0
  %4063 = vmatpush1.msra.mxu0 0.0
  %4064 = vmatprep.mubr.f32.mxu0 0.0
  %4065 = vmatmul.mubr.f32.gmra.mrb[0].mxu0 %v3953
  %v4066 = vpop.f32.mrb[0].mxu0
  %v4067 = vadd.f32 0.0, %v4066
  %v4068 = vpop.f32.mrb[0].mxu0
  %4069 = vmatprep.mubr.f32.mxu0 0.0
  %4070 = vmatmul.mubr.f32.gmra.mrb[0].mxu0 %v3956
  %v4071 = vpop.f32.mrb[0].mxu0
  %v4072 = vadd.f32 0.0, %v4071
  %v4073 = vpop.f32.mrb[0].mxu0
  %4074 = vmatprep.mubr.f32.mxu0 0.0
  %4075 = vmatmul.mubr.f32.gmra.mrb[0].mxu0 %v3959
  %v4076 = vpop.f32.mrb[0].mxu0
  %v4077 = vadd.f32 0.0, %v4076
  %v4078 = vpop.f32.mrb[0].mxu0
  %4079 = vmatprep.mubr.f32.mxu0 0.0
  %4080 = vmatmul.mubr.f32.gmra.mrb[0].mxu0 %v3962
  %v4081 = vpop.f32.mrb[0].mxu0
  %v4082 = vadd.f32 0.0, %v4081
  %v4083 = vpop.f32.mrb[0].mxu0
  %4084 = vmatprep.mubr.f32.mxu0 0.0
  %4085 = vmatmul.mubr.f32.gmra.mrb[0].mxu0 %v3965
  %v4086 = vpop.f32.mrb[0].mxu0
  %v4087 = vadd.f32 0.0, %v4086
  %v4088 = vpop.f32.mrb[0].mxu0
  %4089 = vmatprep.mubr.f32.mxu0 0.0
  %4090 = vmatmul.mubr.f32.gmra.mrb[0].mxu0 %v3968
  %v4091 = vpop.f32.mrb[0].mxu0
  %v4092 = vadd.f32 0.0, %v4091
  %v4093 = vpop.f32.mrb[0].mxu0
  %4094 = vmatprep.mubr.f32.mxu0 0.0
  %4095 = vmatmul.mubr.f32.gmra.mrb[0].mxu0 %v3971
  %v4096 = vpop.f32.mrb[0].mxu0
  %v4097 = vadd.f32 0.0, %v4096
  %v4098 = vpop.f32.mrb[0].mxu0
  %4099 = vmatprep.mubr.f32.mxu0 0.0
  %4100 = vmatmul.mubr.f32.gmra.mrb[0].mxu0 %v3974
  %v4101 = vpop.f32.mrb[0].mxu0
  %v4102 = vadd.f32 0.0, %v4101
  %v4103 = vpop.f32.mrb[0].mxu0
  %4104 = vmatprep.mubr.f32.mxu0 0.0
  %4105 = vmatmul.mubr.f32.gmra.mrb[0].mxu0 %v3977
  %v4106 = vpop.f32.mrb[0].mxu0
  %v4107 = vadd.f32 0.0, %v4106
  %v4108 = vpop.f32.mrb[0].mxu0
  %4109 = vmatprep.mubr.f32.mxu0 0.0
  %4110 = vmatmul.mubr.f32.gmra.mrb[0].mxu0 %v3980
  %v4111 = vpop.f32.mrb[0].mxu0
  %v4112 = vadd.f32 0.0, %v4111
  %v4113 = vpop.f32.mrb[0].mxu0
  %4114 = vmatprep.mubr.f32.mxu0 0.0
  %4115 = vmatmul.mubr.f32.gmra.mrb[0].mxu0 %v3983
  %v4116 = vpop.f32.mrb[0].mxu0
  %v4117 = vadd.f32 0.0, %v4116
  %v4118 = vpop.f32.mrb[0].mxu0
  %4119 = vmatprep.mubr.f32.mxu0 0.0
  %4120 = vmatmul.mubr.f32.gmra.mrb[0].mxu0 %v3986
  %v4121 = vpop.f32.mrb[0].mxu0
  %v4122 = vadd.f32 0.0, %v4121
  %v4123 = vpop.f32.mrb[0].mxu0
  %4124 = vmatprep.mubr.f32.mxu0 0.0
  %4125 = vmatmul.mubr.f32.gmra.mrb[0].mxu0 %v3989
  %v4126 = vpop.f32.mrb[0].mxu0
  %v4127 = vadd.f32 0.0, %v4126
  %v4128 = vpop.f32.mrb[0].mxu0
  %4129 = vmatprep.mubr.f32.mxu0 0.0
  %4130 = vmatmul.mubr.f32.gmra.mrb[0].mxu0 %v3992
  %v4131 = vpop.f32.mrb[0].mxu0
  %v4132 = vadd.f32 0.0, %v4131
  %v4133 = vpop.f32.mrb[0].mxu0
  %4134 = vmatprep.mubr.f32.mxu0 0.0
  %4135 = vmatmul.mubr.f32.gmra.mrb[0].mxu0 %v3995
  %v4136 = vpop.f32.mrb[0].mxu0
  %v4137 = vadd.f32 0.0, %v4136
  %v4138 = vpop.f32.mrb[0].mxu0
  %4139 = vmatprep.mubr.f32.mxu0 0.0
  %4140 = vmatmul.mubr.f32.gmra.mrb[0].mxu0 %v3998
  %v4141 = vpop.f32.mrb[0].mxu0
  %v4142 = vadd.f32 0.0, %v4141
  %v4143 = vpop.f32.mrb[0].mxu0
  %4144 = vdwg.mxu0
  %v4145 = vadd.f32 %v14, %v4067
  %v4146 = vadd.f32 %v15, %v4072
  %v4147 = vadd.f32 %v16, %v4077
  %v4148 = vadd.f32 %v17, %v4082
  %v4149 = vadd.f32 %v18, %v4087
  %v4150 = vadd.f32 %v19, %v4092
  %v4151 = vadd.f32 %v20, %v4097
  %v4152 = vadd.f32 %v21, %v4102
  %v4153 = vadd.f32 %v22, %v4107
  %v4154 = vadd.f32 %v23, %v4112
  %v4155 = vadd.f32 %v24, %v4117
  %v4156 = vadd.f32 %v25, %v4122
  %v4157 = vadd.f32 %v26, %v4127
  %v4158 = vadd.f32 %v27, %v4132
  %v4159 = vadd.f32 %v28, %v4137
  %v4160 = vadd.f32 %v29, %v4142
  %v4161 = vlaneseq
  %v4162 = vshrl.u32 %v4161, 7
  %v4163 = vsub.s32 3, %v4162
  %v4164 = vrot.slane %v62, %v4163
  %v4165 = vadd.f32 %v4145, %v4164
  %v4166 = vadd.f32 %v4146, %v4164
  %v4167 = vadd.f32 %v4147, %v4164
  %v4168 = vadd.f32 %v4148, %v4164
  %v4169 = vadd.f32 %v4149, %v4164
  %v4170 = vadd.f32 %v4150, %v4164
  %v4171 = vadd.f32 %v4151, %v4164
  %v4172 = vadd.f32 %v4152, %v4164
  %v4173 = vadd.f32 %v4153, %v4164
  %v4174 = vadd.f32 %v4154, %v4164
  %v4175 = vadd.f32 %v4155, %v4164
  %v4176 = vadd.f32 %v4156, %v4164
  %v4177 = vadd.f32 %v4157, %v4164
  %v4178 = vadd.f32 %v4158, %v4164
  %v4179 = vadd.f32 %v4159, %v4164
  %v4180 = vadd.f32 %v4160, %v4164
  %v4181 = vsel %vm68, %v4165, 0.0
  %4182 = vadd.xlane.f32.xlu0 %v4181
  %v4183 = vpop.xlane.xlu0 %4182
  %v4184 = vsel %vm68, %v4166, 0.0
  %4185 = vadd.xlane.f32.xlu0 %v4184
  %v4186 = vpop.xlane.xlu0 %4185
  %v4187 = vsel %vm68, %v4167, 0.0
  %4188 = vadd.xlane.f32.xlu0 %v4187
  %v4189 = vpop.xlane.xlu0 %4188
  %v4190 = vsel %vm68, %v4168, 0.0
  %4191 = vadd.xlane.f32.xlu0 %v4190
  %v4192 = vpop.xlane.xlu0 %4191
  %v4193 = vsel %vm68, %v4169, 0.0
  %4194 = vadd.xlane.f32.xlu0 %v4193
  %v4195 = vpop.xlane.xlu0 %4194
  %v4196 = vsel %vm68, %v4170, 0.0
  %4197 = vadd.xlane.f32.xlu0 %v4196
  %v4198 = vpop.xlane.xlu0 %4197
  %v4199 = vsel %vm68, %v4171, 0.0
  %4200 = vadd.xlane.f32.xlu0 %v4199
  %v4201 = vpop.xlane.xlu0 %4200
  %v4202 = vsel %vm68, %v4172, 0.0
  %4203 = vadd.xlane.f32.xlu0 %v4202
  %v4204 = vpop.xlane.xlu0 %4203
  %v4205 = vsel %vm68, %v4173, 0.0
  %4206 = vadd.xlane.f32.xlu0 %v4205
  %v4207 = vpop.xlane.xlu0 %4206
  %v4208 = vsel %vm68, %v4174, 0.0
  %4209 = vadd.xlane.f32.xlu0 %v4208
  %v4210 = vpop.xlane.xlu0 %4209
  %v4211 = vsel %vm68, %v4175, 0.0
  %4212 = vadd.xlane.f32.xlu0 %v4211
  %v4213 = vpop.xlane.xlu0 %4212
  %v4214 = vsel %vm68, %v4176, 0.0
  %4215 = vadd.xlane.f32.xlu0 %v4214
  %v4216 = vpop.xlane.xlu0 %4215
  %v4217 = vsel %vm68, %v4177, 0.0
  %4218 = vadd.xlane.f32.xlu0 %v4217
  %v4219 = vpop.xlane.xlu0 %4218
  %v4220 = vsel %vm68, %v4178, 0.0
  %4221 = vadd.xlane.f32.xlu0 %v4220
  %v4222 = vpop.xlane.xlu0 %4221
  %v4223 = vsel %vm68, %v4179, 0.0
  %4224 = vadd.xlane.f32.xlu0 %v4223
  %v4225 = vpop.xlane.xlu0 %4224
  %v4226 = vsel %vm68, %v4180, 0.0
  %4227 = vadd.xlane.f32.xlu0 %v4226
  %v4228 = vpop.xlane.xlu0 %4227
  %v4229 = vmul.f32 %v4183, %v117
  %v4230 = vmul.f32 %v4186, %v117
  %v4231 = vmul.f32 %v4189, %v117
  %v4232 = vmul.f32 %v4192, %v117
  %v4233 = vmul.f32 %v4195, %v117
  %v4234 = vmul.f32 %v4198, %v117
  %v4235 = vmul.f32 %v4201, %v117
  %v4236 = vmul.f32 %v4204, %v117
  %v4237 = vmul.f32 %v4207, %v117
  %v4238 = vmul.f32 %v4210, %v117
  %v4239 = vmul.f32 %v4213, %v117
  %v4240 = vmul.f32 %v4216, %v117
  %v4241 = vmul.f32 %v4219, %v117
  %v4242 = vmul.f32 %v4222, %v117
  %v4243 = vmul.f32 %v4225, %v117
  %v4244 = vmul.f32 %v4228, %v117
  %v4245 = vsub.f32 %v4165, %v4229
  %v4246 = vsub.f32 %v4166, %v4230
  %v4247 = vsub.f32 %v4167, %v4231
  %v4248 = vsub.f32 %v4168, %v4232
  %v4249 = vsub.f32 %v4169, %v4233
  %v4250 = vsub.f32 %v4170, %v4234
  %v4251 = vsub.f32 %v4171, %v4235
  %v4252 = vsub.f32 %v4172, %v4236
  %v4253 = vsub.f32 %v4173, %v4237
  %v4254 = vsub.f32 %v4174, %v4238
  %v4255 = vsub.f32 %v4175, %v4239
  %v4256 = vsub.f32 %v4176, %v4240
  %v4257 = vsub.f32 %v4177, %v4241
  %v4258 = vsub.f32 %v4178, %v4242
  %v4259 = vsub.f32 %v4179, %v4243
  %v4260 = vsub.f32 %v4180, %v4244
  %v4261 = vmul.f32 %v4245, %v4245
  %v4262 = vmul.f32 %v4246, %v4246
  %v4263 = vmul.f32 %v4247, %v4247
  %v4264 = vmul.f32 %v4248, %v4248
  %v4265 = vmul.f32 %v4249, %v4249
  %v4266 = vmul.f32 %v4250, %v4250
  %v4267 = vmul.f32 %v4251, %v4251
  %v4268 = vmul.f32 %v4252, %v4252
  %v4269 = vmul.f32 %v4253, %v4253
  %v4270 = vmul.f32 %v4254, %v4254
  %v4271 = vmul.f32 %v4255, %v4255
  %v4272 = vmul.f32 %v4256, %v4256
  %v4273 = vmul.f32 %v4257, %v4257
  %v4274 = vmul.f32 %v4258, %v4258
  %v4275 = vmul.f32 %v4259, %v4259
  %v4276 = vmul.f32 %v4260, %v4260
  %v4277 = vsel %vm68, %v4261, 0.0
  %4278 = vadd.xlane.f32.xlu0 %v4277
  %v4279 = vpop.xlane.xlu0 %4278
  %v4280 = vsel %vm68, %v4262, 0.0
  %4281 = vadd.xlane.f32.xlu0 %v4280
  %v4282 = vpop.xlane.xlu0 %4281
  %v4283 = vsel %vm68, %v4263, 0.0
  %4284 = vadd.xlane.f32.xlu0 %v4283
  %v4285 = vpop.xlane.xlu0 %4284
  %v4286 = vsel %vm68, %v4264, 0.0
  %4287 = vadd.xlane.f32.xlu0 %v4286
  %v4288 = vpop.xlane.xlu0 %4287
  %v4289 = vsel %vm68, %v4265, 0.0
  %4290 = vadd.xlane.f32.xlu0 %v4289
  %v4291 = vpop.xlane.xlu0 %4290
  %v4292 = vsel %vm68, %v4266, 0.0
  %4293 = vadd.xlane.f32.xlu0 %v4292
  %v4294 = vpop.xlane.xlu0 %4293
  %v4295 = vsel %vm68, %v4267, 0.0
  %4296 = vadd.xlane.f32.xlu0 %v4295
  %v4297 = vpop.xlane.xlu0 %4296
  %v4298 = vsel %vm68, %v4268, 0.0
  %4299 = vadd.xlane.f32.xlu0 %v4298
  %v4300 = vpop.xlane.xlu0 %4299
  %v4301 = vsel %vm68, %v4269, 0.0
  %4302 = vadd.xlane.f32.xlu0 %v4301
  %v4303 = vpop.xlane.xlu0 %4302
  %v4304 = vsel %vm68, %v4270, 0.0
  %4305 = vadd.xlane.f32.xlu0 %v4304
  %v4306 = vpop.xlane.xlu0 %4305
  %v4307 = vsel %vm68, %v4271, 0.0
  %4308 = vadd.xlane.f32.xlu0 %v4307
  %v4309 = vpop.xlane.xlu0 %4308
  %v4310 = vsel %vm68, %v4272, 0.0
  %4311 = vadd.xlane.f32.xlu0 %v4310
  %v4312 = vpop.xlane.xlu0 %4311
  %v4313 = vsel %vm68, %v4273, 0.0
  %4314 = vadd.xlane.f32.xlu0 %v4313
  %v4315 = vpop.xlane.xlu0 %4314
  %v4316 = vsel %vm68, %v4274, 0.0
  %4317 = vadd.xlane.f32.xlu0 %v4316
  %v4318 = vpop.xlane.xlu0 %4317
  %v4319 = vsel %vm68, %v4275, 0.0
  %4320 = vadd.xlane.f32.xlu0 %v4319
  %v4321 = vpop.xlane.xlu0 %4320
  %v4322 = vsel %vm68, %v4276, 0.0
  %4323 = vadd.xlane.f32.xlu0 %v4322
  %v4324 = vpop.xlane.xlu0 %4323
  %v4325 = vmul.f32 %v4279, %v117
  %v4326 = vmul.f32 %v4282, %v117
  %v4327 = vmul.f32 %v4285, %v117
  %v4328 = vmul.f32 %v4288, %v117
  %v4329 = vmul.f32 %v4291, %v117
  %v4330 = vmul.f32 %v4294, %v117
  %v4331 = vmul.f32 %v4297, %v117
  %v4332 = vmul.f32 %v4300, %v117
  %v4333 = vmul.f32 %v4303, %v117
  %v4334 = vmul.f32 %v4306, %v117
  %v4335 = vmul.f32 %v4309, %v117
  %v4336 = vmul.f32 %v4312, %v117
  %v4337 = vmul.f32 %v4315, %v117
  %v4338 = vmul.f32 %v4318, %v117
  %v4339 = vmul.f32 %v4321, %v117
  %v4340 = vmul.f32 %v4324, %v117
  %v4341 = vadd.f32 %v4325, 1e-05
  %v4342 = vadd.f32 %v4326, 1e-05
  %v4343 = vadd.f32 %v4327, 1e-05
  %v4344 = vadd.f32 %v4328, 1e-05
  %v4345 = vadd.f32 %v4329, 1e-05
  %v4346 = vadd.f32 %v4330, 1e-05
  %v4347 = vadd.f32 %v4331, 1e-05
  %v4348 = vadd.f32 %v4332, 1e-05
  %v4349 = vadd.f32 %v4333, 1e-05
  %v4350 = vadd.f32 %v4334, 1e-05
  %v4351 = vadd.f32 %v4335, 1e-05
  %v4352 = vadd.f32 %v4336, 1e-05
  %v4353 = vadd.f32 %v4337, 1e-05
  %v4354 = vadd.f32 %v4338, 1e-05
  %v4355 = vadd.f32 %v4339, 1e-05
  %v4356 = vadd.f32 %v4340, 1e-05
  %v4357 = vrsqrt.pop %v4341
  %v4358 = vrsqrt.pop %v4342
  %v4359 = vrsqrt.pop %v4343
  %v4360 = vrsqrt.pop %v4344
  %v4361 = vrsqrt.pop %v4345
  %v4362 = vrsqrt.pop %v4346
  %v4363 = vrsqrt.pop %v4347
  %v4364 = vrsqrt.pop %v4348
  %v4365 = vrsqrt.pop %v4349
  %v4366 = vrsqrt.pop %v4350
  %v4367 = vrsqrt.pop %v4351
  %v4368 = vrsqrt.pop %v4352
  %v4369 = vrsqrt.pop %v4353
  %v4370 = vrsqrt.pop %v4354
  %v4371 = vrsqrt.pop %v4355
  %v4372 = vrsqrt.pop %v4356
  %v4373 = vmul.f32 %v4245, %v4357
  %v4374 = vmul.f32 %v4246, %v4358
  %v4375 = vmul.f32 %v4247, %v4359
  %v4376 = vmul.f32 %v4248, %v4360
  %v4377 = vmul.f32 %v4249, %v4361
  %v4378 = vmul.f32 %v4250, %v4362
  %v4379 = vmul.f32 %v4251, %v4363
  %v4380 = vmul.f32 %v4252, %v4364
  %v4381 = vmul.f32 %v4253, %v4365
  %v4382 = vmul.f32 %v4254, %v4366
  %v4383 = vmul.f32 %v4255, %v4367
  %v4384 = vmul.f32 %v4256, %v4368
  %v4385 = vmul.f32 %v4257, %v4369
  %v4386 = vmul.f32 %v4258, %v4370
  %v4387 = vmul.f32 %v4259, %v4371
  %v4388 = vmul.f32 %v4260, %v4372
  %v4389 = vlaneseq
  %v4390 = vshrl.u32 %v4389, 7
  %v4391 = vsub.s32 4, %v4390
  %v4392 = vrot.slane %v62, %v4391
  %v4393 = vmul.f32 %v4373, %v4392
  %v4394 = vmul.f32 %v4374, %v4392
  %v4395 = vmul.f32 %v4375, %v4392
  %v4396 = vmul.f32 %v4376, %v4392
  %v4397 = vmul.f32 %v4377, %v4392
  %v4398 = vmul.f32 %v4378, %v4392
  %v4399 = vmul.f32 %v4379, %v4392
  %v4400 = vmul.f32 %v4380, %v4392
  %v4401 = vmul.f32 %v4381, %v4392
  %v4402 = vmul.f32 %v4382, %v4392
  %v4403 = vmul.f32 %v4383, %v4392
  %v4404 = vmul.f32 %v4384, %v4392
  %v4405 = vmul.f32 %v4385, %v4392
  %v4406 = vmul.f32 %v4386, %v4392
  %v4407 = vmul.f32 %v4387, %v4392
  %v4408 = vmul.f32 %v4388, %v4392
  %v4409 = vlaneseq
  %v4410 = vshrl.u32 %v4409, 7
  %v4411 = vsub.s32 5, %v4410
  %v4412 = vrot.slane %v62, %v4411
  %v4413 = vadd.f32 %v4393, %v4412
  %v4414 = vadd.f32 %v4394, %v4412
  %v4415 = vadd.f32 %v4395, %v4412
  %v4416 = vadd.f32 %v4396, %v4412
  %v4417 = vadd.f32 %v4397, %v4412
  %v4418 = vadd.f32 %v4398, %v4412
  %v4419 = vadd.f32 %v4399, %v4412
  %v4420 = vadd.f32 %v4400, %v4412
  %v4421 = vadd.f32 %v4401, %v4412
  %v4422 = vadd.f32 %v4402, %v4412
  %v4423 = vadd.f32 %v4403, %v4412
  %v4424 = vadd.f32 %v4404, %v4412
  %v4425 = vadd.f32 %v4405, %v4412
  %v4426 = vadd.f32 %v4406, %v4412
  %v4427 = vadd.f32 %v4407, %v4412
  %v4428 = vadd.f32 %v4408, %v4412
  %v4429 = vlaneseq
  %v4430 = vshrl.u32 %v4429, 7
  %v4431 = vsub.s32 0, %v4430
  %v4432 = vrot.slane %v67, %v4431
  %v4434 = vsel %vm68, %v4413, 0
  %v4437 = vsel %vm68, %v4414, 0
  %v4440 = vsel %vm68, %v4415, 0
  %v4443 = vsel %vm68, %v4416, 0
  %v4446 = vsel %vm68, %v4417, 0
  %v4449 = vsel %vm68, %v4418, 0
  %v4452 = vsel %vm68, %v4419, 0
  %v4455 = vsel %vm68, %v4420, 0
  %v4458 = vsel %vm68, %v4421, 0
  %v4461 = vsel %vm68, %v4422, 0
  %v4464 = vsel %vm68, %v4423, 0
  %v4467 = vsel %vm68, %v4424, 0
  %v4470 = vsel %vm68, %v4425, 0
  %v4473 = vsel %vm68, %v4426, 0
  %v4476 = vsel %vm68, %v4427, 0
  %v4479 = vsel %vm68, %v4428, 0
  %4481 = vmatprep.subr.mxu0 0.0
  %4482 = vmatpush1.msra.mxu0 %v63
  %4483 = vmatprep.subr.mxu0 0.0
  %4484 = vmatpush1.msra.mxu0 %v64
  %4485 = vmatprep.subr.mxu0 0.0
  %4486 = vmatpush1.msra.mxu0 %v65
  %4487 = vmatprep.subr.mxu0 0.0
  %4488 = vmatpush1.msra.mxu0 %v66
  %4489 = vmatprep.subr.mxu0 0.0
  %4490 = vmatpush1.msra.mxu0 0.0
  %4491 = vmatprep.subr.mxu0 0.0
  %4492 = vmatpush1.msra.mxu0 0.0
  %4493 = vmatprep.subr.mxu0 0.0
  %4494 = vmatpush1.msra.mxu0 0.0
  %4495 = vmatprep.subr.mxu0 0.0
  %4496 = vmatpush1.msra.mxu0 0.0
  %4497 = vmatprep.subr.mxu0 0.0
  %4498 = vmatpush1.msra.mxu0 0.0
  %4499 = vmatprep.subr.mxu0 0.0
  %4500 = vmatpush1.msra.mxu0 0.0
  %4501 = vmatprep.subr.mxu0 0.0
  %4502 = vmatpush1.msra.mxu0 0.0
  %4503 = vmatprep.subr.mxu0 0.0
  %4504 = vmatpush1.msra.mxu0 0.0
  %4505 = vmatprep.subr.mxu0 0.0
  %4506 = vmatpush1.msra.mxu0 0.0
  %4507 = vmatprep.subr.mxu0 0.0
  %4508 = vmatpush1.msra.mxu0 0.0
  %4509 = vmatprep.subr.mxu0 0.0
  %4510 = vmatpush1.msra.mxu0 0.0
  %4511 = vmatprep.subr.mxu0 0.0
  %4512 = vmatpush1.msra.mxu0 0.0
  %4513 = vmatprep.subr.mxu0 0.0
  %4514 = vmatpush1.msra.mxu0 0.0
  %4515 = vmatprep.subr.mxu0 0.0
  %4516 = vmatpush1.msra.mxu0 0.0
  %4517 = vmatprep.subr.mxu0 0.0
  %4518 = vmatpush1.msra.mxu0 0.0
  %4519 = vmatprep.subr.mxu0 0.0
  %4520 = vmatpush1.msra.mxu0 0.0
  %4521 = vmatprep.subr.mxu0 0.0
  %4522 = vmatpush1.msra.mxu0 0.0
  %4523 = vmatprep.subr.mxu0 0.0
  %4524 = vmatpush1.msra.mxu0 0.0
  %4525 = vmatprep.subr.mxu0 0.0
  %4526 = vmatpush1.msra.mxu0 0.0
  %4527 = vmatprep.subr.mxu0 0.0
  %4528 = vmatpush1.msra.mxu0 0.0
  %4529 = vmatprep.subr.mxu0 0.0
  %4530 = vmatpush1.msra.mxu0 0.0
  %4531 = vmatprep.subr.mxu0 0.0
  %4532 = vmatpush1.msra.mxu0 0.0
  %4533 = vmatprep.subr.mxu0 0.0
  %4534 = vmatpush1.msra.mxu0 0.0
  %4535 = vmatprep.subr.mxu0 0.0
  %4536 = vmatpush1.msra.mxu0 0.0
  %4537 = vmatprep.subr.mxu0 0.0
  %4538 = vmatpush1.msra.mxu0 0.0
  %4539 = vmatprep.subr.mxu0 0.0
  %4540 = vmatpush1.msra.mxu0 0.0
  %4541 = vmatprep.subr.mxu0 0.0
  %4542 = vmatpush1.msra.mxu0 0.0
  %4543 = vmatprep.subr.mxu0 0.0
  %4544 = vmatpush1.msra.mxu0 0.0
  %4545 = vmatprep.mubr.f32.mxu0 0.0
  %4546 = vmatmul.mubr.f32.gmra.mrb[0].mxu0 %v4434
  %v4547 = vpop.f32.mrb[0].mxu0
  %v4548 = vadd.f32 %v4432, %v4547
  %v4549 = vpop.f32.mrb[0].mxu0
  %4550 = vmatprep.mubr.f32.mxu0 0.0
  %4551 = vmatmul.mubr.f32.gmra.mrb[0].mxu0 %v4437
  %v4552 = vpop.f32.mrb[0].mxu0
  %v4553 = vadd.f32 %v4432, %v4552
  %v4554 = vpop.f32.mrb[0].mxu0
  %4555 = vmatprep.mubr.f32.mxu0 0.0
  %4556 = vmatmul.mubr.f32.gmra.mrb[0].mxu0 %v4440
  %v4557 = vpop.f32.mrb[0].mxu0
  %v4558 = vadd.f32 %v4432, %v4557
  %v4559 = vpop.f32.mrb[0].mxu0
  %4560 = vmatprep.mubr.f32.mxu0 0.0
  %4561 = vmatmul.mubr.f32.gmra.mrb[0].mxu0 %v4443
  %v4562 = vpop.f32.mrb[0].mxu0
  %v4563 = vadd.f32 %v4432, %v4562
  %v4564 = vpop.f32.mrb[0].mxu0
  %4565 = vmatprep.mubr.f32.mxu0 0.0
  %4566 = vmatmul.mubr.f32.gmra.mrb[0].mxu0 %v4446
  %v4567 = vpop.f32.mrb[0].mxu0
  %v4568 = vadd.f32 %v4432, %v4567
  %v4569 = vpop.f32.mrb[0].mxu0
  %4570 = vmatprep.mubr.f32.mxu0 0.0
  %4571 = vmatmul.mubr.f32.gmra.mrb[0].mxu0 %v4449
  %v4572 = vpop.f32.mrb[0].mxu0
  %v4573 = vadd.f32 %v4432, %v4572
  %v4574 = vpop.f32.mrb[0].mxu0
  %4575 = vmatprep.mubr.f32.mxu0 0.0
  %4576 = vmatmul.mubr.f32.gmra.mrb[0].mxu0 %v4452
  %v4577 = vpop.f32.mrb[0].mxu0
  %v4578 = vadd.f32 %v4432, %v4577
  %v4579 = vpop.f32.mrb[0].mxu0
  %4580 = vmatprep.mubr.f32.mxu0 0.0
  %4581 = vmatmul.mubr.f32.gmra.mrb[0].mxu0 %v4455
  %v4582 = vpop.f32.mrb[0].mxu0
  %v4583 = vadd.f32 %v4432, %v4582
  %v4584 = vpop.f32.mrb[0].mxu0
  %4585 = vmatprep.mubr.f32.mxu0 0.0
  %4586 = vmatmul.mubr.f32.gmra.mrb[0].mxu0 %v4458
  %v4587 = vpop.f32.mrb[0].mxu0
  %v4588 = vadd.f32 %v4432, %v4587
  %v4589 = vpop.f32.mrb[0].mxu0
  %4590 = vmatprep.mubr.f32.mxu0 0.0
  %4591 = vmatmul.mubr.f32.gmra.mrb[0].mxu0 %v4461
  %v4592 = vpop.f32.mrb[0].mxu0
  %v4593 = vadd.f32 %v4432, %v4592
  %v4594 = vpop.f32.mrb[0].mxu0
  %4595 = vmatprep.mubr.f32.mxu0 0.0
  %4596 = vmatmul.mubr.f32.gmra.mrb[0].mxu0 %v4464
  %v4597 = vpop.f32.mrb[0].mxu0
  %v4598 = vadd.f32 %v4432, %v4597
  %v4599 = vpop.f32.mrb[0].mxu0
  %4600 = vmatprep.mubr.f32.mxu0 0.0
  %4601 = vmatmul.mubr.f32.gmra.mrb[0].mxu0 %v4467
  %v4602 = vpop.f32.mrb[0].mxu0
  %v4603 = vadd.f32 %v4432, %v4602
  %v4604 = vpop.f32.mrb[0].mxu0
  %4605 = vmatprep.mubr.f32.mxu0 0.0
  %4606 = vmatmul.mubr.f32.gmra.mrb[0].mxu0 %v4470
  %v4607 = vpop.f32.mrb[0].mxu0
  %v4608 = vadd.f32 %v4432, %v4607
  %v4609 = vpop.f32.mrb[0].mxu0
  %4610 = vmatprep.mubr.f32.mxu0 0.0
  %4611 = vmatmul.mubr.f32.gmra.mrb[0].mxu0 %v4473
  %v4612 = vpop.f32.mrb[0].mxu0
  %v4613 = vadd.f32 %v4432, %v4612
  %v4614 = vpop.f32.mrb[0].mxu0
  %4615 = vmatprep.mubr.f32.mxu0 0.0
  %4616 = vmatmul.mubr.f32.gmra.mrb[0].mxu0 %v4476
  %v4617 = vpop.f32.mrb[0].mxu0
  %v4618 = vadd.f32 %v4432, %v4617
  %v4619 = vpop.f32.mrb[0].mxu0
  %4620 = vmatprep.mubr.f32.mxu0 0.0
  %4621 = vmatmul.mubr.f32.gmra.mrb[0].mxu0 %v4479
  %v4622 = vpop.f32.mrb[0].mxu0
  %v4623 = vadd.f32 %v4432, %v4622
  %v4624 = vpop.f32.mrb[0].mxu0
  %4625 = vdwg.mxu0
  %v4626 = vmul.f32 %v4548, 0.5
  %v4627 = vmul.f32 %v4553, 0.5
  %v4628 = vmul.f32 %v4558, 0.5
  %v4629 = vmul.f32 %v4563, 0.5
  %v4630 = vmul.f32 %v4568, 0.5
  %v4631 = vmul.f32 %v4573, 0.5
  %v4632 = vmul.f32 %v4578, 0.5
  %v4633 = vmul.f32 %v4583, 0.5
  %v4634 = vmul.f32 %v4588, 0.5
  %v4635 = vmul.f32 %v4593, 0.5
  %v4636 = vmul.f32 %v4598, 0.5
  %v4637 = vmul.f32 %v4603, 0.5
  %v4638 = vmul.f32 %v4608, 0.5
  %v4639 = vmul.f32 %v4613, 0.5
  %v4640 = vmul.f32 %v4618, 0.5
  %v4641 = vmul.f32 %v4623, 0.5
  %v4642 = vmul.f32 %v4548, 0.70710677
  %v4643 = vmul.f32 %v4553, 0.70710677
  %v4644 = vmul.f32 %v4558, 0.70710677
  %v4645 = vmul.f32 %v4563, 0.70710677
  %v4646 = vmul.f32 %v4568, 0.70710677
  %v4647 = vmul.f32 %v4573, 0.70710677
  %v4648 = vmul.f32 %v4578, 0.70710677
  %v4649 = vmul.f32 %v4583, 0.70710677
  %v4650 = vmul.f32 %v4588, 0.70710677
  %v4651 = vmul.f32 %v4593, 0.70710677
  %v4652 = vmul.f32 %v4598, 0.70710677
  %v4653 = vmul.f32 %v4603, 0.70710677
  %v4654 = vmul.f32 %v4608, 0.70710677
  %v4655 = vmul.f32 %v4613, 0.70710677
  %v4656 = vmul.f32 %v4618, 0.70710677
  %v4657 = vmul.f32 %v4623, 0.70710677
  %v4658 = verf.f32.pop %v4642
  %v4659 = verf.f32.pop %v4643
  %v4660 = verf.f32.pop %v4644
  %v4661 = verf.f32.pop %v4645
  %v4662 = verf.f32.pop %v4646
  %v4663 = verf.f32.pop %v4647
  %v4664 = verf.f32.pop %v4648
  %v4665 = verf.f32.pop %v4649
  %v4666 = verf.f32.pop %v4650
  %v4667 = verf.f32.pop %v4651
  %v4668 = verf.f32.pop %v4652
  %v4669 = verf.f32.pop %v4653
  %v4670 = verf.f32.pop %v4654
  %v4671 = verf.f32.pop %v4655
  %v4672 = verf.f32.pop %v4656
  %v4673 = verf.f32.pop %v4657
  %v4674 = vadd.f32 %v4658, 1.0
  %v4675 = vadd.f32 %v4659, 1.0
  %v4676 = vadd.f32 %v4660, 1.0
  %v4677 = vadd.f32 %v4661, 1.0
  %v4678 = vadd.f32 %v4662, 1.0
  %v4679 = vadd.f32 %v4663, 1.0
  %v4680 = vadd.f32 %v4664, 1.0
  %v4681 = vadd.f32 %v4665, 1.0
  %v4682 = vadd.f32 %v4666, 1.0
  %v4683 = vadd.f32 %v4667, 1.0
  %v4684 = vadd.f32 %v4668, 1.0
  %v4685 = vadd.f32 %v4669, 1.0
  %v4686 = vadd.f32 %v4670, 1.0
  %v4687 = vadd.f32 %v4671, 1.0
  %v4688 = vadd.f32 %v4672, 1.0
  %v4689 = vadd.f32 %v4673, 1.0
  %v4690 = vmul.f32 %v4626, %v4674
  %v4691 = vmul.f32 %v4627, %v4675
  %v4692 = vmul.f32 %v4628, %v4676
  %v4693 = vmul.f32 %v4629, %v4677
  %v4694 = vmul.f32 %v4630, %v4678
  %v4695 = vmul.f32 %v4631, %v4679
  %v4696 = vmul.f32 %v4632, %v4680
  %v4697 = vmul.f32 %v4633, %v4681
  %v4698 = vmul.f32 %v4634, %v4682
  %v4699 = vmul.f32 %v4635, %v4683
  %v4700 = vmul.f32 %v4636, %v4684
  %v4701 = vmul.f32 %v4637, %v4685
  %v4702 = vmul.f32 %v4638, %v4686
  %v4703 = vmul.f32 %v4639, %v4687
  %v4704 = vmul.f32 %v4640, %v4688
  %v4705 = vmul.f32 %v4641, %v4689
  %v4706 = vlaneseq
  %v4707 = vshrl.u32 %v4706, 7
  %v4708 = vsub.s32 6, %v4707
  %v4709 = vrot.slane %v62, %v4708
  %4710 = vmatprep.subr.mxu0 0.0
  %4711 = vmatpush1.msra.mxu0 %v46
  %4712 = vmatprep.subr.mxu0 0.0
  %4713 = vmatpush1.msra.mxu0 %v47
  %4714 = vmatprep.subr.mxu0 0.0
  %4715 = vmatpush1.msra.mxu0 %v48
  %4716 = vmatprep.subr.mxu0 0.0
  %4717 = vmatpush1.msra.mxu0 %v49
  %4718 = vmatprep.subr.mxu0 0.0
  %4719 = vmatpush1.msra.mxu0 %v50
  %4720 = vmatprep.subr.mxu0 0.0
  %4721 = vmatpush1.msra.mxu0 %v51
  %4722 = vmatprep.subr.mxu0 0.0
  %4723 = vmatpush1.msra.mxu0 %v52
  %4724 = vmatprep.subr.mxu0 0.0
  %4725 = vmatpush1.msra.mxu0 %v53
  %4726 = vmatprep.subr.mxu0 0.0
  %4727 = vmatpush1.msra.mxu0 %v54
  %4728 = vmatprep.subr.mxu0 0.0
  %4729 = vmatpush1.msra.mxu0 %v55
  %4730 = vmatprep.subr.mxu0 0.0
  %4731 = vmatpush1.msra.mxu0 %v56
  %4732 = vmatprep.subr.mxu0 0.0
  %4733 = vmatpush1.msra.mxu0 %v57
  %4734 = vmatprep.subr.mxu0 0.0
  %4735 = vmatpush1.msra.mxu0 %v58
  %4736 = vmatprep.subr.mxu0 0.0
  %4737 = vmatpush1.msra.mxu0 %v59
  %4738 = vmatprep.subr.mxu0 0.0
  %4739 = vmatpush1.msra.mxu0 %v60
  %4740 = vmatprep.subr.mxu0 0.0
  %4741 = vmatpush1.msra.mxu0 %v61
  %4742 = vmatprep.subr.mxu0 0.0
  %4743 = vmatpush1.msra.mxu0 0.0
  %4744 = vmatprep.subr.mxu0 0.0
  %4745 = vmatpush1.msra.mxu0 0.0
  %4746 = vmatprep.subr.mxu0 0.0
  %4747 = vmatpush1.msra.mxu0 0.0
  %4748 = vmatprep.subr.mxu0 0.0
  %4749 = vmatpush1.msra.mxu0 0.0
  %4750 = vmatprep.subr.mxu0 0.0
  %4751 = vmatpush1.msra.mxu0 0.0
  %4752 = vmatprep.subr.mxu0 0.0
  %4753 = vmatpush1.msra.mxu0 0.0
  %4754 = vmatprep.subr.mxu0 0.0
  %4755 = vmatpush1.msra.mxu0 0.0
  %4756 = vmatprep.subr.mxu0 0.0
  %4757 = vmatpush1.msra.mxu0 0.0
  %4758 = vmatprep.subr.mxu0 0.0
  %4759 = vmatpush1.msra.mxu0 0.0
  %4760 = vmatprep.subr.mxu0 0.0
  %4761 = vmatpush1.msra.mxu0 0.0
  %4762 = vmatprep.subr.mxu0 0.0
  %4763 = vmatpush1.msra.mxu0 0.0
  %4764 = vmatprep.subr.mxu0 0.0
  %4765 = vmatpush1.msra.mxu0 0.0
  %4766 = vmatprep.subr.mxu0 0.0
  %4767 = vmatpush1.msra.mxu0 0.0
  %4768 = vmatprep.subr.mxu0 0.0
  %4769 = vmatpush1.msra.mxu0 0.0
  %4770 = vmatprep.subr.mxu0 0.0
  %4771 = vmatpush1.msra.mxu0 0.0
  %4772 = vmatprep.subr.mxu0 0.0
  %4773 = vmatpush1.msra.mxu0 0.0
  %4774 = vmatprep.mubr.f32.mxu0 0.0
  %4775 = vmatmul.mubr.f32.gmra.mrb[0].mxu0 %v4690
  %v4776 = vpop.f32.mrb[0].mxu0
  %v4777 = vadd.f32 %v4709, %v4776
  %v4778 = vpop.f32.mrb[0].mxu0
  %4779 = vmatprep.mubr.f32.mxu0 0.0
  %4780 = vmatmul.mubr.f32.gmra.mrb[0].mxu0 %v4691
  %v4781 = vpop.f32.mrb[0].mxu0
  %v4782 = vadd.f32 %v4709, %v4781
  %v4783 = vpop.f32.mrb[0].mxu0
  %4784 = vmatprep.mubr.f32.mxu0 0.0
  %4785 = vmatmul.mubr.f32.gmra.mrb[0].mxu0 %v4692
  %v4786 = vpop.f32.mrb[0].mxu0
  %v4787 = vadd.f32 %v4709, %v4786
  %v4788 = vpop.f32.mrb[0].mxu0
  %4789 = vmatprep.mubr.f32.mxu0 0.0
  %4790 = vmatmul.mubr.f32.gmra.mrb[0].mxu0 %v4693
  %v4791 = vpop.f32.mrb[0].mxu0
  %v4792 = vadd.f32 %v4709, %v4791
  %v4793 = vpop.f32.mrb[0].mxu0
  %4794 = vmatprep.mubr.f32.mxu0 0.0
  %4795 = vmatmul.mubr.f32.gmra.mrb[0].mxu0 %v4694
  %v4796 = vpop.f32.mrb[0].mxu0
  %v4797 = vadd.f32 %v4709, %v4796
  %v4798 = vpop.f32.mrb[0].mxu0
  %4799 = vmatprep.mubr.f32.mxu0 0.0
  %4800 = vmatmul.mubr.f32.gmra.mrb[0].mxu0 %v4695
  %v4801 = vpop.f32.mrb[0].mxu0
  %v4802 = vadd.f32 %v4709, %v4801
  %v4803 = vpop.f32.mrb[0].mxu0
  %4804 = vmatprep.mubr.f32.mxu0 0.0
  %4805 = vmatmul.mubr.f32.gmra.mrb[0].mxu0 %v4696
  %v4806 = vpop.f32.mrb[0].mxu0
  %v4807 = vadd.f32 %v4709, %v4806
  %v4808 = vpop.f32.mrb[0].mxu0
  %4809 = vmatprep.mubr.f32.mxu0 0.0
  %4810 = vmatmul.mubr.f32.gmra.mrb[0].mxu0 %v4697
  %v4811 = vpop.f32.mrb[0].mxu0
  %v4812 = vadd.f32 %v4709, %v4811
  %v4813 = vpop.f32.mrb[0].mxu0
  %4814 = vmatprep.mubr.f32.mxu0 0.0
  %4815 = vmatmul.mubr.f32.gmra.mrb[0].mxu0 %v4698
  %v4816 = vpop.f32.mrb[0].mxu0
  %v4817 = vadd.f32 %v4709, %v4816
  %v4818 = vpop.f32.mrb[0].mxu0
  %4819 = vmatprep.mubr.f32.mxu0 0.0
  %4820 = vmatmul.mubr.f32.gmra.mrb[0].mxu0 %v4699
  %v4821 = vpop.f32.mrb[0].mxu0
  %v4822 = vadd.f32 %v4709, %v4821
  %v4823 = vpop.f32.mrb[0].mxu0
  %4824 = vmatprep.mubr.f32.mxu0 0.0
  %4825 = vmatmul.mubr.f32.gmra.mrb[0].mxu0 %v4700
  %v4826 = vpop.f32.mrb[0].mxu0
  %v4827 = vadd.f32 %v4709, %v4826
  %v4828 = vpop.f32.mrb[0].mxu0
  %4829 = vmatprep.mubr.f32.mxu0 0.0
  %4830 = vmatmul.mubr.f32.gmra.mrb[0].mxu0 %v4701
  %v4831 = vpop.f32.mrb[0].mxu0
  %v4832 = vadd.f32 %v4709, %v4831
  %v4833 = vpop.f32.mrb[0].mxu0
  %4834 = vmatprep.mubr.f32.mxu0 0.0
  %4835 = vmatmul.mubr.f32.gmra.mrb[0].mxu0 %v4702
  %v4836 = vpop.f32.mrb[0].mxu0
  %v4837 = vadd.f32 %v4709, %v4836
  %v4838 = vpop.f32.mrb[0].mxu0
  %4839 = vmatprep.mubr.f32.mxu0 0.0
  %4840 = vmatmul.mubr.f32.gmra.mrb[0].mxu0 %v4703
  %v4841 = vpop.f32.mrb[0].mxu0
  %v4842 = vadd.f32 %v4709, %v4841
  %v4843 = vpop.f32.mrb[0].mxu0
  %4844 = vmatprep.mubr.f32.mxu0 0.0
  %4845 = vmatmul.mubr.f32.gmra.mrb[0].mxu0 %v4704
  %v4846 = vpop.f32.mrb[0].mxu0
  %v4847 = vadd.f32 %v4709, %v4846
  %v4848 = vpop.f32.mrb[0].mxu0
  %4849 = vmatprep.mubr.f32.mxu0 0.0
  %4850 = vmatmul.mubr.f32.gmra.mrb[0].mxu0 %v4705
  %v4851 = vpop.f32.mrb[0].mxu0
  %v4852 = vadd.f32 %v4709, %v4851
  %v4853 = vpop.f32.mrb[0].mxu0
  %4854 = vdwg.mxu0
  %v4855 = vadd.f32 %v4165, %v4777
  %v4856 = vadd.f32 %v4166, %v4782
  %v4857 = vadd.f32 %v4167, %v4787
  %v4858 = vadd.f32 %v4168, %v4792
  %v4859 = vadd.f32 %v4169, %v4797
  %v4860 = vadd.f32 %v4170, %v4802
  %v4861 = vadd.f32 %v4171, %v4807
  %v4862 = vadd.f32 %v4172, %v4812
  %v4863 = vadd.f32 %v4173, %v4817
  %v4864 = vadd.f32 %v4174, %v4822
  %v4865 = vadd.f32 %v4175, %v4827
  %v4866 = vadd.f32 %v4176, %v4832
  %v4867 = vadd.f32 %v4177, %v4837
  %v4868 = vadd.f32 %v4178, %v4842
  %v4869 = vadd.f32 %v4179, %v4847
  %v4870 = vadd.f32 %v4180, %v4852
  %4871 = vst.msk [vmem:[%s3] sm:$0xff] %vm68, %v4855
  %4872 = vst.msk [vmem:[%s3 + $0x8] sm:$0xff] %vm68, %v4856
  %4873 = vst.msk [vmem:[%s3 + $0x10] sm:$0xff] %vm68, %v4857
  %4874 = vst.msk [vmem:[%s3 + $0x18] sm:$0xff] %vm68, %v4858
  %4875 = vst.msk [vmem:[%s3 + $0x20] sm:$0xff] %vm68, %v4859
  %4876 = vst.msk [vmem:[%s3 + $0x28] sm:$0xff] %vm68, %v4860
  %4877 = vst.msk [vmem:[%s3 + $0x30] sm:$0xff] %vm68, %v4861
  %4878 = vst.msk [vmem:[%s3 + $0x38] sm:$0xff] %vm68, %v4862
  %4879 = vst.msk [vmem:[%s3 + $0x40] sm:$0xff] %vm68, %v4863
  %4880 = vst.msk [vmem:[%s3 + $0x48] sm:$0xff] %vm68, %v4864
  %4881 = vst.msk [vmem:[%s3 + $0x50] sm:$0xff] %vm68, %v4865
  %4882 = vst.msk [vmem:[%s3 + $0x58] sm:$0xff] %vm68, %v4866
  %4883 = vst.msk [vmem:[%s3 + $0x60] sm:$0xff] %vm68, %v4867
  %4884 = vst.msk [vmem:[%s3 + $0x68] sm:$0xff] %vm68, %v4868
  %4885 = vst.msk [vmem:[%s3 + $0x70] sm:$0xff] %vm68, %v4869
  %4886 = vst.msk [vmem:[%s3 + $0x78] sm:$0xff] %vm68, %v4870
  // Predicated region
  $region14: #{wsam_forward.1} parent=0 // pred_check
    _
  $region15: #{wsam_forward.1} parent=0 // pred_check_branch
    %4888 = sbr.rel (0) target = $region17
  $region16: #{wsam_forward.1} parent=0 // pred_region
    _
  $region17: #{wsam_forward.1} parent=0 // pred_fallthru
    _
  // Predicated region
  $region18: #{wsam_forward.1} parent=0 // pred_check
    _
  $region19: #{wsam_forward.1} parent=0 // pred_check_branch
    %4890 = sbr.rel (0) target = $region21
  $region20: #{wsam_forward.1} parent=0 // pred_region
    _
  $region21: #{wsam_forward.1} parent=0 // pred_fallthru
    _

</llo_original>
